<compile_context>
chip_gen: v7x
topology: tpu7x:2x2x1
jax: 0.10.0
libtpu: 0.0.40
codegen_flags: <defaults>
</compile_context>

<pallas_src>
import functools

import jax
import jax.numpy as jnp
import numpy as np
from jax import lax
from jax.experimental import pallas as pl
from jax.experimental.pallas import tpu as pltpu


def _round_up(x, m):
    return (x + m - 1) // m * m


# ----------------------------------------------------------------------------
# Pallas kernel 1: fused  out = act(A @ W + b)   (conv1 / conv2 GEMMs)
# ----------------------------------------------------------------------------
def _gemm_bias_act_kernel(a_ref, w_ref, b_ref, o_ref, *, relu):
    acc = jnp.dot(a_ref[...], w_ref[...], preferred_element_type=jnp.float32)
    acc = acc + b_ref[...]          # (1, N) f32 bias broadcast over rows
    if relu:
        acc = jnp.maximum(acc, 0.0)
    o_ref[...] = acc.astype(o_ref.dtype)


def gemm_bias_act(a, w, b, *, relu, out_dtype, tm_max=256):
    """a: (M, K) bf16, w: (K, N) bf16, b: (1, N) f32 -> (M, N) out_dtype.

    M is tiled (<= tm_max rows per block, weight block stays resident) and the
    tile is chosen so the grid always has >= 2 steps (lets v7x split rows over
    both TensorCores; harmless on single-TC v5e/v6e).  Ragged final M blocks
    are handled by Pallas output clipping (rows are independent in a GEMM).
    Per-step VMEM: <= 2*(256*K)*2B + weights, far below every generation's
    scoped-VMEM default.
    """
    M, K = a.shape
    K2, N = w.shape
    assert K == K2 and b.shape == (1, N)
    if M <= 16:
        tm = M                                   # full dim (always legal)
    else:
        tm = min(tm_max, _round_up((M + 1) // 2, 8))   # multiple of 8, >=2 steps
    grid = (pl.cdiv(M, tm),)
    return pl.pallas_call(
        functools.partial(_gemm_bias_act_kernel, relu=relu),
        out_shape=jax.ShapeDtypeStruct((M, N), out_dtype),
        grid_spec=pltpu.PrefetchScalarGridSpec(
            num_scalar_prefetch=0,
            grid=grid,
            in_specs=[
                pl.BlockSpec((tm, K), lambda i: (i, 0)),
                pl.BlockSpec((K, N), lambda i: (0, 0)),
                pl.BlockSpec((1, N), lambda i: (0, 0)),
            ],
            out_specs=pl.BlockSpec((tm, N), lambda i: (i, 0)),
        ),
        compiler_params=pltpu.CompilerParams(
            dimension_semantics=("parallel",)),
    )(a, w, b)


# ----------------------------------------------------------------------------
# Pallas kernel 2: fused conv3 + twin heads
#   For each conv3 output position p:
#       y_p = relu(cols3[p] @ W3 + b3)            (bt, 64)
#       h  += y_p @ W1[p]                         (bt, 128) f32 VMEM scratch
#   On the last position group:
#       q   = relu(h + b1) @ W2 + b2              lane-dense (bt, 128) output
#   Grid: (batch tiles ["parallel"], position groups ["arbitrary"]).
# ----------------------------------------------------------------------------
_POS = 121   # 11*11 conv3 output positions
_PG = 11     # positions processed per grid step (121 / 11 = 11 reduction steps)


def _conv3_head_kernel(cols_ref, w3_ref, b3_ref, w1_ref, b1_ref,
                       w2_ref, b2_ref, o_ref, h_ref):
    p = pl.program_id(1)

    @pl.when(p == 0)
    def _():
        h_ref[...] = jnp.zeros_like(h_ref)

    acc = h_ref[...]                                    # (bt, N1) f32
    for j in range(_PG):
        # conv3 at one output position: (bt, 576) @ (576, 64)
        y = jnp.dot(cols_ref[j], w3_ref[...],
                    preferred_element_type=jnp.float32)
        y = jnp.maximum(y + b3_ref[...], 0.0).astype(jnp.bfloat16)
        # partial head-layer-1 contraction for this position
        acc = acc + jnp.dot(y, w1_ref[j],
                            preferred_element_type=jnp.float32)
    h_ref[...] = acc

    @pl.when(p == pl.num_programs(1) - 1)
    def _():
        h = jnp.maximum(acc + b1_ref[...], 0.0).astype(jnp.bfloat16)
        q = jnp.dot(h, w2_ref[...], preferred_element_type=jnp.float32)
        o_ref[...] = q + b2_ref[...]


def conv3_twin_head(cols3, w3, b3, w1, b1, w2, b2, *, bt_max=256):
    """cols3: (121, B, 576) bf16 (conv3 im2col, position-major)
    w3: (576, 64) bf16, b3: (1, 64) f32
    w1: (121, 64, N1) bf16 (head layer-1 weights, NCHW permutation baked in)
    b1: (1, N1) f32, w2: (N1, N2) bf16, b2: (1, N2) f32
    -> (B, N2) f32 lane-dense slab holding [q1 | q2 | zero padding].
    """
    npos, B, k3 = cols3.shape
    assert npos == _POS
    co3 = w3.shape[1]
    n1 = w1.shape[2]
    n2 = w2.shape[1]
    # Batch tile: multiple of 8 (or full B), capped at 256 so the per-step
    # working set stays ~1-2 MB (fits v5e's 16 MiB scoped default with room
    # to spare), with >= 2 "parallel" steps whenever B is large enough.
    if B <= 16:
        bt = B
    else:
        bt = min(bt_max, _round_up((B + 1) // 2, 8))
    grid = (pl.cdiv(B, bt), _POS // _PG)
    return pl.pallas_call(
        _conv3_head_kernel,
        out_shape=jax.ShapeDtypeStruct((B, n2), jnp.float32),
        grid_spec=pltpu.PrefetchScalarGridSpec(
            num_scalar_prefetch=0,
            grid=grid,
            in_specs=[
                pl.BlockSpec((_PG, bt, k3), lambda i, p: (p, i, 0)),
                pl.BlockSpec((k3, co3), lambda i, p: (0, 0)),
                pl.BlockSpec((1, co3), lambda i, p: (0, 0)),
                pl.BlockSpec((_PG, co3, n1), lambda i, p: (p, 0, 0)),
                pl.BlockSpec((1, n1), lambda i, p: (0, 0)),
                pl.BlockSpec((n1, n2), lambda i, p: (0, 0)),
                pl.BlockSpec((1, n2), lambda i, p: (0, 0)),
            ],
            out_specs=pl.BlockSpec((bt, n2), lambda i, p: (i, 0)),
            scratch_shapes=[pltpu.VMEM((bt, n1), jnp.float32)],
        ),
        compiler_params=pltpu.CompilerParams(
            dimension_semantics=("parallel", "arbitrary")),
    )(cols3, w3, b3, w1, b1, w2, b2)


# ----------------------------------------------------------------------------
# conv1/conv2 (VALID, square kernel) via space-to-depth + contiguous taps + GEMM
# ----------------------------------------------------------------------------
def _space_to_depth(x, r):
    B, H, W, C = x.shape
    x = x.reshape(B, H // r, r, W // r, r, C)
    x = jnp.transpose(x, (0, 1, 3, 2, 4, 5))
    return x.reshape(B, H // r, W // r, r * r * C)


def _im2col_taps(x, kb, oh, ow):
    """kb x kb UNSTRIDED taps; returns (B*oh*ow, kb*kb*C), cols = (tap, c)."""
    B, _, _, C = x.shape
    taps = []
    for dh in range(kb):
        for dw in range(kb):
            taps.append(x[:, dh:dh + oh, dw:dw + ow, :])
    cols = jnp.stack(taps, axis=-2)              # (B, oh, ow, kb*kb, C)
    return cols.reshape(B * oh * ow, kb * kb * C)


def conv_relu_s2d(x, wmat, b, *, stride, ksize, out_dtype=jnp.bfloat16):
    """VALID conv + bias + ReLU.  Requires ksize % stride == 0 (true here).
    x: (B,H,W,C);  wmat: (ksize*ksize*C, CO) pre-permuted to tap-major order."""
    B, H, W, C = x.shape
    oh = (H - ksize) // stride + 1
    ow = (W - ksize) // stride + 1
    if stride > 1:
        x = _space_to_depth(x, stride)           # channels absorb the stride
    kb = ksize // stride
    cols = _im2col_taps(x, kb, oh, ow)
    co = wmat.shape[1]
    y = gemm_bias_act(cols, wmat, b, relu=True, out_dtype=out_dtype)
    return y.reshape(B, oh, ow, co)


# ----------------------------------------------------------------------------
# Parameter init (PyTorch default: U(-1/sqrt(fan_in), 1/sqrt(fan_in)))
# ----------------------------------------------------------------------------
def init_params(key, n_actions, h_dim):
    d_out = 11
    conv_output_dim = d_out * d_out * 64  # 7744

    def uni(k, shape, fan_in):
        bound = 1.0 / np.sqrt(fan_in)
        return jax.random.uniform(k, shape, jnp.float32, -bound, bound)

    ks = jax.random.split(key, 14)
    p = {}
    # conv weights stored HWIO
    p["c1_w"] = uni(ks[0], (8, 8, 1, 32), 1 * 8 * 8)
    p["c1_b"] = uni(ks[1], (32,), 1 * 8 * 8)
    p["c2_w"] = uni(ks[2], (4, 4, 32, 64), 32 * 4 * 4)
    p["c2_b"] = uni(ks[3], (64,), 32 * 4 * 4)
    p["c3_w"] = uni(ks[4], (3, 3, 64, 64), 64 * 3 * 3)
    p["c3_b"] = uni(ks[5], (64,), 64 * 3 * 3)
    # linear weights stored (in, out)
    p["l11_w"] = uni(ks[6], (conv_output_dim, h_dim), conv_output_dim)
    p["l11_b"] = uni(ks[7], (h_dim,), conv_output_dim)
    p["l12_w"] = uni(ks[8], (h_dim, n_actions), h_dim)
    p["l12_b"] = uni(ks[9], (n_actions,), h_dim)
    p["l21_w"] = uni(ks[10], (conv_output_dim, h_dim), conv_output_dim)
    p["l21_b"] = uni(ks[11], (h_dim,), conv_output_dim)
    p["l22_w"] = uni(ks[12], (h_dim, n_actions), h_dim)
    p["l22_b"] = uni(ks[13], (n_actions,), h_dim)
    return p


# ----------------------------------------------------------------------------
# One-time weight preparation: bake layout permutations / fusion / bf16 cast
# ----------------------------------------------------------------------------
def _conv_w_to_tap_gemm(w_hwio, stride):
    """Reorder HWIO conv weight rows to match the space-to-depth im2col."""
    K, K2, CI, CO = w_hwio.shape
    if stride == 1:
        return w_hwio.reshape(K * K * CI, CO)          # (kh, kw, ci) order
    kb = K // stride
    w = w_hwio.reshape(kb, stride, kb, stride, CI, CO)  # (kbh, rs, kbw, cs, ci, co)
    w = jnp.transpose(w, (0, 2, 1, 3, 4, 5))            # (kbh, kbw, rs, cs, ci, co)
    return w.reshape(K * K * CI, CO)


def prepare_params(p, n_actions, h_dim, dtype=jnp.bfloat16):
    d_out, co3 = 11, 64
    npos = d_out * d_out                                 # 121

    def head_w_3d(w):
        # PyTorch NCHW flat rows (c*121 + p)  ->  (position p, channel c, out)
        w = w.reshape(co3, npos, -1)                     # (c, p, out)
        return jnp.transpose(w, (1, 0, 2))               # (p, c, out)

    n1, n2 = 2 * h_dim, 2 * n_actions
    n1p, n2p = _round_up(n1, 128), _round_up(n2, 128)    # lane-dense widths

    w1 = jnp.concatenate([head_w_3d(p["l11_w"]), head_w_3d(p["l21_w"])],
                         axis=2)                         # (121, 64, 2*h_dim)
    w1 = jnp.pad(w1, ((0, 0), (0, 0), (0, n1p - n1)))
    b1 = jnp.pad(jnp.concatenate([p["l11_b"], p["l21_b"]]), (0, n1p - n1))

    w2 = jnp.zeros((n1p, n2p), jnp.float32)
    w2 = w2.at[0:h_dim, 0:n_actions].set(p["l12_w"])
    w2 = w2.at[h_dim:2 * h_dim, n_actions:2 * n_actions].set(p["l22_w"])
    b2 = jnp.zeros((n2p,), jnp.float32)
    b2 = b2.at[0:n_actions].set(p["l12_b"])
    b2 = b2.at[n_actions:2 * n_actions].set(p["l22_b"])

    return {
        "c1_w": _conv_w_to_tap_gemm(p["c1_w"], 4).astype(dtype),
        "c1_b": p["c1_b"].reshape(1, -1),
        "c2_w": _conv_w_to_tap_gemm(p["c2_w"], 2).astype(dtype),
        "c2_b": p["c2_b"].reshape(1, -1),
        "c3_w": _conv_w_to_tap_gemm(p["c3_w"], 1).astype(dtype),   # (576, 64)
        "c3_b": p["c3_b"].reshape(1, -1),
        "head_w1": w1.astype(dtype),          # (121, 64, n1p) bf16
        "head_b1": b1.reshape(1, n1p),
        "head_w2": w2.astype(dtype),          # bf16 operands, f32 accumulation
        "head_b2": b2.reshape(1, n2p),
    }


# ----------------------------------------------------------------------------
# Forward pass (mirrors SoftQNeuralNetworkTwin.forward)
# ----------------------------------------------------------------------------
@functools.partial(jax.jit, static_argnames=("n_actions",))
def soft_q_twin_forward(prep, state_nchw, *, n_actions):
    B, C, H, W = state_nchw.shape
    assert C == 1
    # NCHW (B,1,H,W) and NHWC (B,H,W,1) share memory layout when C == 1.
    x = state_nchw.reshape(B, H, W, 1).astype(jnp.bfloat16)

    x = conv_relu_s2d(x, prep["c1_w"], prep["c1_b"], stride=4, ksize=8)  # (B,28,28,32)
    x = conv_relu_s2d(x, prep["c2_w"], prep["c2_b"], stride=2, ksize=4)  # (B,13,13,64)

    # conv3 im2col (stride 1, 3x3 -> 9 contiguous taps), position-major layout
    oh = ow = 11
    taps = [x[:, dh:dh + oh, dw:dw + ow, :] for dh in range(3) for dw in range(3)]
    cols3 = jnp.stack(taps, axis=-2).reshape(B, oh * ow, 9 * x.shape[-1])  # (B,121,576)
    cols3 = jnp.transpose(cols3, (1, 0, 2))                                # (121,B,576)

    # Fused conv3 + twin heads: lane-dense (B, 128) f32 slab.
    q_all = conv3_twin_head(cols3, prep["c3_w"], prep["c3_b"],
                            prep["head_w1"], prep["head_b1"],
                            prep["head_w2"], prep["head_b2"])
    q1 = q_all[:, :n_actions]
    q2 = q_all[:, n_actions:2 * n_actions]
    return q1, q2


# ----------------------------------------------------------------------------
# Pure-JAX f32 reference (PyTorch semantics, original parameter layout)
# ----------------------------------------------------------------------------
def reference_forward(params, state_nchw):
    p = params
    x = jnp.transpose(state_nchw, (0, 2, 3, 1))

    def conv(x, w, b, s):
        y = lax.conv_general_dilated(
            x, w, window_strides=(s, s), padding="VALID",
            dimension_numbers=("NHWC", "HWIO", "NHWC"))
        return jax.nn.relu(y + b)

    x = conv(x, p["c1_w"], p["c1_b"], 4)
    x = conv(x, p["c2_w"], p["c2_b"], 2)
    x = conv(x, p["c3_w"], p["c3_b"], 1)
    flat = jnp.transpose(x, (0, 3, 1, 2)).reshape(x.shape[0], -1)  # NCHW flatten
    h1 = jax.nn.relu(flat @ p["l11_w"] + p["l11_b"])
    q1 = h1 @ p["l12_w"] + p["l12_b"]
    h2 = jax.nn.relu(flat @ p["l21_w"] + p["l21_b"])
    q2 = h2 @ p["l22_w"] + p["l22_b"]
    return q1, q2


if __name__ == "__main__":
    key = jax.random.PRNGKey(0)
    k_param, k_x = jax.random.split(key)

    n_actions = 4
    h_dim = 32
    batch = 2

    params = init_params(k_param, n_actions, h_dim)
    prep = prepare_params(params, n_actions, h_dim)

    # The module hard-codes d_out=11, which implies a (B, 1, 116, 116) input.
    state = jax.random.normal(k_x, (batch, 1, 116, 116), jnp.float32)

    q1, q2 = soft_q_twin_forward(prep, state, n_actions=n_actions)
    jax.block_until_ready((q1, q2))

    r1, r2 = reference_forward(params, state)
    # bf16 matmul operands (f32 accumulation) -> loosened tolerance vs f32 ref.
    np.testing.assert_allclose(np.asarray(q1), np.asarray(r1), rtol=2e-2, atol=2e-2)
    np.testing.assert_allclose(np.asarray(q2), np.asarray(r2), rtol=2e-2, atol=2e-2)
    assert q1.shape == (batch, n_actions) and q2.shape == (batch, n_actions)

    print("KERNEL_OK")
</pallas_src>

<mosaic_0001>
module attributes {stable_mosaic.version = 11 : i64} {
  func.func @_gemm_bias_act_kernel(%arg0: i32, %arg1: memref<256x64xbf16, #tpu.memory_space<vmem>>, %arg2: memref<64x32xbf16, #tpu.memory_space<vmem>>, %arg3: memref<1x32xf32, #tpu.memory_space<vmem>>, %arg4: memref<256x32xbf16, #tpu.memory_space<vmem>>) attributes {dimension_semantics = [#tpu.dimension_semantics<parallel>], iteration_bounds = array<i64: 7>, scalar_prefetch = 0 : i64, scratch_operands = 0 : i64, tpu.core_type = #tpu.core_type<tc>, window_params = [{transform_indices = @transform_0, window_bounds = array<i64: 256, 64>}, {pipeline_mode = #tpu.pipeline_mode<synchronous>, transform_indices = @transform_1, window_bounds = array<i64: 64, 32>}, {pipeline_mode = #tpu.pipeline_mode<synchronous>, transform_indices = @transform_2, window_bounds = array<i64: 1, 32>}, {transform_indices = @transform_3, window_bounds = array<i64: 256, 32>}]} {
    %c0 = arith.constant 0 : index
    %c0_0 = arith.constant 0 : index
    %0 = vector.load %arg1[%c0, %c0_0] : memref<256x64xbf16, #tpu.memory_space<vmem>>, vector<256x64xbf16>
    %c0_1 = arith.constant 0 : index
    %c0_2 = arith.constant 0 : index
    %1 = vector.load %arg2[%c0_1, %c0_2] : memref<64x32xbf16, #tpu.memory_space<vmem>>, vector<64x32xbf16>
    %cst = arith.constant dense<0.000000e+00> : vector<256x32xf32>
    %2 = tpu.matmul %0, %1, %cst {dimension_numbers = #tpu.dot_dimension_numbers<[1], [0], [0], [1], [0, 0, 1, 1], [], []>} : vector<256x64xbf16>, vector<64x32xbf16>, vector<256x32xf32> -> vector<256x32xf32>
    %c0_3 = arith.constant 0 : index
    %c0_4 = arith.constant 0 : index
    %3 = vector.load %arg3[%c0_3, %c0_4] : memref<1x32xf32, #tpu.memory_space<vmem>>, vector<1x32xf32>
    %4 = vector.broadcast %3 : vector<1x32xf32> to vector<256x32xf32>
    %5 = arith.addf %2, %4 : vector<256x32xf32>
    %cst_5 = arith.constant 0.000000e+00 : f32
    %6 = vector.broadcast %cst_5 : f32 to vector<256x32xf32>
    %7 = arith.maximumf %5, %6 : vector<256x32xf32>
    %8 = arith.truncf %7 : vector<256x32xf32> to vector<256x32xbf16>
    %c0_6 = arith.constant 0 : index
    %c0_7 = arith.constant 0 : index
    %9 = vector.load %arg4[%c0_6, %c0_7] : memref<256x32xbf16, #tpu.memory_space<vmem>>, vector<256x32xbf16>
    tpu.vector_store %arg4[%c0_6, %c0_7], %8 {strides = array<i32>} : memref<256x32xbf16, #tpu.memory_space<vmem>>, vector<256x32xbf16>,
    return
  }
  func.func @transform_0(%arg0: i32) -> (i32, i32) {
    %c0_i32 = arith.constant 0 : i32
    %c0_i32_0 = arith.constant 0 : i32
    return %arg0, %c0_i32 : i32, i32
  }
  func.func @transform_1(%arg0: i32) -> (i32, i32) {
    %c0_i32 = arith.constant 0 : i32
    %c0_i32_0 = arith.constant 0 : i32
    %c0_i32_1 = arith.constant 0 : i32
    return %c0_i32, %c0_i32_0 : i32, i32
  }
  func.func @transform_2(%arg0: i32) -> (i32, i32) {
    %c0_i32 = arith.constant 0 : i32
    %c0_i32_0 = arith.constant 0 : i32
    %c0_i32_1 = arith.constant 0 : i32
    return %c0_i32, %c0_i32_0 : i32, i32
  }
  func.func @transform_3(%arg0: i32) -> (i32, i32) {
    %c0_i32 = arith.constant 0 : i32
    %c0_i32_0 = arith.constant 0 : i32
    return %arg0, %c0_i32 : i32, i32
  }
}

module attributes {stable_mosaic.version = 11 : i64} {
  func.func @_gemm_bias_act_kernel(%arg0: i32, %arg1: memref<176x512xbf16, #tpu.memory_space<vmem>>, %arg2: memref<512x64xbf16, #tpu.memory_space<vmem>>, %arg3: memref<1x64xf32, #tpu.memory_space<vmem>>, %arg4: memref<176x64xbf16, #tpu.memory_space<vmem>>) attributes {dimension_semantics = [#tpu.dimension_semantics<parallel>], iteration_bounds = array<i64: 2>, scalar_prefetch = 0 : i64, scratch_operands = 0 : i64, tpu.core_type = #tpu.core_type<tc>, window_params = [{transform_indices = @transform_0, window_bounds = array<i64: 176, 512>}, {pipeline_mode = #tpu.pipeline_mode<synchronous>, transform_indices = @transform_1, window_bounds = array<i64: 512, 64>}, {pipeline_mode = #tpu.pipeline_mode<synchronous>, transform_indices = @transform_2, window_bounds = array<i64: 1, 64>}, {transform_indices = @transform_3, window_bounds = array<i64: 176, 64>}]} {
    %c0 = arith.constant 0 : index
    %c0_0 = arith.constant 0 : index
    %0 = vector.load %arg1[%c0, %c0_0] : memref<176x512xbf16, #tpu.memory_space<vmem>>, vector<176x512xbf16>
    %c0_1 = arith.constant 0 : index
    %c0_2 = arith.constant 0 : index
    %1 = vector.load %arg2[%c0_1, %c0_2] : memref<512x64xbf16, #tpu.memory_space<vmem>>, vector<512x64xbf16>
    %cst = arith.constant dense<0.000000e+00> : vector<176x64xf32>
    %2 = tpu.matmul %0, %1, %cst {dimension_numbers = #tpu.dot_dimension_numbers<[1], [0], [0], [1], [0, 0, 1, 1], [], []>} : vector<176x512xbf16>, vector<512x64xbf16>, vector<176x64xf32> -> vector<176x64xf32>
    %c0_3 = arith.constant 0 : index
    %c0_4 = arith.constant 0 : index
    %3 = vector.load %arg3[%c0_3, %c0_4] : memref<1x64xf32, #tpu.memory_space<vmem>>, vector<1x64xf32>
    %4 = vector.broadcast %3 : vector<1x64xf32> to vector<176x64xf32>
    %5 = arith.addf %2, %4 : vector<176x64xf32>
    %cst_5 = arith.constant 0.000000e+00 : f32
    %6 = vector.broadcast %cst_5 : f32 to vector<176x64xf32>
    %7 = arith.maximumf %5, %6 : vector<176x64xf32>
    %8 = arith.truncf %7 : vector<176x64xf32> to vector<176x64xbf16>
    %c0_6 = arith.constant 0 : index
    %c0_7 = arith.constant 0 : index
    %9 = vector.load %arg4[%c0_6, %c0_7] : memref<176x64xbf16, #tpu.memory_space<vmem>>, vector<176x64xbf16>
    tpu.vector_store %arg4[%c0_6, %c0_7], %8 {strides = array<i32>} : memref<176x64xbf16, #tpu.memory_space<vmem>>, vector<176x64xbf16>,
    return
  }
  func.func @transform_0(%arg0: i32) -> (i32, i32) {
    %c0_i32 = arith.constant 0 : i32
    %c0_i32_0 = arith.constant 0 : i32
    return %arg0, %c0_i32 : i32, i32
  }
  func.func @transform_1(%arg0: i32) -> (i32, i32) {
    %c0_i32 = arith.constant 0 : i32
    %c0_i32_0 = arith.constant 0 : i32
    %c0_i32_1 = arith.constant 0 : i32
    return %c0_i32, %c0_i32_0 : i32, i32
  }
  func.func @transform_2(%arg0: i32) -> (i32, i32) {
    %c0_i32 = arith.constant 0 : i32
    %c0_i32_0 = arith.constant 0 : i32
    %c0_i32_1 = arith.constant 0 : i32
    return %c0_i32, %c0_i32_0 : i32, i32
  }
  func.func @transform_3(%arg0: i32) -> (i32, i32) {
    %c0_i32 = arith.constant 0 : i32
    %c0_i32_0 = arith.constant 0 : i32
    return %arg0, %c0_i32 : i32, i32
  }
}

module attributes {stable_mosaic.version = 11 : i64} {
  func.func @_conv3_head_kernel(%arg0: i32, %arg1: i32, %arg2: memref<11x2x576xbf16, #tpu.memory_space<vmem>>, %arg3: memref<576x64xbf16, #tpu.memory_space<vmem>>, %arg4: memref<1x64xf32, #tpu.memory_space<vmem>>, %arg5: memref<11x64x128xbf16, #tpu.memory_space<vmem>>, %arg6: memref<1x128xf32, #tpu.memory_space<vmem>>, %arg7: memref<128x128xbf16, #tpu.memory_space<vmem>>, %arg8: memref<1x128xf32, #tpu.memory_space<vmem>>, %arg9: memref<2x128xf32, #tpu.memory_space<vmem>>, %arg10: memref<2x128xf32, #tpu.memory_space<vmem>>) attributes {dimension_semantics = [#tpu.dimension_semantics<parallel>, #tpu.dimension_semantics<arbitrary>], iteration_bounds = array<i64: 1, 11>, scalar_prefetch = 0 : i64, scratch_operands = 1 : i64, tpu.core_type = #tpu.core_type<tc>, window_params = [{transform_indices = @transform_0, window_bounds = array<i64: 11, 2, 576>}, {pipeline_mode = #tpu.pipeline_mode<synchronous>, transform_indices = @transform_1, window_bounds = array<i64: 576, 64>}, {pipeline_mode = #tpu.pipeline_mode<synchronous>, transform_indices = @transform_2, window_bounds = array<i64: 1, 64>}, {transform_indices = @transform_3, window_bounds = array<i64: 11, 64, 128>}, {pipeline_mode = #tpu.pipeline_mode<synchronous>, transform_indices = @transform_4, window_bounds = array<i64: 1, 128>}, {pipeline_mode = #tpu.pipeline_mode<synchronous>, transform_indices = @transform_5, window_bounds = array<i64: 128, 128>}, {pipeline_mode = #tpu.pipeline_mode<synchronous>, transform_indices = @transform_6, window_bounds = array<i64: 1, 128>}, {transform_indices = @transform_7, window_bounds = array<i64: 2, 128>}]} {
    %c0_i32 = arith.constant 0 : i32
    %0 = arith.cmpi eq, %arg1, %c0_i32 : i32
    %1 = arith.extui %0 : i1 to i32
    %c0_i32_0 = arith.constant 0 : i32
    %2 = arith.cmpi ne, %1, %c0_i32_0 : i32
    scf.if %2 {
      %cst_137 = arith.constant 0.000000e+00 : f32
      %162 = vector.broadcast %cst_137 : f32 to vector<2x128xf32>
      %c0_138 = arith.constant 0 : index
      %c0_139 = arith.constant 0 : index
      %163 = vector.load %arg10[%c0_138, %c0_139] : memref<2x128xf32, #tpu.memory_space<vmem>>, vector<2x128xf32>
      tpu.vector_store %arg10[%c0_138, %c0_139], %162 {strides = array<i32>} : memref<2x128xf32, #tpu.memory_space<vmem>>, vector<2x128xf32>,
    } else {
    }
    %c0 = arith.constant 0 : index
    %c0_1 = arith.constant 0 : index
    %3 = vector.load %arg10[%c0, %c0_1] : memref<2x128xf32, #tpu.memory_space<vmem>>, vector<2x128xf32>
    %c0_2 = arith.constant 0 : index
    %c0_3 = arith.constant 0 : index
    %c0_4 = arith.constant 0 : index
    %4 = vector.load %arg2[%c0_2, %c0_3, %c0_4] : memref<11x2x576xbf16, #tpu.memory_space<vmem>>, vector<1x2x576xbf16>
    %5 = vector.shape_cast %4 : vector<1x2x576xbf16> to vector<2x576xbf16>
    %c0_5 = arith.constant 0 : index
    %c0_6 = arith.constant 0 : index
    %6 = vector.load %arg3[%c0_5, %c0_6] : memref<576x64xbf16, #tpu.memory_space<vmem>>, vector<576x64xbf16>
    %cst = arith.constant dense<0.000000e+00> : vector<2x64xf32>
    %7 = tpu.matmul %5, %6, %cst {dimension_numbers = #tpu.dot_dimension_numbers<[1], [0], [0], [1], [0, 0, 1, 1], [], []>} : vector<2x576xbf16>, vector<576x64xbf16>, vector<2x64xf32> -> vector<2x64xf32>
    %c0_7 = arith.constant 0 : index
    %c0_8 = arith.constant 0 : index
    %8 = vector.load %arg4[%c0_7, %c0_8] : memref<1x64xf32, #tpu.memory_space<vmem>>, vector<1x64xf32>
    %9 = vector.broadcast %8 : vector<1x64xf32> to vector<2x64xf32>
    %10 = arith.addf %7, %9 : vector<2x64xf32>
    %cst_9 = arith.constant 0.000000e+00 : f32
    %11 = vector.broadcast %cst_9 : f32 to vector<2x64xf32>
    %12 = arith.maximumf %10, %11 : vector<2x64xf32>
    %13 = arith.truncf %12 : vector<2x64xf32> to vector<2x64xbf16>
    %c0_10 = arith.constant 0 : index
    %c0_11 = arith.constant 0 : index
    %c0_12 = arith.constant 0 : index
    %14 = vector.load %arg5[%c0_10, %c0_11, %c0_12] : memref<11x64x128xbf16, #tpu.memory_space<vmem>>, vector<1x64x128xbf16>
    %15 = vector.shape_cast %14 : vector<1x64x128xbf16> to vector<64x128xbf16>
    %cst_13 = arith.constant dense<0.000000e+00> : vector<2x128xf32>
    %16 = tpu.matmul %13, %15, %cst_13 {dimension_numbers = #tpu.dot_dimension_numbers<[1], [0], [0], [1], [0, 0, 1, 1], [], []>} : vector<2x64xbf16>, vector<64x128xbf16>, vector<2x128xf32> -> vector<2x128xf32>
    %17 = arith.addf %3, %16 : vector<2x128xf32>
    %c1 = arith.constant 1 : index
    %c0_14 = arith.constant 0 : index
    %c0_15 = arith.constant 0 : index
    %18 = vector.load %arg2[%c1, %c0_14, %c0_15] : memref<11x2x576xbf16, #tpu.memory_space<vmem>>, vector<1x2x576xbf16>
    %19 = vector.shape_cast %18 : vector<1x2x576xbf16> to vector<2x576xbf16>
    %c0_16 = arith.constant 0 : index
    %c0_17 = arith.constant 0 : index
    %20 = vector.load %arg3[%c0_16, %c0_17] : memref<576x64xbf16, #tpu.memory_space<vmem>>, vector<576x64xbf16>
    %cst_18 = arith.constant dense<0.000000e+00> : vector<2x64xf32>
    %21 = tpu.matmul %19, %20, %cst_18 {dimension_numbers = #tpu.dot_dimension_numbers<[1], [0], [0], [1], [0, 0, 1, 1], [], []>} : vector<2x576xbf16>, vector<576x64xbf16>, vector<2x64xf32> -> vector<2x64xf32>
    %c0_19 = arith.constant 0 : index
    %c0_20 = arith.constant 0 : index
    %22 = vector.load %arg4[%c0_19, %c0_20] : memref<1x64xf32, #tpu.memory_space<vmem>>, vector<1x64xf32>
    %23 = vector.broadcast %22 : vector<1x64xf32> to vector<2x64xf32>
    %24 = arith.addf %21, %23 : vector<2x64xf32>
    %cst_21 = arith.constant 0.000000e+00 : f32
    %25 = vector.broadcast %cst_21 : f32 to vector<2x64xf32>
    %26 = arith.maximumf %24, %25 : vector<2x64xf32>
    %27 = arith.truncf %26 : vector<2x64xf32> to vector<2x64xbf16>
    %c1_22 = arith.constant 1 : index
    %c0_23 = arith.constant 0 : index
    %c0_24 = arith.constant 0 : index
    %28 = vector.load %arg5[%c1_22, %c0_23, %c0_24] : memref<11x64x128xbf16, #tpu.memory_space<vmem>>, vector<1x64x128xbf16>
    %29 = vector.shape_cast %28 : vector<1x64x128xbf16> to vector<64x128xbf16>
    %cst_25 = arith.constant dense<0.000000e+00> : vector<2x128xf32>
    %30 = tpu.matmul %27, %29, %cst_25 {dimension_numbers = #tpu.dot_dimension_numbers<[1], [0], [0], [1], [0, 0, 1, 1], [], []>} : vector<2x64xbf16>, vector<64x128xbf16>, vector<2x128xf32> -> vector<2x128xf32>
    %31 = arith.addf %17, %30 : vector<2x128xf32>
    %c2 = arith.constant 2 : index
    %c0_26 = arith.constant 0 : index
    %c0_27 = arith.constant 0 : index
    %32 = vector.load %arg2[%c2, %c0_26, %c0_27] : memref<11x2x576xbf16, #tpu.memory_space<vmem>>, vector<1x2x576xbf16>
    %33 = vector.shape_cast %32 : vector<1x2x576xbf16> to vector<2x576xbf16>
    %c0_28 = arith.constant 0 : index
    %c0_29 = arith.constant 0 : index
    %34 = vector.load %arg3[%c0_28, %c0_29] : memref<576x64xbf16, #tpu.memory_space<vmem>>, vector<576x64xbf16>
    %cst_30 = arith.constant dense<0.000000e+00> : vector<2x64xf32>
    %35 = tpu.matmul %33, %34, %cst_30 {dimension_numbers = #tpu.dot_dimension_numbers<[1], [0], [0], [1], [0, 0, 1, 1], [], []>} : vector<2x576xbf16>, vector<576x64xbf16>, vector<2x64xf32> -> vector<2x64xf32>
    %c0_31 = arith.constant 0 : index
    %c0_32 = arith.constant 0 : index
    %36 = vector.load %arg4[%c0_31, %c0_32] : memref<1x64xf32, #tpu.memory_space<vmem>>, vector<1x64xf32>
    %37 = vector.broadcast %36 : vector<1x64xf32> to vector<2x64xf32>
    %38 = arith.addf %35, %37 : vector<2x64xf32>
    %cst_33 = arith.constant 0.000000e+00 : f32
    %39 = vector.broadcast %cst_33 : f32 to vector<2x64xf32>
    %40 = arith.maximumf %38, %39 : vector<2x64xf32>
    %41 = arith.truncf %40 : vector<2x64xf32> to vector<2x64xbf16>
    %c2_34 = arith.constant 2 : index
    %c0_35 = arith.constant 0 : index
    %c0_36 = arith.constant 0 : index
    %42 = vector.load %arg5[%c2_34, %c0_35, %c0_36] : memref<11x64x128xbf16, #tpu.memory_space<vmem>>, vector<1x64x128xbf16>
    %43 = vector.shape_cast %42 : vector<1x64x128xbf16> to vector<64x128xbf16>
    %cst_37 = arith.constant dense<0.000000e+00> : vector<2x128xf32>
    %44 = tpu.matmul %41, %43, %cst_37 {dimension_numbers = #tpu.dot_dimension_numbers<[1], [0], [0], [1], [0, 0, 1, 1], [], []>} : vector<2x64xbf16>, vector<64x128xbf16>, vector<2x128xf32> -> vector<2x128xf32>
    %45 = arith.addf %31, %44 : vector<2x128xf32>
    %c3 = arith.constant 3 : index
    %c0_38 = arith.constant 0 : index
    %c0_39 = arith.constant 0 : index
    %46 = vector.load %arg2[%c3, %c0_38, %c0_39] : memref<11x2x576xbf16, #tpu.memory_space<vmem>>, vector<1x2x576xbf16>
    %47 = vector.shape_cast %46 : vector<1x2x576xbf16> to vector<2x576xbf16>
    %c0_40 = arith.constant 0 : index
    %c0_41 = arith.constant 0 : index
    %48 = vector.load %arg3[%c0_40, %c0_41] : memref<576x64xbf16, #tpu.memory_space<vmem>>, vector<576x64xbf16>
    %cst_42 = arith.constant dense<0.000000e+00> : vector<2x64xf32>
    %49 = tpu.matmul %47, %48, %cst_42 {dimension_numbers = #tpu.dot_dimension_numbers<[1], [0], [0], [1], [0, 0, 1, 1], [], []>} : vector<2x576xbf16>, vector<576x64xbf16>, vector<2x64xf32> -> vector<2x64xf32>
    %c0_43 = arith.constant 0 : index
    %c0_44 = arith.constant 0 : index
    %50 = vector.load %arg4[%c0_43, %c0_44] : memref<1x64xf32, #tpu.memory_space<vmem>>, vector<1x64xf32>
    %51 = vector.broadcast %50 : vector<1x64xf32> to vector<2x64xf32>
    %52 = arith.addf %49, %51 : vector<2x64xf32>
    %cst_45 = arith.constant 0.000000e+00 : f32
    %53 = vector.broadcast %cst_45 : f32 to vector<2x64xf32>
    %54 = arith.maximumf %52, %53 : vector<2x64xf32>
    %55 = arith.truncf %54 : vector<2x64xf32> to vector<2x64xbf16>
    %c3_46 = arith.constant 3 : index
    %c0_47 = arith.constant 0 : index
    %c0_48 = arith.constant 0 : index
    %56 = vector.load %arg5[%c3_46, %c0_47, %c0_48] : memref<11x64x128xbf16, #tpu.memory_space<vmem>>, vector<1x64x128xbf16>
    %57 = vector.shape_cast %56 : vector<1x64x128xbf16> to vector<64x128xbf16>
    %cst_49 = arith.constant dense<0.000000e+00> : vector<2x128xf32>
    %58 = tpu.matmul %55, %57, %cst_49 {dimension_numbers = #tpu.dot_dimension_numbers<[1], [0], [0], [1], [0, 0, 1, 1], [], []>} : vector<2x64xbf16>, vector<64x128xbf16>, vector<2x128xf32> -> vector<2x128xf32>
    %59 = arith.addf %45, %58 : vector<2x128xf32>
    %c4 = arith.constant 4 : index
    %c0_50 = arith.constant 0 : index
    %c0_51 = arith.constant 0 : index
    %60 = vector.load %arg2[%c4, %c0_50, %c0_51] : memref<11x2x576xbf16, #tpu.memory_space<vmem>>, vector<1x2x576xbf16>
    %61 = vector.shape_cast %60 : vector<1x2x576xbf16> to vector<2x576xbf16>
    %c0_52 = arith.constant 0 : index
    %c0_53 = arith.constant 0 : index
    %62 = vector.load %arg3[%c0_52, %c0_53] : memref<576x64xbf16, #tpu.memory_space<vmem>>, vector<576x64xbf16>
    %cst_54 = arith.constant dense<0.000000e+00> : vector<2x64xf32>
    %63 = tpu.matmul %61, %62, %cst_54 {dimension_numbers = #tpu.dot_dimension_numbers<[1], [0], [0], [1], [0, 0, 1, 1], [], []>} : vector<2x576xbf16>, vector<576x64xbf16>, vector<2x64xf32> -> vector<2x64xf32>
    %c0_55 = arith.constant 0 : index
    %c0_56 = arith.constant 0 : index
    %64 = vector.load %arg4[%c0_55, %c0_56] : memref<1x64xf32, #tpu.memory_space<vmem>>, vector<1x64xf32>
    %65 = vector.broadcast %64 : vector<1x64xf32> to vector<2x64xf32>
    %66 = arith.addf %63, %65 : vector<2x64xf32>
    %cst_57 = arith.constant 0.000000e+00 : f32
    %67 = vector.broadcast %cst_57 : f32 to vector<2x64xf32>
    %68 = arith.maximumf %66, %67 : vector<2x64xf32>
    %69 = arith.truncf %68 : vector<2x64xf32> to vector<2x64xbf16>
    %c4_58 = arith.constant 4 : index
    %c0_59 = arith.constant 0 : index
    %c0_60 = arith.constant 0 : index
    %70 = vector.load %arg5[%c4_58, %c0_59, %c0_60] : memref<11x64x128xbf16, #tpu.memory_space<vmem>>, vector<1x64x128xbf16>
    %71 = vector.shape_cast %70 : vector<1x64x128xbf16> to vector<64x128xbf16>
    %cst_61 = arith.constant dense<0.000000e+00> : vector<2x128xf32>
    %72 = tpu.matmul %69, %71, %cst_61 {dimension_numbers = #tpu.dot_dimension_numbers<[1], [0], [0], [1], [0, 0, 1, 1], [], []>} : vector<2x64xbf16>, vector<64x128xbf16>, vector<2x128xf32> -> vector<2x128xf32>
    %73 = arith.addf %59, %72 : vector<2x128xf32>
    %c5 = arith.constant 5 : index
    %c0_62 = arith.constant 0 : index
    %c0_63 = arith.constant 0 : index
    %74 = vector.load %arg2[%c5, %c0_62, %c0_63] : memref<11x2x576xbf16, #tpu.memory_space<vmem>>, vector<1x2x576xbf16>
    %75 = vector.shape_cast %74 : vector<1x2x576xbf16> to vector<2x576xbf16>
    %c0_64 = arith.constant 0 : index
    %c0_65 = arith.constant 0 : index
    %76 = vector.load %arg3[%c0_64, %c0_65] : memref<576x64xbf16, #tpu.memory_space<vmem>>, vector<576x64xbf16>
    %cst_66 = arith.constant dense<0.000000e+00> : vector<2x64xf32>
    %77 = tpu.matmul %75, %76, %cst_66 {dimension_numbers = #tpu.dot_dimension_numbers<[1], [0], [0], [1], [0, 0, 1, 1], [], []>} : vector<2x576xbf16>, vector<576x64xbf16>, vector<2x64xf32> -> vector<2x64xf32>
    %c0_67 = arith.constant 0 : index
    %c0_68 = arith.constant 0 : index
    %78 = vector.load %arg4[%c0_67, %c0_68] : memref<1x64xf32, #tpu.memory_space<vmem>>, vector<1x64xf32>
    %79 = vector.broadcast %78 : vector<1x64xf32> to vector<2x64xf32>
    %80 = arith.addf %77, %79 : vector<2x64xf32>
    %cst_69 = arith.constant 0.000000e+00 : f32
    %81 = vector.broadcast %cst_69 : f32 to vector<2x64xf32>
    %82 = arith.maximumf %80, %81 : vector<2x64xf32>
    %83 = arith.truncf %82 : vector<2x64xf32> to vector<2x64xbf16>
    %c5_70 = arith.constant 5 : index
    %c0_71 = arith.constant 0 : index
    %c0_72 = arith.constant 0 : index
    %84 = vector.load %arg5[%c5_70, %c0_71, %c0_72] : memref<11x64x128xbf16, #tpu.memory_space<vmem>>, vector<1x64x128xbf16>
    %85 = vector.shape_cast %84 : vector<1x64x128xbf16> to vector<64x128xbf16>
    %cst_73 = arith.constant dense<0.000000e+00> : vector<2x128xf32>
    %86 = tpu.matmul %83, %85, %cst_73 {dimension_numbers = #tpu.dot_dimension_numbers<[1], [0], [0], [1], [0, 0, 1, 1], [], []>} : vector<2x64xbf16>, vector<64x128xbf16>, vector<2x128xf32> -> vector<2x128xf32>
    %87 = arith.addf %73, %86 : vector<2x128xf32>
    %c6 = arith.constant 6 : index
    %c0_74 = arith.constant 0 : index
    %c0_75 = arith.constant 0 : index
    %88 = vector.load %arg2[%c6, %c0_74, %c0_75] : memref<11x2x576xbf16, #tpu.memory_space<vmem>>, vector<1x2x576xbf16>
    %89 = vector.shape_cast %88 : vector<1x2x576xbf16> to vector<2x576xbf16>
    %c0_76 = arith.constant 0 : index
    %c0_77 = arith.constant 0 : index
    %90 = vector.load %arg3[%c0_76, %c0_77] : memref<576x64xbf16, #tpu.memory_space<vmem>>, vector<576x64xbf16>
    %cst_78 = arith.constant dense<0.000000e+00> : vector<2x64xf32>
    %91 = tpu.matmul %89, %90, %cst_78 {dimension_numbers = #tpu.dot_dimension_numbers<[1], [0], [0], [1], [0, 0, 1, 1], [], []>} : vector<2x576xbf16>, vector<576x64xbf16>, vector<2x64xf32> -> vector<2x64xf32>
    %c0_79 = arith.constant 0 : index
    %c0_80 = arith.constant 0 : index
    %92 = vector.load %arg4[%c0_79, %c0_80] : memref<1x64xf32, #tpu.memory_space<vmem>>, vector<1x64xf32>
    %93 = vector.broadcast %92 : vector<1x64xf32> to vector<2x64xf32>
    %94 = arith.addf %91, %93 : vector<2x64xf32>
    %cst_81 = arith.constant 0.000000e+00 : f32
    %95 = vector.broadcast %cst_81 : f32 to vector<2x64xf32>
    %96 = arith.maximumf %94, %95 : vector<2x64xf32>
    %97 = arith.truncf %96 : vector<2x64xf32> to vector<2x64xbf16>
    %c6_82 = arith.constant 6 : index
    %c0_83 = arith.constant 0 : index
    %c0_84 = arith.constant 0 : index
    %98 = vector.load %arg5[%c6_82, %c0_83, %c0_84] : memref<11x64x128xbf16, #tpu.memory_space<vmem>>, vector<1x64x128xbf16>
    %99 = vector.shape_cast %98 : vector<1x64x128xbf16> to vector<64x128xbf16>
    %cst_85 = arith.constant dense<0.000000e+00> : vector<2x128xf32>
    %100 = tpu.matmul %97, %99, %cst_85 {dimension_numbers = #tpu.dot_dimension_numbers<[1], [0], [0], [1], [0, 0, 1, 1], [], []>} : vector<2x64xbf16>, vector<64x128xbf16>, vector<2x128xf32> -> vector<2x128xf32>
    %101 = arith.addf %87, %100 : vector<2x128xf32>
    %c7 = arith.constant 7 : index
    %c0_86 = arith.constant 0 : index
    %c0_87 = arith.constant 0 : index
    %102 = vector.load %arg2[%c7, %c0_86, %c0_87] : memref<11x2x576xbf16, #tpu.memory_space<vmem>>, vector<1x2x576xbf16>
    %103 = vector.shape_cast %102 : vector<1x2x576xbf16> to vector<2x576xbf16>
    %c0_88 = arith.constant 0 : index
    %c0_89 = arith.constant 0 : index
    %104 = vector.load %arg3[%c0_88, %c0_89] : memref<576x64xbf16, #tpu.memory_space<vmem>>, vector<576x64xbf16>
    %cst_90 = arith.constant dense<0.000000e+00> : vector<2x64xf32>
    %105 = tpu.matmul %103, %104, %cst_90 {dimension_numbers = #tpu.dot_dimension_numbers<[1], [0], [0], [1], [0, 0, 1, 1], [], []>} : vector<2x576xbf16>, vector<576x64xbf16>, vector<2x64xf32> -> vector<2x64xf32>
    %c0_91 = arith.constant 0 : index
    %c0_92 = arith.constant 0 : index
    %106 = vector.load %arg4[%c0_91, %c0_92] : memref<1x64xf32, #tpu.memory_space<vmem>>, vector<1x64xf32>
    %107 = vector.broadcast %106 : vector<1x64xf32> to vector<2x64xf32>
    %108 = arith.addf %105, %107 : vector<2x64xf32>
    %cst_93 = arith.constant 0.000000e+00 : f32
    %109 = vector.broadcast %cst_93 : f32 to vector<2x64xf32>
    %110 = arith.maximumf %108, %109 : vector<2x64xf32>
    %111 = arith.truncf %110 : vector<2x64xf32> to vector<2x64xbf16>
    %c7_94 = arith.constant 7 : index
    %c0_95 = arith.constant 0 : index
    %c0_96 = arith.constant 0 : index
    %112 = vector.load %arg5[%c7_94, %c0_95, %c0_96] : memref<11x64x128xbf16, #tpu.memory_space<vmem>>, vector<1x64x128xbf16>
    %113 = vector.shape_cast %112 : vector<1x64x128xbf16> to vector<64x128xbf16>
    %cst_97 = arith.constant dense<0.000000e+00> : vector<2x128xf32>
    %114 = tpu.matmul %111, %113, %cst_97 {dimension_numbers = #tpu.dot_dimension_numbers<[1], [0], [0], [1], [0, 0, 1, 1], [], []>} : vector<2x64xbf16>, vector<64x128xbf16>, vector<2x128xf32> -> vector<2x128xf32>
    %115 = arith.addf %101, %114 : vector<2x128xf32>
    %c8 = arith.constant 8 : index
    %c0_98 = arith.constant 0 : index
    %c0_99 = arith.constant 0 : index
    %116 = vector.load %arg2[%c8, %c0_98, %c0_99] : memref<11x2x576xbf16, #tpu.memory_space<vmem>>, vector<1x2x576xbf16>
    %117 = vector.shape_cast %116 : vector<1x2x576xbf16> to vector<2x576xbf16>
    %c0_100 = arith.constant 0 : index
    %c0_101 = arith.constant 0 : index
    %118 = vector.load %arg3[%c0_100, %c0_101] : memref<576x64xbf16, #tpu.memory_space<vmem>>, vector<576x64xbf16>
    %cst_102 = arith.constant dense<0.000000e+00> : vector<2x64xf32>
    %119 = tpu.matmul %117, %118, %cst_102 {dimension_numbers = #tpu.dot_dimension_numbers<[1], [0], [0], [1], [0, 0, 1, 1], [], []>} : vector<2x576xbf16>, vector<576x64xbf16>, vector<2x64xf32> -> vector<2x64xf32>
    %c0_103 = arith.constant 0 : index
    %c0_104 = arith.constant 0 : index
    %120 = vector.load %arg4[%c0_103, %c0_104] : memref<1x64xf32, #tpu.memory_space<vmem>>, vector<1x64xf32>
    %121 = vector.broadcast %120 : vector<1x64xf32> to vector<2x64xf32>
    %122 = arith.addf %119, %121 : vector<2x64xf32>
    %cst_105 = arith.constant 0.000000e+00 : f32
    %123 = vector.broadcast %cst_105 : f32 to vector<2x64xf32>
    %124 = arith.maximumf %122, %123 : vector<2x64xf32>
    %125 = arith.truncf %124 : vector<2x64xf32> to vector<2x64xbf16>
    %c8_106 = arith.constant 8 : index
    %c0_107 = arith.constant 0 : index
    %c0_108 = arith.constant 0 : index
    %126 = vector.load %arg5[%c8_106, %c0_107, %c0_108] : memref<11x64x128xbf16, #tpu.memory_space<vmem>>, vector<1x64x128xbf16>
    %127 = vector.shape_cast %126 : vector<1x64x128xbf16> to vector<64x128xbf16>
    %cst_109 = arith.constant dense<0.000000e+00> : vector<2x128xf32>
    %128 = tpu.matmul %125, %127, %cst_109 {dimension_numbers = #tpu.dot_dimension_numbers<[1], [0], [0], [1], [0, 0, 1, 1], [], []>} : vector<2x64xbf16>, vector<64x128xbf16>, vector<2x128xf32> -> vector<2x128xf32>
    %129 = arith.addf %115, %128 : vector<2x128xf32>
    %c9 = arith.constant 9 : index
    %c0_110 = arith.constant 0 : index
    %c0_111 = arith.constant 0 : index
    %130 = vector.load %arg2[%c9, %c0_110, %c0_111] : memref<11x2x576xbf16, #tpu.memory_space<vmem>>, vector<1x2x576xbf16>
    %131 = vector.shape_cast %130 : vector<1x2x576xbf16> to vector<2x576xbf16>
    %c0_112 = arith.constant 0 : index
    %c0_113 = arith.constant 0 : index
    %132 = vector.load %arg3[%c0_112, %c0_113] : memref<576x64xbf16, #tpu.memory_space<vmem>>, vector<576x64xbf16>
    %cst_114 = arith.constant dense<0.000000e+00> : vector<2x64xf32>
    %133 = tpu.matmul %131, %132, %cst_114 {dimension_numbers = #tpu.dot_dimension_numbers<[1], [0], [0], [1], [0, 0, 1, 1], [], []>} : vector<2x576xbf16>, vector<576x64xbf16>, vector<2x64xf32> -> vector<2x64xf32>
    %c0_115 = arith.constant 0 : index
    %c0_116 = arith.constant 0 : index
    %134 = vector.load %arg4[%c0_115, %c0_116] : memref<1x64xf32, #tpu.memory_space<vmem>>, vector<1x64xf32>
    %135 = vector.broadcast %134 : vector<1x64xf32> to vector<2x64xf32>
    %136 = arith.addf %133, %135 : vector<2x64xf32>
    %cst_117 = arith.constant 0.000000e+00 : f32
    %137 = vector.broadcast %cst_117 : f32 to vector<2x64xf32>
    %138 = arith.maximumf %136, %137 : vector<2x64xf32>
    %139 = arith.truncf %138 : vector<2x64xf32> to vector<2x64xbf16>
    %c9_118 = arith.constant 9 : index
    %c0_119 = arith.constant 0 : index
    %c0_120 = arith.constant 0 : index
    %140 = vector.load %arg5[%c9_118, %c0_119, %c0_120] : memref<11x64x128xbf16, #tpu.memory_space<vmem>>, vector<1x64x128xbf16>
    %141 = vector.shape_cast %140 : vector<1x64x128xbf16> to vector<64x128xbf16>
    %cst_121 = arith.constant dense<0.000000e+00> : vector<2x128xf32>
    %142 = tpu.matmul %139, %141, %cst_121 {dimension_numbers = #tpu.dot_dimension_numbers<[1], [0], [0], [1], [0, 0, 1, 1], [], []>} : vector<2x64xbf16>, vector<64x128xbf16>, vector<2x128xf32> -> vector<2x128xf32>
    %143 = arith.addf %129, %142 : vector<2x128xf32>
    %c10 = arith.constant 10 : index
    %c0_122 = arith.constant 0 : index
    %c0_123 = arith.constant 0 : index
    %144 = vector.load %arg2[%c10, %c0_122, %c0_123] : memref<11x2x576xbf16, #tpu.memory_space<vmem>>, vector<1x2x576xbf16>
    %145 = vector.shape_cast %144 : vector<1x2x576xbf16> to vector<2x576xbf16>
    %c0_124 = arith.constant 0 : index
    %c0_125 = arith.constant 0 : index
    %146 = vector.load %arg3[%c0_124, %c0_125] : memref<576x64xbf16, #tpu.memory_space<vmem>>, vector<576x64xbf16>
    %cst_126 = arith.constant dense<0.000000e+00> : vector<2x64xf32>
    %147 = tpu.matmul %145, %146, %cst_126 {dimension_numbers = #tpu.dot_dimension_numbers<[1], [0], [0], [1], [0, 0, 1, 1], [], []>} : vector<2x576xbf16>, vector<576x64xbf16>, vector<2x64xf32> -> vector<2x64xf32>
    %c0_127 = arith.constant 0 : index
    %c0_128 = arith.constant 0 : index
    %148 = vector.load %arg4[%c0_127, %c0_128] : memref<1x64xf32, #tpu.memory_space<vmem>>, vector<1x64xf32>
    %149 = vector.broadcast %148 : vector<1x64xf32> to vector<2x64xf32>
    %150 = arith.addf %147, %149 : vector<2x64xf32>
    %cst_129 = arith.constant 0.000000e+00 : f32
    %151 = vector.broadcast %cst_129 : f32 to vector<2x64xf32>
    %152 = arith.maximumf %150, %151 : vector<2x64xf32>
    %153 = arith.truncf %152 : vector<2x64xf32> to vector<2x64xbf16>
    %c10_130 = arith.constant 10 : index
    %c0_131 = arith.constant 0 : index
    %c0_132 = arith.constant 0 : index
    %154 = vector.load %arg5[%c10_130, %c0_131, %c0_132] : memref<11x64x128xbf16, #tpu.memory_space<vmem>>, vector<1x64x128xbf16>
    %155 = vector.shape_cast %154 : vector<1x64x128xbf16> to vector<64x128xbf16>
    %cst_133 = arith.constant dense<0.000000e+00> : vector<2x128xf32>
    %156 = tpu.matmul %153, %155, %cst_133 {dimension_numbers = #tpu.dot_dimension_numbers<[1], [0], [0], [1], [0, 0, 1, 1], [], []>} : vector<2x64xbf16>, vector<64x128xbf16>, vector<2x128xf32> -> vector<2x128xf32>
    %157 = arith.addf %143, %156 : vector<2x128xf32>
    %c0_134 = arith.constant 0 : index
    %c0_135 = arith.constant 0 : index
    %158 = vector.load %arg10[%c0_134, %c0_135] : memref<2x128xf32, #tpu.memory_space<vmem>>, vector<2x128xf32>
    tpu.vector_store %arg10[%c0_134, %c0_135], %157 {strides = array<i32>} : memref<2x128xf32, #tpu.memory_space<vmem>>, vector<2x128xf32>,
    %c10_i32 = arith.constant 10 : i32
    %159 = arith.cmpi eq, %arg1, %c10_i32 : i32
    %160 = arith.extui %159 : i1 to i32
    %c0_i32_136 = arith.constant 0 : i32
    %161 = arith.cmpi ne, %160, %c0_i32_136 : i32
    scf.if %161 {
      %c0_137 = arith.constant 0 : index
      %c0_138 = arith.constant 0 : index
      %162 = vector.load %arg6[%c0_137, %c0_138] : memref<1x128xf32, #tpu.memory_space<vmem>>, vector<1x128xf32>
      %163 = vector.broadcast %162 : vector<1x128xf32> to vector<2x128xf32>
      %164 = arith.addf %157, %163 : vector<2x128xf32>
      %cst_139 = arith.constant 0.000000e+00 : f32
      %165 = vector.broadcast %cst_139 : f32 to vector<2x128xf32>
      %166 = arith.maximumf %164, %165 : vector<2x128xf32>
      %167 = arith.truncf %166 : vector<2x128xf32> to vector<2x128xbf16>
      %c0_140 = arith.constant 0 : index
      %c0_141 = arith.constant 0 : index
      %168 = vector.load %arg7[%c0_140, %c0_141] : memref<128x128xbf16, #tpu.memory_space<vmem>>, vector<128x128xbf16>
      %cst_142 = arith.constant dense<0.000000e+00> : vector<2x128xf32>
      %169 = tpu.matmul %167, %168, %cst_142 {dimension_numbers = #tpu.dot_dimension_numbers<[1], [0], [0], [1], [0, 0, 1, 1], [], []>} : vector<2x128xbf16>, vector<128x128xbf16>, vector<2x128xf32> -> vector<2x128xf32>
      %c0_143 = arith.constant 0 : index
      %c0_144 = arith.constant 0 : index
      %170 = vector.load %arg8[%c0_143, %c0_144] : memref<1x128xf32, #tpu.memory_space<vmem>>, vector<1x128xf32>
      %171 = vector.broadcast %170 : vector<1x128xf32> to vector<2x128xf32>
      %172 = arith.addf %169, %171 : vector<2x128xf32>
      %c0_145 = arith.constant 0 : index
      %c0_146 = arith.constant 0 : index
      %173 = vector.load %arg9[%c0_145, %c0_146] : memref<2x128xf32, #tpu.memory_space<vmem>>, vector<2x128xf32>
      tpu.vector_store %arg9[%c0_145, %c0_146], %172 {strides = array<i32>} : memref<2x128xf32, #tpu.memory_space<vmem>>, vector<2x128xf32>,
    } else {
    }
    return
  }
  func.func @transform_0(%arg0: i32, %arg1: i32) -> (i32, i32, i32) {
    %c0_i32 = arith.constant 0 : i32
    %c0_i32_0 = arith.constant 0 : i32
    return %arg1, %arg0, %c0_i32 : i32, i32, i32
  }
  func.func @transform_1(%arg0: i32, %arg1: i32) -> (i32, i32) {
    %c0_i32 = arith.constant 0 : i32
    %c0_i32_0 = arith.constant 0 : i32
    %c0_i32_1 = arith.constant 0 : i32
    return %c0_i32, %c0_i32_0 : i32, i32
  }
  func.func @transform_2(%arg0: i32, %arg1: i32) -> (i32, i32) {
    %c0_i32 = arith.constant 0 : i32
    %c0_i32_0 = arith.constant 0 : i32
    %c0_i32_1 = arith.constant 0 : i32
    return %c0_i32, %c0_i32_0 : i32, i32
  }
  func.func @transform_3(%arg0: i32, %arg1: i32) -> (i32, i32, i32) {
    %c0_i32 = arith.constant 0 : i32
    %c0_i32_0 = arith.constant 0 : i32
    %c0_i32_1 = arith.constant 0 : i32
    return %arg1, %c0_i32, %c0_i32_0 : i32, i32, i32
  }
  func.func @transform_4(%arg0: i32, %arg1: i32) -> (i32, i32) {
    %c0_i32 = arith.constant 0 : i32
    %c0_i32_0 = arith.constant 0 : i32
    %c0_i32_1 = arith.constant 0 : i32
    return %c0_i32, %c0_i32_0 : i32, i32
  }
  func.func @transform_5(%arg0: i32, %arg1: i32) -> (i32, i32) {
    %c0_i32 = arith.constant 0 : i32
    %c0_i32_0 = arith.constant 0 : i32
    %c0_i32_1 = arith.constant 0 : i32
    return %c0_i32, %c0_i32_0 : i32, i32
  }
  func.func @transform_6(%arg0: i32, %arg1: i32) -> (i32, i32) {
    %c0_i32 = arith.constant 0 : i32
    %c0_i32_0 = arith.constant 0 : i32
    %c0_i32_1 = arith.constant 0 : i32
    return %c0_i32, %c0_i32_0 : i32, i32
  }
  func.func @transform_7(%arg0: i32, %arg1: i32) -> (i32, i32) {
    %c0_i32 = arith.constant 0 : i32
    %c0_i32_0 = arith.constant 0 : i32
    return %arg0, %c0_i32 : i32, i32
  }
}

</mosaic_0001>

<llo_original>
// kernel: soft_q_twin_forward.3
$region0: #{soft_q_twin_forward.3}
  #allocation0 [shape = 'u32[]', space=smem, size = 0x4, offset = 0x4, fixed_abs, tag = 'smem constant byte address 0x4 - core index']
  #allocation1 [shape = 'u32[144,128]{1,0:T(1,128)}', space=vmem, size = 0x12000, scoped, tag = 'internal scratch']
  %s0 = inlined_call_operand.vmem [shape: bf16[1568,64], index: 0, kind: input, shape index: {}]
  %s1 = inlined_call_operand.vmem [shape: bf16[64,32], index: 1, kind: input, shape index: {}]
  %s2 = inlined_call_operand.vmem [shape: f32[1,32], index: 2, kind: input, shape index: {}]
  %s3 = inlined_call_operand.vmem [shape: bf16[1568,32], index: 3, kind: output, shape index: {}]
  %s4 = sld [smem:[#allocation0]]
  $region89: #{soft_q_twin_forward.3} parent=0
    _
  %s6 = ssub.s32 1, %s4
  %s7 = scalar_select 0, %s6, %s4
  $region1: #{soft_q_twin_forward.3} parent=0
    #allocation2 [shape = 'u8[131072]{0}', space=vmem, size = 0x20000, scoped, tag = 'output window, operand 0']
    loop: start=0, step=1, limit=9
    $region2: #{soft_q_twin_forward.3} parent=1 // loop_pre_header
      _
    $region3: #{soft_q_twin_forward.3} parent=1 // loop_header
      %s9 = sphi 0, %s13
      %p10 = scmp.ge.s32.totalorder %s9, 9
      %s19 = sphi 0, %s21
      %s22 = sphi 0, %s19
      %s23 = sphi 0, %s22
      %s39 = sphi 0, %s23
      %s43 = sphi 0, %s43
      %s45 = sphi 0, %s43
      %s46 = sphi 0, %s45
      %s60 = sphi 0, %s46
      %s64 = sphi 0, %s64
      %s66 = sphi 0, %s64
      %s67 = sphi 0, %s66
      %s81 = sphi 0, %s67
      %s87 = sphi 0, %s89
      %s90 = sphi 0, %s87
      %s91 = sphi 0, %s90
      %s107 = sphi 0, %s91
    $region4: #{soft_q_twin_forward.3} parent=1 // loop_header_branch
      %12 = sbr.rel (%p10) target = $region8
    $region5: #{soft_q_twin_forward.3} parent=1 // loop_body
      %s14 = ssub.s32 %s9, 1
      %s15 = ssub.s32 %s9, 2
      %s16 = sadd.s32 %s9, 1
      %s17 = ssub.s32 %s9, %s16
      %p18 = scmp.eq.s32.totalorder %s17, 0
      %s20 = sadd.s32 %s19, 1
      %s21 = scalar_select %p18, %s19, %s20
      %p24 = pneg %p18
      %p25 = scmp.eq.s32.totalorder %s9, 6
      %p26 = por %p24, %p25
      %p27 = scmp.ne.s32.totalorder %s19, %s22
      %p28 = scmp.eq.s32.totalorder %s9, 0
      %p29 = por %p27, %p28
      %p30 = scmp.ne.s32.totalorder %s19, %s22
      %p31 = scmp.eq.s32.totalorder %s14, 6
      %p32 = por %p30, %p31
      %p33 = scmp.ne.s32.totalorder %s22, %s23
      %p34 = scmp.eq.s32.totalorder %s14, 0
      %p35 = por %p33, %p34
      %p36 = scmp.ne.s32.totalorder %s22, %s23
      %p37 = scmp.eq.s32.totalorder %s15, 6
      %p38 = por %p36, %p37
      %p40 = scmp.ne.s32.totalorder %s23, %s39
      %p41 = scmp.eq.s32.totalorder %s15, 0
      %p42 = por %p40, %p41
      %s44 = sadd.s32 %s43, 1
      %p47 = scmp.eq.s32.totalorder %s9, 6
      %p48 = scmp.ne.s32.totalorder %s43, %s45
      %p49 = scmp.eq.s32.totalorder %s9, 0
      %p50 = por %p48, %p49
      %p51 = scmp.ne.s32.totalorder %s43, %s45
      %p52 = scmp.eq.s32.totalorder %s14, 6
      %p53 = por %p51, %p52
      %p54 = scmp.ne.s32.totalorder %s45, %s46
      %p55 = scmp.eq.s32.totalorder %s14, 0
      %p56 = por %p54, %p55
      %p57 = scmp.ne.s32.totalorder %s45, %s46
      %p58 = scmp.eq.s32.totalorder %s15, 6
      %p59 = por %p57, %p58
      %p61 = scmp.ne.s32.totalorder %s46, %s60
      %p62 = scmp.eq.s32.totalorder %s15, 0
      %p63 = por %p61, %p62
      %s65 = sadd.s32 %s64, 1
      %p68 = scmp.eq.s32.totalorder %s9, 6
      %p69 = scmp.ne.s32.totalorder %s64, %s66
      %p70 = scmp.eq.s32.totalorder %s9, 0
      %p71 = por %p69, %p70
      %p72 = scmp.ne.s32.totalorder %s64, %s66
      %p73 = scmp.eq.s32.totalorder %s14, 6
      %p74 = por %p72, %p73
      %p75 = scmp.ne.s32.totalorder %s66, %s67
      %p76 = scmp.eq.s32.totalorder %s14, 0
      %p77 = por %p75, %p76
      %p78 = scmp.ne.s32.totalorder %s66, %s67
      %p79 = scmp.eq.s32.totalorder %s15, 6
      %p80 = por %p78, %p79
      %p82 = scmp.ne.s32.totalorder %s67, %s81
      %p83 = scmp.eq.s32.totalorder %s15, 0
      %p84 = por %p82, %p83
      %s85 = ssub.s32 %s9, %s16
      %p86 = scmp.eq.s32.totalorder %s85, 0
      %s88 = sadd.s32 %s87, 1
      %s89 = scalar_select %p86, %s87, %s88
      %p92 = pneg %p86
      %p93 = scmp.eq.s32.totalorder %s9, 6
      %p94 = por %p92, %p93
      %p95 = scmp.ne.s32.totalorder %s87, %s90
      %p96 = scmp.eq.s32.totalorder %s9, 0
      %p97 = por %p95, %p96
      %p98 = scmp.ne.s32.totalorder %s87, %s90
      %p99 = scmp.eq.s32.totalorder %s14, 6
      %p100 = por %p98, %p99
      %p101 = scmp.ne.s32.totalorder %s90, %s91
      %p102 = scmp.eq.s32.totalorder %s14, 0
      %p103 = por %p101, %p102
      %p104 = scmp.ne.s32.totalorder %s90, %s91
      %p105 = scmp.eq.s32.totalorder %s15, 6
      %p106 = por %p104, %p105
      %p108 = scmp.ne.s32.totalorder %s91, %s107
      %p109 = scmp.eq.s32.totalorder %s15, 0
      %p110 = por %p108, %p109
      %p111 = scmp.le.s32.totalorder 1, %s9
      %p112 = scmp.lt.s32.totalorder %s9, 8
      %p113 = pnand %p111, %p112
      %p114 = pneg %p113
      // Predicated region
      $region9: #{soft_q_twin_forward.3} parent=5 // pred_check
        _
      $region10: #{soft_q_twin_forward.3} parent=5 // pred_check_branch
        %116 = sbr.rel (%p113) target = $region12
      $region11: #{soft_q_twin_forward.3} parent=5 // pred_region
        %s117 = ssub.s32 %s9, 1
        // Predicated region
        $region13: #{soft_q_twin_forward.3} parent=11 // pred_check
          %p118 = pneg %p56
        $region14: #{soft_q_twin_forward.3} parent=11 // pred_check_branch
          %120 = sbr.rel (%p118) target = $region16
        $region15: #{soft_q_twin_forward.3} parent=11 // pred_region
          _
        $region16: #{soft_q_twin_forward.3} parent=11 // pred_fallthru
          _
        // Predicated region
        $region17: #{soft_q_twin_forward.3} parent=11 // pred_check
          %p121 = pneg %p77
        $region18: #{soft_q_twin_forward.3} parent=11 // pred_check_branch
          %123 = sbr.rel (%p121) target = $region20
        $region19: #{soft_q_twin_forward.3} parent=11 // pred_region
          _
        $region20: #{soft_q_twin_forward.3} parent=11 // pred_fallthru
          _
      $region12: #{soft_q_twin_forward.3} parent=5 // pred_fallthru
        _
      %p124 = scmp.lt.s32.totalorder %s9, 7
      // Predicated region
      $region21: #{soft_q_twin_forward.3} parent=5 // pred_check
        %p125 = pneg %p124
      $region22: #{soft_q_twin_forward.3} parent=5 // pred_check_branch
        %127 = sbr.rel (%p125) target = $region24
      $region23: #{soft_q_twin_forward.3} parent=5 // pred_region
        // Predicated region
        $region25: #{soft_q_twin_forward.3} parent=23 // pred_check
          %p128 = pneg %p29
        $region26: #{soft_q_twin_forward.3} parent=23 // pred_check_branch
          %130 = sbr.rel (%p128) target = $region28
        $region27: #{soft_q_twin_forward.3} parent=23 // pred_region
          %s131 = smul.u32 32, %s9
          %s132 = ssub.s32 196, %s131
          %p133 = scmp.lt.s32.totalorder %s132, 32
          %s134 = scalar_select %p133, %s132, 32
          %s135 = smul.u32 64, %s134
          %p136 = scmp.lt.s32.totalorder %s131, 195
          %s137 = scalar_select %p136, %s131, 195
          %s138 = smul.addr %s137, 4
          %s139 = scalar_lea.vmem %s0, %s138
          %s140 = smul.u32 32, %s9
          %s141 = ssub.s32 196, %s140
          %p142 = scmp.lt.s32.totalorder %s141, 32
          %s143 = scalar_select %p142, %s141, 32
          %s144 = smul.u32 64, %s143
        $region28: #{soft_q_twin_forward.3} parent=23 // pred_fallthru
          _
      $region24: #{soft_q_twin_forward.3} parent=5 // pred_fallthru
        _
      %p145 = scmp.le.s32.totalorder 1, %s9
      %p146 = scmp.lt.s32.totalorder %s9, 8
      %p147 = pnand %p145, %p146
      %p148 = pneg %p147
      // Predicated region
      $region29: #{soft_q_twin_forward.3} parent=5 // pred_check
        _
      $region30: #{soft_q_twin_forward.3} parent=5 // pred_check_branch
        %150 = sbr.rel (%p147) target = $region32
      $region31: #{soft_q_twin_forward.3} parent=5 // pred_region
        %s151 = ssub.s32 %s9, 1
        %s152 = smul.u32 32, %s14
        %s153 = ssub.s32 196, %s152
        %p154 = scmp.lt.s32.totalorder %s153, 32
        %s155 = scalar_select %p154, %s153, 32
        %s156 = smul.u32 64, %s155
        %p157 = scmp.lt.s32.totalorder %s152, 195
        %s158 = scalar_select %p157, %s152, 195
        %s159 = smul.addr %s158, 4
        %s160 = scalar_lea.vmem %s0, %s159
        %p161 = pneg %p35
        %p162 = pneg %p32
        %p163 = pneg %p56
        %p164 = pneg %p53
        %p165 = pneg %p77
        %p166 = pneg %p74
        %p167 = pneg %p103
        %p168 = pneg %p100
        %s169 = sand.u32 %s90, 1
        %s170 = sand.u32 %s90, 1
        %s171 = smul.addr %s170, 128
        %s172 = scalar_lea.vmem [#allocation2], %s171
        %s173 = smul.u32 32, %s14
        %s174 = ssub.s32 196, %s173
        %p175 = scmp.lt.s32.totalorder %s174, 32
        %s176 = scalar_select %p175, %s174, 32
        %s177 = smul.u32 64, %s176
        %p178 = scmp.lt.s32.totalorder %s173, 195
        %s179 = scalar_select %p178, %s173, 195
        %s180 = smul.addr %s179, 4
        %s181 = scalar_lea.vmem %s0, %s180
        %s182 = smul.u32 32, %s14
        %s183 = ssub.s32 196, %s182
        %p184 = scmp.lt.s32.totalorder %s183, 32
        %s185 = scalar_select %p184, %s183, 32
        %s186 = smul.u32 64, %s185
        %s187 = smul.u32 32, %s14
        %s188 = ssub.s32 196, %s187
        %p189 = scmp.lt.s32.totalorder %s188, 32
        %s190 = scalar_select %p189, %s188, 32
        %s191 = smul.u32 64, %s190
        %v193 = vld [vmem:[%s181] sm:$0xf]
        %v194 = vld [vmem:[%s181 + $0x4] sm:$0xf]
        %v195 = vld [vmem:[%s181 + $0x8] sm:$0xf]
        %v196 = vld [vmem:[%s181 + $0xc] sm:$0xf]
        %v197 = vld [vmem:[%s181 + $0x10] sm:$0xf]
        %v198 = vld [vmem:[%s181 + $0x14] sm:$0xf]
        %v199 = vld [vmem:[%s181 + $0x18] sm:$0xf]
        %v200 = vld [vmem:[%s181 + $0x1c] sm:$0xf]
        %v201 = vld [vmem:[%s181 + $0x20] sm:$0xf]
        %v202 = vld [vmem:[%s181 + $0x24] sm:$0xf]
        %v203 = vld [vmem:[%s181 + $0x28] sm:$0xf]
        %v204 = vld [vmem:[%s181 + $0x2c] sm:$0xf]
        %v205 = vld [vmem:[%s181 + $0x30] sm:$0xf]
        %v206 = vld [vmem:[%s181 + $0x34] sm:$0xf]
        %v207 = vld [vmem:[%s181 + $0x38] sm:$0xf]
        %v208 = vld [vmem:[%s181 + $0x3c] sm:$0xf]
        %v209 = vld [vmem:[%s181 + $0x40] sm:$0xf]
        %v210 = vld [vmem:[%s181 + $0x44] sm:$0xf]
        %v211 = vld [vmem:[%s181 + $0x48] sm:$0xf]
        %v212 = vld [vmem:[%s181 + $0x4c] sm:$0xf]
        %v213 = vld [vmem:[%s181 + $0x50] sm:$0xf]
        %v214 = vld [vmem:[%s181 + $0x54] sm:$0xf]
        %v215 = vld [vmem:[%s181 + $0x58] sm:$0xf]
        %v216 = vld [vmem:[%s181 + $0x5c] sm:$0xf]
        %v217 = vld [vmem:[%s181 + $0x60] sm:$0xf]
        %v218 = vld [vmem:[%s181 + $0x64] sm:$0xf]
        %v219 = vld [vmem:[%s181 + $0x68] sm:$0xf]
        %v220 = vld [vmem:[%s181 + $0x6c] sm:$0xf]
        %v221 = vld [vmem:[%s181 + $0x70] sm:$0xf]
        %v222 = vld [vmem:[%s181 + $0x74] sm:$0xf]
        %v223 = vld [vmem:[%s181 + $0x78] sm:$0xf]
        %v224 = vld [vmem:[%s181 + $0x7c] sm:$0xf]
        %v225 = vld [vmem:[%s1] sm:$0xf]
        %v226 = vld [vmem:[%s1 + $0x4] sm:$0xf]
        %v227 = vld [vmem:[%s1 + $0x8] sm:$0xf]
        %v228 = vld [vmem:[%s1 + $0xc] sm:$0xf]
        %v229 = vld [vmem:[%s1 + $0x10] sm:$0xf]
        %v230 = vld [vmem:[%s1 + $0x14] sm:$0xf]
        %v231 = vld [vmem:[%s1 + $0x18] sm:$0xf]
        %v232 = vld [vmem:[%s1 + $0x1c] sm:$0xf]
        %v233 = vld [vmem:[%s2] sm:$0x1]
        %v235 = vlaneseq
        %v236 = vshrl.u32 %v235, 7
        %v237 = vsub.s32 0, %v236
        %v238 = vrot.slane %v233, %v237
        %v272 = vunpack.c.l.b16 %v193
        %v273 = vunpack.c.l.b16 %v194
        %v274 = vunpack.c.l.b16 %v195
        %v275 = vunpack.c.l.b16 %v196
        %v276 = vunpack.c.l.b16 %v197
        %v277 = vunpack.c.l.b16 %v198
        %v278 = vunpack.c.l.b16 %v199
        %v279 = vunpack.c.l.b16 %v200
        %v280 = vunpack.c.l.b16 %v201
        %v281 = vunpack.c.l.b16 %v202
        %v282 = vunpack.c.l.b16 %v203
        %v283 = vunpack.c.l.b16 %v204
        %v284 = vunpack.c.l.b16 %v205
        %v285 = vunpack.c.l.b16 %v206
        %v286 = vunpack.c.l.b16 %v207
        %v287 = vunpack.c.l.b16 %v208
        %v288 = vunpack.c.l.b16 %v209
        %v289 = vunpack.c.l.b16 %v210
        %v290 = vunpack.c.l.b16 %v211
        %v291 = vunpack.c.l.b16 %v212
        %v292 = vunpack.c.l.b16 %v213
        %v293 = vunpack.c.l.b16 %v214
        %v294 = vunpack.c.l.b16 %v215
        %v295 = vunpack.c.l.b16 %v216
        %v296 = vunpack.c.l.b16 %v217
        %v297 = vunpack.c.l.b16 %v218
        %v298 = vunpack.c.l.b16 %v219
        %v299 = vunpack.c.l.b16 %v220
        %v300 = vunpack.c.l.b16 %v221
        %v301 = vunpack.c.l.b16 %v222
        %v302 = vunpack.c.l.b16 %v223
        %v303 = vunpack.c.l.b16 %v224
        %v304 = vpack.c.b16 %v273, %v272
        %v305 = vpack.c.b16 %v275, %v274
        %v306 = vpack.c.b16 %v277, %v276
        %v307 = vpack.c.b16 %v279, %v278
        %v308 = vpack.c.b16 %v281, %v280
        %v309 = vpack.c.b16 %v283, %v282
        %v310 = vpack.c.b16 %v285, %v284
        %v311 = vpack.c.b16 %v287, %v286
        %v312 = vpack.c.b16 %v289, %v288
        %v313 = vpack.c.b16 %v291, %v290
        %v314 = vpack.c.b16 %v293, %v292
        %v315 = vpack.c.b16 %v295, %v294
        %v316 = vpack.c.b16 %v297, %v296
        %v317 = vpack.c.b16 %v299, %v298
        %v318 = vpack.c.b16 %v301, %v300
        %v319 = vpack.c.b16 %v303, %v302
        %v328 = vunpack.c.l.b16 %v225
        %v329 = vunpack.c.l.b16 %v226
        %v330 = vunpack.c.l.b16 %v227
        %v331 = vunpack.c.l.b16 %v228
        %v332 = vunpack.c.l.b16 %v229
        %v333 = vunpack.c.l.b16 %v230
        %v334 = vunpack.c.l.b16 %v231
        %v335 = vunpack.c.l.b16 %v232
        %v336 = vpack.c.b16 %v329, %v328
        %v337 = vpack.c.b16 %v331, %v330
        %v338 = vpack.c.b16 %v333, %v332
        %v339 = vpack.c.b16 %v335, %v334
        %vm344 = vcmask 523264
        %v346 = vsel %vm344, %v304, 0
        %v349 = vsel %vm344, %v305, 0
        %v352 = vsel %vm344, %v306, 0
        %v355 = vsel %vm344, %v307, 0
        %v358 = vsel %vm344, %v308, 0
        %v361 = vsel %vm344, %v309, 0
        %v364 = vsel %vm344, %v310, 0
        %v367 = vsel %vm344, %v311, 0
        %v370 = vsel %vm344, %v312, 0
        %v373 = vsel %vm344, %v313, 0
        %v376 = vsel %vm344, %v314, 0
        %v379 = vsel %vm344, %v315, 0
        %v382 = vsel %vm344, %v316, 0
        %v385 = vsel %vm344, %v317, 0
        %v388 = vsel %vm344, %v318, 0
        %v391 = vsel %vm344, %v319, 0
        %393 = vmatprep.subr.bf16.mxu0 0
        %394 = vmatpush1.bf16.msra.mxu0 %v336
        %395 = vmatprep.subr.bf16.mxu0 0
        %396 = vmatpush1.bf16.msra.mxu0 %v337
        %397 = vmatprep.subr.bf16.mxu0 0
        %398 = vmatpush1.bf16.msra.mxu0 %v338
        %399 = vmatprep.subr.bf16.mxu0 0
        %400 = vmatpush1.bf16.msra.mxu0 %v339
        %401 = vmatprep.subr.bf16.mxu0 0
        %402 = vmatpush1.bf16.msra.mxu0 0
        %403 = vmatprep.subr.bf16.mxu0 0
        %404 = vmatpush1.bf16.msra.mxu0 0
        %405 = vmatprep.subr.bf16.mxu0 0
        %406 = vmatpush1.bf16.msra.mxu0 0
        %407 = vmatprep.subr.bf16.mxu0 0
        %408 = vmatpush1.bf16.msra.mxu0 0
        %409 = vmatprep.subr.bf16.mxu0 0
        %410 = vmatpush1.bf16.msra.mxu0 0
        %411 = vmatprep.subr.bf16.mxu0 0
        %412 = vmatpush1.bf16.msra.mxu0 0
        %413 = vmatprep.subr.bf16.mxu0 0
        %414 = vmatpush1.bf16.msra.mxu0 0
        %415 = vmatprep.subr.bf16.mxu0 0
        %416 = vmatpush1.bf16.msra.mxu0 0
        %417 = vmatprep.subr.bf16.mxu0 0
        %418 = vmatpush1.bf16.msra.mxu0 0
        %419 = vmatprep.subr.bf16.mxu0 0
        %420 = vmatpush1.bf16.msra.mxu0 0
        %421 = vmatprep.subr.bf16.mxu0 0
        %422 = vmatpush1.bf16.msra.mxu0 0
        %423 = vmatprep.subr.bf16.mxu0 0
        %424 = vmatpush1.bf16.msra.mxu0 0
        %425 = vmatprep.mubr.bf16.mxu0 0
        %426 = vmatmul.mubr.bf16.gmra.mrb[0].mxu0 %v346
        %v427 = vpop.f32.mrb[0].mxu0
        %v428 = vadd.f32 %v238, %v427
        %v429 = vpop.f32.mrb[0].mxu0
        %v430 = vpop.f32.mrb[0].mxu0
        %v431 = vadd.f32 %v238, %v430
        %v432 = vpop.f32.mrb[0].mxu0
        %433 = vmatprep.mubr.bf16.mxu0 0
        %434 = vmatmul.mubr.bf16.gmra.mrb[0].mxu0 %v349
        %v435 = vpop.f32.mrb[0].mxu0
        %v436 = vadd.f32 %v238, %v435
        %v437 = vpop.f32.mrb[0].mxu0
        %v438 = vpop.f32.mrb[0].mxu0
        %v439 = vadd.f32 %v238, %v438
        %v440 = vpop.f32.mrb[0].mxu0
        %441 = vmatprep.mubr.bf16.mxu0 0
        %442 = vmatmul.mubr.bf16.gmra.mrb[0].mxu0 %v352
        %v443 = vpop.f32.mrb[0].mxu0
        %v444 = vadd.f32 %v238, %v443
        %v445 = vpop.f32.mrb[0].mxu0
        %v446 = vpop.f32.mrb[0].mxu0
        %v447 = vadd.f32 %v238, %v446
        %v448 = vpop.f32.mrb[0].mxu0
        %449 = vmatprep.mubr.bf16.mxu0 0
        %450 = vmatmul.mubr.bf16.gmra.mrb[0].mxu0 %v355
        %v451 = vpop.f32.mrb[0].mxu0
        %v452 = vadd.f32 %v238, %v451
        %v453 = vpop.f32.mrb[0].mxu0
        %v454 = vpop.f32.mrb[0].mxu0
        %v455 = vadd.f32 %v238, %v454
        %v456 = vpop.f32.mrb[0].mxu0
        %457 = vmatprep.mubr.bf16.mxu0 0
        %458 = vmatmul.mubr.bf16.gmra.mrb[0].mxu0 %v358
        %v459 = vpop.f32.mrb[0].mxu0
        %v460 = vadd.f32 %v238, %v459
        %v461 = vpop.f32.mrb[0].mxu0
        %v462 = vpop.f32.mrb[0].mxu0
        %v463 = vadd.f32 %v238, %v462
        %v464 = vpop.f32.mrb[0].mxu0
        %465 = vmatprep.mubr.bf16.mxu0 0
        %466 = vmatmul.mubr.bf16.gmra.mrb[0].mxu0 %v361
        %v467 = vpop.f32.mrb[0].mxu0
        %v468 = vadd.f32 %v238, %v467
        %v469 = vpop.f32.mrb[0].mxu0
        %v470 = vpop.f32.mrb[0].mxu0
        %v471 = vadd.f32 %v238, %v470
        %v472 = vpop.f32.mrb[0].mxu0
        %473 = vmatprep.mubr.bf16.mxu0 0
        %474 = vmatmul.mubr.bf16.gmra.mrb[0].mxu0 %v364
        %v475 = vpop.f32.mrb[0].mxu0
        %v476 = vadd.f32 %v238, %v475
        %v477 = vpop.f32.mrb[0].mxu0
        %v478 = vpop.f32.mrb[0].mxu0
        %v479 = vadd.f32 %v238, %v478
        %v480 = vpop.f32.mrb[0].mxu0
        %481 = vmatprep.mubr.bf16.mxu0 0
        %482 = vmatmul.mubr.bf16.gmra.mrb[0].mxu0 %v367
        %v483 = vpop.f32.mrb[0].mxu0
        %v484 = vadd.f32 %v238, %v483
        %v485 = vpop.f32.mrb[0].mxu0
        %v486 = vpop.f32.mrb[0].mxu0
        %v487 = vadd.f32 %v238, %v486
        %v488 = vpop.f32.mrb[0].mxu0
        %489 = vmatprep.mubr.bf16.mxu0 0
        %490 = vmatmul.mubr.bf16.gmra.mrb[0].mxu0 %v370
        %v491 = vpop.f32.mrb[0].mxu0
        %v492 = vadd.f32 %v238, %v491
        %v493 = vpop.f32.mrb[0].mxu0
        %v494 = vpop.f32.mrb[0].mxu0
        %v495 = vadd.f32 %v238, %v494
        %v496 = vpop.f32.mrb[0].mxu0
        %497 = vmatprep.mubr.bf16.mxu0 0
        %498 = vmatmul.mubr.bf16.gmra.mrb[0].mxu0 %v373
        %v499 = vpop.f32.mrb[0].mxu0
        %v500 = vadd.f32 %v238, %v499
        %v501 = vpop.f32.mrb[0].mxu0
        %v502 = vpop.f32.mrb[0].mxu0
        %v503 = vadd.f32 %v238, %v502
        %v504 = vpop.f32.mrb[0].mxu0
        %505 = vmatprep.mubr.bf16.mxu0 0
        %506 = vmatmul.mubr.bf16.gmra.mrb[0].mxu0 %v376
        %v507 = vpop.f32.mrb[0].mxu0
        %v508 = vadd.f32 %v238, %v507
        %v509 = vpop.f32.mrb[0].mxu0
        %v510 = vpop.f32.mrb[0].mxu0
        %v511 = vadd.f32 %v238, %v510
        %v512 = vpop.f32.mrb[0].mxu0
        %513 = vmatprep.mubr.bf16.mxu0 0
        %514 = vmatmul.mubr.bf16.gmra.mrb[0].mxu0 %v379
        %v515 = vpop.f32.mrb[0].mxu0
        %v516 = vadd.f32 %v238, %v515
        %v517 = vpop.f32.mrb[0].mxu0
        %v518 = vpop.f32.mrb[0].mxu0
        %v519 = vadd.f32 %v238, %v518
        %v520 = vpop.f32.mrb[0].mxu0
        %521 = vmatprep.mubr.bf16.mxu0 0
        %522 = vmatmul.mubr.bf16.gmra.mrb[0].mxu0 %v382
        %v523 = vpop.f32.mrb[0].mxu0
        %v524 = vadd.f32 %v238, %v523
        %v525 = vpop.f32.mrb[0].mxu0
        %v526 = vpop.f32.mrb[0].mxu0
        %v527 = vadd.f32 %v238, %v526
        %v528 = vpop.f32.mrb[0].mxu0
        %529 = vmatprep.mubr.bf16.mxu0 0
        %530 = vmatmul.mubr.bf16.gmra.mrb[0].mxu0 %v385
        %v531 = vpop.f32.mrb[0].mxu0
        %v532 = vadd.f32 %v238, %v531
        %v533 = vpop.f32.mrb[0].mxu0
        %v534 = vpop.f32.mrb[0].mxu0
        %v535 = vadd.f32 %v238, %v534
        %v536 = vpop.f32.mrb[0].mxu0
        %537 = vmatprep.mubr.bf16.mxu0 0
        %538 = vmatmul.mubr.bf16.gmra.mrb[0].mxu0 %v388
        %v539 = vpop.f32.mrb[0].mxu0
        %v540 = vadd.f32 %v238, %v539
        %v541 = vpop.f32.mrb[0].mxu0
        %v542 = vpop.f32.mrb[0].mxu0
        %v543 = vadd.f32 %v238, %v542
        %v544 = vpop.f32.mrb[0].mxu0
        %545 = vmatprep.mubr.bf16.mxu0 0
        %546 = vmatmul.mubr.bf16.gmra.mrb[0].mxu0 %v391
        %v547 = vpop.f32.mrb[0].mxu0
        %v548 = vadd.f32 %v238, %v547
        %v549 = vpop.f32.mrb[0].mxu0
        %v550 = vpop.f32.mrb[0].mxu0
        %v551 = vadd.f32 %v238, %v550
        %v552 = vpop.f32.mrb[0].mxu0
        %553 = vdwg.mxu0
        %v554 = vmax.f32 %v428, 0.0
        %v555 = vmax.f32 %v431, 0.0
        %v556 = vmax.f32 %v436, 0.0
        %v557 = vmax.f32 %v439, 0.0
        %v558 = vmax.f32 %v444, 0.0
        %v559 = vmax.f32 %v447, 0.0
        %v560 = vmax.f32 %v452, 0.0
        %v561 = vmax.f32 %v455, 0.0
        %v562 = vmax.f32 %v460, 0.0
        %v563 = vmax.f32 %v463, 0.0
        %v564 = vmax.f32 %v468, 0.0
        %v565 = vmax.f32 %v471, 0.0
        %v566 = vmax.f32 %v476, 0.0
        %v567 = vmax.f32 %v479, 0.0
        %v568 = vmax.f32 %v484, 0.0
        %v569 = vmax.f32 %v487, 0.0
        %v570 = vmax.f32 %v492, 0.0
        %v571 = vmax.f32 %v495, 0.0
        %v572 = vmax.f32 %v500, 0.0
        %v573 = vmax.f32 %v503, 0.0
        %v574 = vmax.f32 %v508, 0.0
        %v575 = vmax.f32 %v511, 0.0
        %v576 = vmax.f32 %v516, 0.0
        %v577 = vmax.f32 %v519, 0.0
        %v578 = vmax.f32 %v524, 0.0
        %v579 = vmax.f32 %v527, 0.0
        %v580 = vmax.f32 %v532, 0.0
        %v581 = vmax.f32 %v535, 0.0
        %v582 = vmax.f32 %v540, 0.0
        %v583 = vmax.f32 %v543, 0.0
        %v584 = vmax.f32 %v548, 0.0
        %v585 = vmax.f32 %v551, 0.0
        %v586 = vpack.c.bf16 %v555, %v554
        %v587 = vpack.c.bf16 %v557, %v556
        %v588 = vpack.c.bf16 %v559, %v558
        %v589 = vpack.c.bf16 %v561, %v560
        %v590 = vpack.c.bf16 %v563, %v562
        %v591 = vpack.c.bf16 %v565, %v564
        %v592 = vpack.c.bf16 %v567, %v566
        %v593 = vpack.c.bf16 %v569, %v568
        %v594 = vpack.c.bf16 %v571, %v570
        %v595 = vpack.c.bf16 %v573, %v572
        %v596 = vpack.c.bf16 %v575, %v574
        %v597 = vpack.c.bf16 %v577, %v576
        %v598 = vpack.c.bf16 %v579, %v578
        %v599 = vpack.c.bf16 %v581, %v580
        %v600 = vpack.c.bf16 %v583, %v582
        %v601 = vpack.c.bf16 %v585, %v584
        %v618 = vunpack.c.l.b16 %v586
        %v619 = vunpack.c.h.b16 %v586
        %v620 = vunpack.c.l.b16 %v587
        %v621 = vunpack.c.h.b16 %v587
        %v622 = vunpack.c.l.b16 %v588
        %v623 = vunpack.c.h.b16 %v588
        %v624 = vunpack.c.l.b16 %v589
        %v625 = vunpack.c.h.b16 %v589
        %v626 = vunpack.c.l.b16 %v590
        %v627 = vunpack.c.h.b16 %v590
        %v628 = vunpack.c.l.b16 %v591
        %v629 = vunpack.c.h.b16 %v591
        %v630 = vunpack.c.l.b16 %v592
        %v631 = vunpack.c.h.b16 %v592
        %v632 = vunpack.c.l.b16 %v593
        %v633 = vunpack.c.h.b16 %v593
        %v634 = vunpack.c.l.b16 %v594
        %v635 = vunpack.c.h.b16 %v594
        %v636 = vunpack.c.l.b16 %v595
        %v637 = vunpack.c.h.b16 %v595
        %v638 = vunpack.c.l.b16 %v596
        %v639 = vunpack.c.h.b16 %v596
        %v640 = vunpack.c.l.b16 %v597
        %v641 = vunpack.c.h.b16 %v597
        %v642 = vunpack.c.l.b16 %v598
        %v643 = vunpack.c.h.b16 %v598
        %v644 = vunpack.c.l.b16 %v599
        %v645 = vunpack.c.h.b16 %v599
        %v646 = vunpack.c.l.b16 %v600
        %v647 = vunpack.c.h.b16 %v600
        %v648 = vunpack.c.l.b16 %v601
        %v649 = vunpack.c.h.b16 %v601
        %v650 = vpack.c.b16 %v618, %v618
        %v651 = vpack.c.b16 %v619, %v619
        %v652 = vpack.c.b16 %v620, %v620
        %v653 = vpack.c.b16 %v621, %v621
        %v654 = vpack.c.b16 %v622, %v622
        %v655 = vpack.c.b16 %v623, %v623
        %v656 = vpack.c.b16 %v624, %v624
        %v657 = vpack.c.b16 %v625, %v625
        %v658 = vpack.c.b16 %v626, %v626
        %v659 = vpack.c.b16 %v627, %v627
        %v660 = vpack.c.b16 %v628, %v628
        %v661 = vpack.c.b16 %v629, %v629
        %v662 = vpack.c.b16 %v630, %v630
        %v663 = vpack.c.b16 %v631, %v631
        %v664 = vpack.c.b16 %v632, %v632
        %v665 = vpack.c.b16 %v633, %v633
        %v666 = vpack.c.b16 %v634, %v634
        %v667 = vpack.c.b16 %v635, %v635
        %v668 = vpack.c.b16 %v636, %v636
        %v669 = vpack.c.b16 %v637, %v637
        %v670 = vpack.c.b16 %v638, %v638
        %v671 = vpack.c.b16 %v639, %v639
        %v672 = vpack.c.b16 %v640, %v640
        %v673 = vpack.c.b16 %v641, %v641
        %v674 = vpack.c.b16 %v642, %v642
        %v675 = vpack.c.b16 %v643, %v643
        %v676 = vpack.c.b16 %v644, %v644
        %v677 = vpack.c.b16 %v645, %v645
        %v678 = vpack.c.b16 %v646, %v646
        %v679 = vpack.c.b16 %v647, %v647
        %v680 = vpack.c.b16 %v648, %v648
        %v681 = vpack.c.b16 %v649, %v649
        %vm714 = vcmask 257024
        %715 = vst.msk [vmem:[%s172] sm:$0xf] %vm714, %v650
        %716 = vst.msk [vmem:[%s172 + $0x4] sm:$0xf] %vm714, %v651
        %717 = vst.msk [vmem:[%s172 + $0x8] sm:$0xf] %vm714, %v652
        %718 = vst.msk [vmem:[%s172 + $0xc] sm:$0xf] %vm714, %v653
        %719 = vst.msk [vmem:[%s172 + $0x10] sm:$0xf] %vm714, %v654
        %720 = vst.msk [vmem:[%s172 + $0x14] sm:$0xf] %vm714, %v655
        %721 = vst.msk [vmem:[%s172 + $0x18] sm:$0xf] %vm714, %v656
        %722 = vst.msk [vmem:[%s172 + $0x1c] sm:$0xf] %vm714, %v657
        %723 = vst.msk [vmem:[%s172 + $0x20] sm:$0xf] %vm714, %v658
        %724 = vst.msk [vmem:[%s172 + $0x24] sm:$0xf] %vm714, %v659
        %725 = vst.msk [vmem:[%s172 + $0x28] sm:$0xf] %vm714, %v660
        %726 = vst.msk [vmem:[%s172 + $0x2c] sm:$0xf] %vm714, %v661
        %727 = vst.msk [vmem:[%s172 + $0x30] sm:$0xf] %vm714, %v662
        %728 = vst.msk [vmem:[%s172 + $0x34] sm:$0xf] %vm714, %v663
        %729 = vst.msk [vmem:[%s172 + $0x38] sm:$0xf] %vm714, %v664
        %730 = vst.msk [vmem:[%s172 + $0x3c] sm:$0xf] %vm714, %v665
        %731 = vst.msk [vmem:[%s172 + $0x40] sm:$0xf] %vm714, %v666
        %732 = vst.msk [vmem:[%s172 + $0x44] sm:$0xf] %vm714, %v667
        %733 = vst.msk [vmem:[%s172 + $0x48] sm:$0xf] %vm714, %v668
        %734 = vst.msk [vmem:[%s172 + $0x4c] sm:$0xf] %vm714, %v669
        %735 = vst.msk [vmem:[%s172 + $0x50] sm:$0xf] %vm714, %v670
        %736 = vst.msk [vmem:[%s172 + $0x54] sm:$0xf] %vm714, %v671
        %737 = vst.msk [vmem:[%s172 + $0x58] sm:$0xf] %vm714, %v672
        %738 = vst.msk [vmem:[%s172 + $0x5c] sm:$0xf] %vm714, %v673
        %739 = vst.msk [vmem:[%s172 + $0x60] sm:$0xf] %vm714, %v674
        %740 = vst.msk [vmem:[%s172 + $0x64] sm:$0xf] %vm714, %v675
        %741 = vst.msk [vmem:[%s172 + $0x68] sm:$0xf] %vm714, %v676
        %742 = vst.msk [vmem:[%s172 + $0x6c] sm:$0xf] %vm714, %v677
        %743 = vst.msk [vmem:[%s172 + $0x70] sm:$0xf] %vm714, %v678
        %744 = vst.msk [vmem:[%s172 + $0x74] sm:$0xf] %vm714, %v679
        %745 = vst.msk [vmem:[%s172 + $0x78] sm:$0xf] %vm714, %v680
        %746 = vst.msk [vmem:[%s172 + $0x7c] sm:$0xf] %vm714, %v681
        %s747 = sand.u32 %s90, 1
        %s748 = sand.u32 %s90, 1
        %s749 = smul.addr %s748, 128
        %s750 = scalar_lea.vmem [#allocation2], %s749
        // Predicated region
        $region33: #{soft_q_twin_forward.3} parent=31 // pred_check
          %p751 = pneg %p100
        $region34: #{soft_q_twin_forward.3} parent=31 // pred_check_branch
          %753 = sbr.rel (%p751) target = $region36
        $region35: #{soft_q_twin_forward.3} parent=31 // pred_region
          %s754 = smul.u32 32, %s14
          %s755 = ssub.s32 196, %s754
          %p756 = scmp.lt.s32.totalorder %s755, 32
          %s757 = scalar_select %p756, %s755, 32
          %s758 = smul.u32 64, %s757
          %p759 = scmp.ne.s32.totalorder 0, %s758
          %s760 = smul.addr %s754, 4
          %s761 = scalar_lea.vmem %s3, %s760
          // Predicated region
          $region37: #{soft_q_twin_forward.3} parent=35 // pred_check
            %p762 = pneg %p759
          $region38: #{soft_q_twin_forward.3} parent=35 // pred_check_branch
            %764 = sbr.rel (%p762) target = $region40
          $region39: #{soft_q_twin_forward.3} parent=35 // pred_region
            // Predicated region
            $region41: #{soft_q_twin_forward.3} parent=39 // pred_check
              _
            $region42: #{soft_q_twin_forward.3} parent=39 // pred_check_branch
              %766 = sbr.rel target = $region44
            $region43: #{soft_q_twin_forward.3} parent=39 // pred_region
              // Predicated region
              $region63: #{soft_q_twin_forward.3} parent=43 // pred_check
                _
              $region64: #{soft_q_twin_forward.3} parent=43 // pred_check_branch
                %877 = sbr.rel (0) target = $region66
              $region65: #{soft_q_twin_forward.3} parent=43 // pred_region
                %s879 = sshrl.u32 %s757, 5
                // While loop
                $region67: #{soft_q_twin_forward.3} parent=65 // loop_pre_header
                  _
                $region68: #{soft_q_twin_forward.3} parent=65 // loop_header
                  %s881 = sphi 0, %s883
                  %p882 = scmp.ge.s32.totalorder %s881, %s879
                  %s886 = sphi 0, %s955
                  %s887 = sphi %s750, %s958
                  %s888 = sphi %s761, %s959
                $region69: #{soft_q_twin_forward.3} parent=65 // loop_header_branch
                  %885 = sbr.rel (%p882) target = $region73
                $region70: #{soft_q_twin_forward.3} parent=65 // loop_body
                  %v889 = vld [vmem:[%s887] sm:$0xf]
                  %890 = vst [vmem:[%s888] sm:$0xf] %v889
                  %v891 = vld [vmem:[%s887 + $0x4] sm:$0xf]
                  %892 = vst [vmem:[%s888 + $0x4] sm:$0xf] %v891
                  %v893 = vld [vmem:[%s887 + $0x8] sm:$0xf]
                  %894 = vst [vmem:[%s888 + $0x8] sm:$0xf] %v893
                  %v895 = vld [vmem:[%s887 + $0xc] sm:$0xf]
                  %896 = vst [vmem:[%s888 + $0xc] sm:$0xf] %v895
                  %v897 = vld [vmem:[%s887 + $0x10] sm:$0xf]
                  %898 = vst [vmem:[%s888 + $0x10] sm:$0xf] %v897
                  %v899 = vld [vmem:[%s887 + $0x14] sm:$0xf]
                  %900 = vst [vmem:[%s888 + $0x14] sm:$0xf] %v899
                  %v901 = vld [vmem:[%s887 + $0x18] sm:$0xf]
                  %902 = vst [vmem:[%s888 + $0x18] sm:$0xf] %v901
                  %v903 = vld [vmem:[%s887 + $0x1c] sm:$0xf]
                  %904 = vst [vmem:[%s888 + $0x1c] sm:$0xf] %v903
                  %v905 = vld [vmem:[%s887 + $0x20] sm:$0xf]
                  %906 = vst [vmem:[%s888 + $0x20] sm:$0xf] %v905
                  %v907 = vld [vmem:[%s887 + $0x24] sm:$0xf]
                  %908 = vst [vmem:[%s888 + $0x24] sm:$0xf] %v907
                  %v909 = vld [vmem:[%s887 + $0x28] sm:$0xf]
                  %910 = vst [vmem:[%s888 + $0x28] sm:$0xf] %v909
                  %v911 = vld [vmem:[%s887 + $0x2c] sm:$0xf]
                  %912 = vst [vmem:[%s888 + $0x2c] sm:$0xf] %v911
                  %v913 = vld [vmem:[%s887 + $0x30] sm:$0xf]
                  %914 = vst [vmem:[%s888 + $0x30] sm:$0xf] %v913
                  %v915 = vld [vmem:[%s887 + $0x34] sm:$0xf]
                  %916 = vst [vmem:[%s888 + $0x34] sm:$0xf] %v915
                  %v917 = vld [vmem:[%s887 + $0x38] sm:$0xf]
                  %918 = vst [vmem:[%s888 + $0x38] sm:$0xf] %v917
                  %v919 = vld [vmem:[%s887 + $0x3c] sm:$0xf]
                  %920 = vst [vmem:[%s888 + $0x3c] sm:$0xf] %v919
                  %v921 = vld [vmem:[%s887 + $0x40] sm:$0xf]
                  %922 = vst [vmem:[%s888 + $0x40] sm:$0xf] %v921
                  %v923 = vld [vmem:[%s887 + $0x44] sm:$0xf]
                  %924 = vst [vmem:[%s888 + $0x44] sm:$0xf] %v923
                  %v925 = vld [vmem:[%s887 + $0x48] sm:$0xf]
                  %926 = vst [vmem:[%s888 + $0x48] sm:$0xf] %v925
                  %v927 = vld [vmem:[%s887 + $0x4c] sm:$0xf]
                  %928 = vst [vmem:[%s888 + $0x4c] sm:$0xf] %v927
                  %v929 = vld [vmem:[%s887 + $0x50] sm:$0xf]
                  %930 = vst [vmem:[%s888 + $0x50] sm:$0xf] %v929
                  %v931 = vld [vmem:[%s887 + $0x54] sm:$0xf]
                  %932 = vst [vmem:[%s888 + $0x54] sm:$0xf] %v931
                  %v933 = vld [vmem:[%s887 + $0x58] sm:$0xf]
                  %934 = vst [vmem:[%s888 + $0x58] sm:$0xf] %v933
                  %v935 = vld [vmem:[%s887 + $0x5c] sm:$0xf]
                  %936 = vst [vmem:[%s888 + $0x5c] sm:$0xf] %v935
                  %v937 = vld [vmem:[%s887 + $0x60] sm:$0xf]
                  %938 = vst [vmem:[%s888 + $0x60] sm:$0xf] %v937
                  %v939 = vld [vmem:[%s887 + $0x64] sm:$0xf]
                  %940 = vst [vmem:[%s888 + $0x64] sm:$0xf] %v939
                  %v941 = vld [vmem:[%s887 + $0x68] sm:$0xf]
                  %942 = vst [vmem:[%s888 + $0x68] sm:$0xf] %v941
                  %v943 = vld [vmem:[%s887 + $0x6c] sm:$0xf]
                  %944 = vst [vmem:[%s888 + $0x6c] sm:$0xf] %v943
                  %v945 = vld [vmem:[%s887 + $0x70] sm:$0xf]
                  %946 = vst [vmem:[%s888 + $0x70] sm:$0xf] %v945
                  %v947 = vld [vmem:[%s887 + $0x74] sm:$0xf]
                  %948 = vst [vmem:[%s888 + $0x74] sm:$0xf] %v947
                  %v949 = vld [vmem:[%s887 + $0x78] sm:$0xf]
                  %950 = vst [vmem:[%s888 + $0x78] sm:$0xf] %v949
                  %v951 = vld [vmem:[%s887 + $0x7c] sm:$0xf]
                  %952 = vst [vmem:[%s888 + $0x7c] sm:$0xf] %v951
                  %s953 = sadd.s32 1, %s886
                  %p954 = scmp.ge.s32.totalorder %s953, %s879
                  %s955 = scalar_select %p954, 0, %s953
                  %s956 = smul.u32 %s955, 128
                  %s957 = smul.u32 %s955, 128
                  %s958 = scalar_lea.vmem %s750, %s956 [#allocation2]
                  %s959 = scalar_lea.vmem %s761, %s957
                $region71: #{soft_q_twin_forward.3} parent=65 // loop_footer
                  %s883 = sadd.s32 %s881, 1
                $region72: #{soft_q_twin_forward.3} parent=65 // loop_footer_branch
                  %880 = sbr.rel target = $region68
                $region73: #{soft_q_twin_forward.3} parent=65 // loop_exit
                  _
                %s960 = sshrl.u32 %s757, 5
                %s961 = sand.u32 %s757, 31
                %s962 = smul.u32 %s960, 32
                %s963 = smul.u32 4, %s962
                %s964 = scalar_lea.vmem %s750, %s963 [#allocation2]
                %s965 = smul.u32 4, %s962
                %s966 = scalar_lea.vmem %s761, %s965
                // While loop
                $region74: #{soft_q_twin_forward.3} parent=65 // loop_pre_header
                  _
                $region75: #{soft_q_twin_forward.3} parent=65 // loop_header
                  %s968 = sphi 0, %s970
                  %p969 = scmp.ge.s32.totalorder %s968, %s961
                  %s973 = sphi 0, %s980
                  %s974 = sphi %s964, %s983
                  %s975 = sphi %s966, %s984
                $region76: #{soft_q_twin_forward.3} parent=65 // loop_header_branch
                  %972 = sbr.rel (%p969) target = $region80
                $region77: #{soft_q_twin_forward.3} parent=65 // loop_body
                  %v976 = vld [vmem:[%s974] sm:$0xf]
                  %977 = vst [vmem:[%s975] sm:$0xf] %v976
                  %s978 = sadd.s32 1, %s973
                  %p979 = scmp.ge.s32.totalorder %s978, %s961
                  %s980 = scalar_select %p979, 0, %s978
                  %s981 = smul.u32 %s980, 4
                  %s982 = smul.u32 %s980, 4
                  %s983 = scalar_lea.vmem %s964, %s981 [#allocation2]
                  %s984 = scalar_lea.vmem %s966, %s982
                $region78: #{soft_q_twin_forward.3} parent=65 // loop_footer
                  %s970 = sadd.s32 %s968, 1
                $region79: #{soft_q_twin_forward.3} parent=65 // loop_footer_branch
                  %967 = sbr.rel target = $region75
                $region80: #{soft_q_twin_forward.3} parent=65 // loop_exit
                  _
              $region66: #{soft_q_twin_forward.3} parent=43 // pred_fallthru
                _
            $region44: #{soft_q_twin_forward.3} parent=39 // pred_fallthru
              _
            // Predicated region
            $region45: #{soft_q_twin_forward.3} parent=39 // pred_check
              _
            $region46: #{soft_q_twin_forward.3} parent=39 // pred_check_branch
              %768 = sbr.rel (0) target = $region48
            $region47: #{soft_q_twin_forward.3} parent=39 // pred_region
              %s770 = sshrl.u32 %s757, 5
              // While loop
              $region49: #{soft_q_twin_forward.3} parent=47 // loop_pre_header
                _
              $region50: #{soft_q_twin_forward.3} parent=47 // loop_header
                %s772 = sphi 0, %s774
                %p773 = scmp.ge.s32.totalorder %s772, %s770
                %s777 = sphi 0, %s846
                %s778 = sphi %s750, %s849
                %s779 = sphi %s761, %s850
              $region51: #{soft_q_twin_forward.3} parent=47 // loop_header_branch
                %776 = sbr.rel (%p773) target = $region55
              $region52: #{soft_q_twin_forward.3} parent=47 // loop_body
                %v780 = vld [vmem:[%s778] sm:$0xf]
                %781 = vst [vmem:[%s779] sm:$0xf] %v780
                %v782 = vld [vmem:[%s778 + $0x4] sm:$0xf]
                %783 = vst [vmem:[%s779 + $0x4] sm:$0xf] %v782
                %v784 = vld [vmem:[%s778 + $0x8] sm:$0xf]
                %785 = vst [vmem:[%s779 + $0x8] sm:$0xf] %v784
                %v786 = vld [vmem:[%s778 + $0xc] sm:$0xf]
                %787 = vst [vmem:[%s779 + $0xc] sm:$0xf] %v786
                %v788 = vld [vmem:[%s778 + $0x10] sm:$0xf]
                %789 = vst [vmem:[%s779 + $0x10] sm:$0xf] %v788
                %v790 = vld [vmem:[%s778 + $0x14] sm:$0xf]
                %791 = vst [vmem:[%s779 + $0x14] sm:$0xf] %v790
                %v792 = vld [vmem:[%s778 + $0x18] sm:$0xf]
                %793 = vst [vmem:[%s779 + $0x18] sm:$0xf] %v792
                %v794 = vld [vmem:[%s778 + $0x1c] sm:$0xf]
                %795 = vst [vmem:[%s779 + $0x1c] sm:$0xf] %v794
                %v796 = vld [vmem:[%s778 + $0x20] sm:$0xf]
                %797 = vst [vmem:[%s779 + $0x20] sm:$0xf] %v796
                %v798 = vld [vmem:[%s778 + $0x24] sm:$0xf]
                %799 = vst [vmem:[%s779 + $0x24] sm:$0xf] %v798
                %v800 = vld [vmem:[%s778 + $0x28] sm:$0xf]
                %801 = vst [vmem:[%s779 + $0x28] sm:$0xf] %v800
                %v802 = vld [vmem:[%s778 + $0x2c] sm:$0xf]
                %803 = vst [vmem:[%s779 + $0x2c] sm:$0xf] %v802
                %v804 = vld [vmem:[%s778 + $0x30] sm:$0xf]
                %805 = vst [vmem:[%s779 + $0x30] sm:$0xf] %v804
                %v806 = vld [vmem:[%s778 + $0x34] sm:$0xf]
                %807 = vst [vmem:[%s779 + $0x34] sm:$0xf] %v806
                %v808 = vld [vmem:[%s778 + $0x38] sm:$0xf]
                %809 = vst [vmem:[%s779 + $0x38] sm:$0xf] %v808
                %v810 = vld [vmem:[%s778 + $0x3c] sm:$0xf]
                %811 = vst [vmem:[%s779 + $0x3c] sm:$0xf] %v810
                %v812 = vld [vmem:[%s778 + $0x40] sm:$0xf]
                %813 = vst [vmem:[%s779 + $0x40] sm:$0xf] %v812
                %v814 = vld [vmem:[%s778 + $0x44] sm:$0xf]
                %815 = vst [vmem:[%s779 + $0x44] sm:$0xf] %v814
                %v816 = vld [vmem:[%s778 + $0x48] sm:$0xf]
                %817 = vst [vmem:[%s779 + $0x48] sm:$0xf] %v816
                %v818 = vld [vmem:[%s778 + $0x4c] sm:$0xf]
                %819 = vst [vmem:[%s779 + $0x4c] sm:$0xf] %v818
                %v820 = vld [vmem:[%s778 + $0x50] sm:$0xf]
                %821 = vst [vmem:[%s779 + $0x50] sm:$0xf] %v820
                %v822 = vld [vmem:[%s778 + $0x54] sm:$0xf]
                %823 = vst [vmem:[%s779 + $0x54] sm:$0xf] %v822
                %v824 = vld [vmem:[%s778 + $0x58] sm:$0xf]
                %825 = vst [vmem:[%s779 + $0x58] sm:$0xf] %v824
                %v826 = vld [vmem:[%s778 + $0x5c] sm:$0xf]
                %827 = vst [vmem:[%s779 + $0x5c] sm:$0xf] %v826
                %v828 = vld [vmem:[%s778 + $0x60] sm:$0xf]
                %829 = vst [vmem:[%s779 + $0x60] sm:$0xf] %v828
                %v830 = vld [vmem:[%s778 + $0x64] sm:$0xf]
                %831 = vst [vmem:[%s779 + $0x64] sm:$0xf] %v830
                %v832 = vld [vmem:[%s778 + $0x68] sm:$0xf]
                %833 = vst [vmem:[%s779 + $0x68] sm:$0xf] %v832
                %v834 = vld [vmem:[%s778 + $0x6c] sm:$0xf]
                %835 = vst [vmem:[%s779 + $0x6c] sm:$0xf] %v834
                %v836 = vld [vmem:[%s778 + $0x70] sm:$0xf]
                %837 = vst [vmem:[%s779 + $0x70] sm:$0xf] %v836
                %v838 = vld [vmem:[%s778 + $0x74] sm:$0xf]
                %839 = vst [vmem:[%s779 + $0x74] sm:$0xf] %v838
                %v840 = vld [vmem:[%s778 + $0x78] sm:$0xf]
                %841 = vst [vmem:[%s779 + $0x78] sm:$0xf] %v840
                %v842 = vld [vmem:[%s778 + $0x7c] sm:$0xf]
                %843 = vst [vmem:[%s779 + $0x7c] sm:$0xf] %v842
                %s844 = sadd.s32 1, %s777
                %p845 = scmp.ge.s32.totalorder %s844, %s770
                %s846 = scalar_select %p845, 0, %s844
                %s847 = smul.u32 %s846, 128
                %s848 = smul.u32 %s846, 128
                %s849 = scalar_lea.vmem %s750, %s847 [#allocation2]
                %s850 = scalar_lea.vmem %s761, %s848
              $region53: #{soft_q_twin_forward.3} parent=47 // loop_footer
                %s774 = sadd.s32 %s772, 1
              $region54: #{soft_q_twin_forward.3} parent=47 // loop_footer_branch
                %771 = sbr.rel target = $region50
              $region55: #{soft_q_twin_forward.3} parent=47 // loop_exit
                _
              %s851 = sshrl.u32 %s757, 5
              %s852 = sand.u32 %s757, 31
              %s853 = smul.u32 %s851, 32
              %s854 = smul.u32 4, %s853
              %s855 = scalar_lea.vmem %s750, %s854 [#allocation2]
              %s856 = smul.u32 4, %s853
              %s857 = scalar_lea.vmem %s761, %s856
              // While loop
              $region56: #{soft_q_twin_forward.3} parent=47 // loop_pre_header
                _
              $region57: #{soft_q_twin_forward.3} parent=47 // loop_header
                %s859 = sphi 0, %s861
                %p860 = scmp.ge.s32.totalorder %s859, %s852
                %s864 = sphi 0, %s871
                %s865 = sphi %s855, %s874
                %s866 = sphi %s857, %s875
              $region58: #{soft_q_twin_forward.3} parent=47 // loop_header_branch
                %863 = sbr.rel (%p860) target = $region62
              $region59: #{soft_q_twin_forward.3} parent=47 // loop_body
                %v867 = vld [vmem:[%s865] sm:$0xf]
                %868 = vst [vmem:[%s866] sm:$0xf] %v867
                %s869 = sadd.s32 1, %s864
                %p870 = scmp.ge.s32.totalorder %s869, %s852
                %s871 = scalar_select %p870, 0, %s869
                %s872 = smul.u32 %s871, 4
                %s873 = smul.u32 %s871, 4
                %s874 = scalar_lea.vmem %s855, %s872 [#allocation2]
                %s875 = scalar_lea.vmem %s857, %s873
              $region60: #{soft_q_twin_forward.3} parent=47 // loop_footer
                %s861 = sadd.s32 %s859, 1
              $region61: #{soft_q_twin_forward.3} parent=47 // loop_footer_branch
                %858 = sbr.rel target = $region57
              $region62: #{soft_q_twin_forward.3} parent=47 // loop_exit
                _
            $region48: #{soft_q_twin_forward.3} parent=39 // pred_fallthru
              _
          $region40: #{soft_q_twin_forward.3} parent=35 // pred_fallthru
            _
          %985 = vnop
        $region36: #{soft_q_twin_forward.3} parent=31 // pred_fallthru
          _
      $region32: #{soft_q_twin_forward.3} parent=5 // pred_fallthru
        _
      %p986 = scmp.le.s32.totalorder 2, %s9
      // Predicated region
      $region81: #{soft_q_twin_forward.3} parent=5 // pred_check
        %p987 = pneg %p986
      $region82: #{soft_q_twin_forward.3} parent=5 // pred_check_branch
        %989 = sbr.rel (%p987) target = $region84
      $region83: #{soft_q_twin_forward.3} parent=5 // pred_region
        %s990 = ssub.s32 %s9, 2
        // Predicated region
        $region85: #{soft_q_twin_forward.3} parent=83 // pred_check
          %p991 = pneg %p106
        $region86: #{soft_q_twin_forward.3} parent=83 // pred_check_branch
          %993 = sbr.rel (%p991) target = $region88
        $region87: #{soft_q_twin_forward.3} parent=83 // pred_region
          %s994 = sand.u32 %s91, 1
          %s995 = sand.u32 %s91, 1
          %s996 = smul.addr %s995, 128
          %s997 = scalar_lea.vmem [#allocation2], %s996
        $region88: #{soft_q_twin_forward.3} parent=83 // pred_fallthru
          _
      $region84: #{soft_q_twin_forward.3} parent=5 // pred_fallthru
        _
    $region6: #{soft_q_twin_forward.3} parent=1 // loop_footer
      %s13 = sadd.s32 1, %s9
    $region7: #{soft_q_twin_forward.3} parent=1 // loop_footer_branch
      %8 = sbr.rel target = $region3
    $region8: #{soft_q_twin_forward.3} parent=1 // loop_exit
      _

// kernel: soft_q_twin_forward.4
$region0: #{soft_q_twin_forward.4}
  #allocation0 [shape = 'u32[]', space=smem, size = 0x4, offset = 0x4, fixed_abs, tag = 'smem constant byte address 0x4 - core index']
  #allocation1 [shape = 'u32[144,128]{1,0:T(1,128)}', space=vmem, size = 0x12000, scoped, tag = 'internal scratch']
  %s0 = inlined_call_operand.vmem [shape: bf16[338,512], index: 0, kind: input, shape index: {}]
  %s1 = inlined_call_operand.vmem [shape: bf16[512,64], index: 1, kind: input, shape index: {}]
  %s2 = inlined_call_operand.vmem [shape: f32[1,64], index: 2, kind: input, shape index: {}]
  %s3 = inlined_call_operand.vmem [shape: bf16[338,64], index: 3, kind: output, shape index: {}]
  %s4 = sld [smem:[#allocation0]]
  $region89: #{soft_q_twin_forward.4} parent=0
    _
  %s6 = ssub.s32 1, %s4
  %s7 = scalar_select 0, %s6, %s4
  $region1: #{soft_q_twin_forward.4} parent=0
    #allocation2 [shape = 'u8[90112]{0}', space=vmem, size = 0x16000, scoped, tag = 'output window, operand 0']
    loop: start=0, step=1, limit=4
    $region2: #{soft_q_twin_forward.4} parent=1 // loop_pre_header
      _
    $region3: #{soft_q_twin_forward.4} parent=1 // loop_header
      %s9 = sphi 0, %s13
      %p10 = scmp.ge.s32.totalorder %s9, 4
      %s19 = sphi 0, %s21
      %s22 = sphi 0, %s19
      %s23 = sphi 0, %s22
      %s39 = sphi 0, %s23
      %s43 = sphi 0, %s43
      %s45 = sphi 0, %s43
      %s46 = sphi 0, %s45
      %s60 = sphi 0, %s46
      %s64 = sphi 0, %s64
      %s66 = sphi 0, %s64
      %s67 = sphi 0, %s66
      %s81 = sphi 0, %s67
      %s87 = sphi 0, %s89
      %s90 = sphi 0, %s87
      %s91 = sphi 0, %s90
      %s107 = sphi 0, %s91
    $region4: #{soft_q_twin_forward.4} parent=1 // loop_header_branch
      %12 = sbr.rel (%p10) target = $region8
    $region5: #{soft_q_twin_forward.4} parent=1 // loop_body
      %s14 = ssub.s32 %s9, 1
      %s15 = ssub.s32 %s9, 2
      %s16 = sadd.s32 %s9, 1
      %s17 = ssub.s32 %s9, %s16
      %p18 = scmp.eq.s32.totalorder %s17, 0
      %s20 = sadd.s32 %s19, 1
      %s21 = scalar_select %p18, %s19, %s20
      %p24 = pneg %p18
      %p25 = scmp.eq.s32.totalorder %s9, 1
      %p26 = por %p24, %p25
      %p27 = scmp.ne.s32.totalorder %s19, %s22
      %p28 = scmp.eq.s32.totalorder %s9, 0
      %p29 = por %p27, %p28
      %p30 = scmp.ne.s32.totalorder %s19, %s22
      %p31 = scmp.eq.s32.totalorder %s14, 1
      %p32 = por %p30, %p31
      %p33 = scmp.ne.s32.totalorder %s22, %s23
      %p34 = scmp.eq.s32.totalorder %s14, 0
      %p35 = por %p33, %p34
      %p36 = scmp.ne.s32.totalorder %s22, %s23
      %p37 = scmp.eq.s32.totalorder %s15, 1
      %p38 = por %p36, %p37
      %p40 = scmp.ne.s32.totalorder %s23, %s39
      %p41 = scmp.eq.s32.totalorder %s15, 0
      %p42 = por %p40, %p41
      %s44 = sadd.s32 %s43, 1
      %p47 = scmp.eq.s32.totalorder %s9, 1
      %p48 = scmp.ne.s32.totalorder %s43, %s45
      %p49 = scmp.eq.s32.totalorder %s9, 0
      %p50 = por %p48, %p49
      %p51 = scmp.ne.s32.totalorder %s43, %s45
      %p52 = scmp.eq.s32.totalorder %s14, 1
      %p53 = por %p51, %p52
      %p54 = scmp.ne.s32.totalorder %s45, %s46
      %p55 = scmp.eq.s32.totalorder %s14, 0
      %p56 = por %p54, %p55
      %p57 = scmp.ne.s32.totalorder %s45, %s46
      %p58 = scmp.eq.s32.totalorder %s15, 1
      %p59 = por %p57, %p58
      %p61 = scmp.ne.s32.totalorder %s46, %s60
      %p62 = scmp.eq.s32.totalorder %s15, 0
      %p63 = por %p61, %p62
      %s65 = sadd.s32 %s64, 1
      %p68 = scmp.eq.s32.totalorder %s9, 1
      %p69 = scmp.ne.s32.totalorder %s64, %s66
      %p70 = scmp.eq.s32.totalorder %s9, 0
      %p71 = por %p69, %p70
      %p72 = scmp.ne.s32.totalorder %s64, %s66
      %p73 = scmp.eq.s32.totalorder %s14, 1
      %p74 = por %p72, %p73
      %p75 = scmp.ne.s32.totalorder %s66, %s67
      %p76 = scmp.eq.s32.totalorder %s14, 0
      %p77 = por %p75, %p76
      %p78 = scmp.ne.s32.totalorder %s66, %s67
      %p79 = scmp.eq.s32.totalorder %s15, 1
      %p80 = por %p78, %p79
      %p82 = scmp.ne.s32.totalorder %s67, %s81
      %p83 = scmp.eq.s32.totalorder %s15, 0
      %p84 = por %p82, %p83
      %s85 = ssub.s32 %s9, %s16
      %p86 = scmp.eq.s32.totalorder %s85, 0
      %s88 = sadd.s32 %s87, 1
      %s89 = scalar_select %p86, %s87, %s88
      %p92 = pneg %p86
      %p93 = scmp.eq.s32.totalorder %s9, 1
      %p94 = por %p92, %p93
      %p95 = scmp.ne.s32.totalorder %s87, %s90
      %p96 = scmp.eq.s32.totalorder %s9, 0
      %p97 = por %p95, %p96
      %p98 = scmp.ne.s32.totalorder %s87, %s90
      %p99 = scmp.eq.s32.totalorder %s14, 1
      %p100 = por %p98, %p99
      %p101 = scmp.ne.s32.totalorder %s90, %s91
      %p102 = scmp.eq.s32.totalorder %s14, 0
      %p103 = por %p101, %p102
      %p104 = scmp.ne.s32.totalorder %s90, %s91
      %p105 = scmp.eq.s32.totalorder %s15, 1
      %p106 = por %p104, %p105
      %p108 = scmp.ne.s32.totalorder %s91, %s107
      %p109 = scmp.eq.s32.totalorder %s15, 0
      %p110 = por %p108, %p109
      %p111 = scmp.le.s32.totalorder 1, %s9
      %p112 = scmp.lt.s32.totalorder %s9, 3
      %p113 = pnand %p111, %p112
      %p114 = pneg %p113
      // Predicated region
      $region9: #{soft_q_twin_forward.4} parent=5 // pred_check
        _
      $region10: #{soft_q_twin_forward.4} parent=5 // pred_check_branch
        %116 = sbr.rel (%p113) target = $region12
      $region11: #{soft_q_twin_forward.4} parent=5 // pred_region
        %s117 = ssub.s32 %s9, 1
        // Predicated region
        $region13: #{soft_q_twin_forward.4} parent=11 // pred_check
          %p118 = pneg %p56
        $region14: #{soft_q_twin_forward.4} parent=11 // pred_check_branch
          %120 = sbr.rel (%p118) target = $region16
        $region15: #{soft_q_twin_forward.4} parent=11 // pred_region
          _
        $region16: #{soft_q_twin_forward.4} parent=11 // pred_fallthru
          _
        // Predicated region
        $region17: #{soft_q_twin_forward.4} parent=11 // pred_check
          %p121 = pneg %p77
        $region18: #{soft_q_twin_forward.4} parent=11 // pred_check_branch
          %123 = sbr.rel (%p121) target = $region20
        $region19: #{soft_q_twin_forward.4} parent=11 // pred_region
          _
        $region20: #{soft_q_twin_forward.4} parent=11 // pred_fallthru
          _
      $region12: #{soft_q_twin_forward.4} parent=5 // pred_fallthru
        _
      %p124 = scmp.lt.s32.totalorder %s9, 2
      // Predicated region
      $region21: #{soft_q_twin_forward.4} parent=5 // pred_check
        %p125 = pneg %p124
      $region22: #{soft_q_twin_forward.4} parent=5 // pred_check_branch
        %127 = sbr.rel (%p125) target = $region24
      $region23: #{soft_q_twin_forward.4} parent=5 // pred_region
        // Predicated region
        $region25: #{soft_q_twin_forward.4} parent=23 // pred_check
          %p128 = pneg %p29
        $region26: #{soft_q_twin_forward.4} parent=23 // pred_check_branch
          %130 = sbr.rel (%p128) target = $region28
        $region27: #{soft_q_twin_forward.4} parent=23 // pred_region
          %s131 = smul.u32 22, %s9
          %s132 = ssub.s32 43, %s131
          %p133 = scmp.lt.s32.totalorder %s132, 22
          %s134 = scalar_select %p133, %s132, 22
          %s135 = smul.u32 64, %s134
          %s136 = smul.u32 %s135, 4
          %p137 = scmp.lt.s32.totalorder %s131, 42
          %s138 = scalar_select %p137, %s131, 42
          %s139 = smul.addr %s138, 4
          %s140 = smul.addr %s139, 4
          %s141 = scalar_lea.vmem %s0, %s140
          %s142 = smul.u32 22, %s9
          %s143 = ssub.s32 43, %s142
          %p144 = scmp.lt.s32.totalorder %s143, 22
          %s145 = scalar_select %p144, %s143, 22
          %s146 = smul.u32 64, %s145
          %s147 = smul.u32 %s146, 4
        $region28: #{soft_q_twin_forward.4} parent=23 // pred_fallthru
          _
      $region24: #{soft_q_twin_forward.4} parent=5 // pred_fallthru
        _
      %p148 = scmp.le.s32.totalorder 1, %s9
      %p149 = scmp.lt.s32.totalorder %s9, 3
      %p150 = pnand %p148, %p149
      %p151 = pneg %p150
      // Predicated region
      $region29: #{soft_q_twin_forward.4} parent=5 // pred_check
        _
      $region30: #{soft_q_twin_forward.4} parent=5 // pred_check_branch
        %153 = sbr.rel (%p150) target = $region32
      $region31: #{soft_q_twin_forward.4} parent=5 // pred_region
        %s154 = ssub.s32 %s9, 1
        %s155 = smul.u32 22, %s14
        %s156 = ssub.s32 43, %s155
        %p157 = scmp.lt.s32.totalorder %s156, 22
        %s158 = scalar_select %p157, %s156, 22
        %s159 = smul.u32 64, %s158
        %s160 = smul.u32 %s159, 4
        %p161 = scmp.lt.s32.totalorder %s155, 42
        %s162 = scalar_select %p161, %s155, 42
        %s163 = smul.addr %s162, 4
        %s164 = smul.addr %s163, 4
        %s165 = scalar_lea.vmem %s0, %s164
        %p166 = pneg %p35
        %p167 = pneg %p32
        %p168 = pneg %p56
        %p169 = pneg %p53
        %p170 = pneg %p77
        %p171 = pneg %p74
        %p172 = pneg %p103
        %p173 = pneg %p100
        %s174 = sand.u32 %s90, 1
        %s175 = sand.u32 %s90, 1
        %s176 = smul.addr %s175, 88
        %s177 = scalar_lea.vmem [#allocation2], %s176
        %s178 = smul.u32 22, %s14
        %s179 = ssub.s32 43, %s178
        %p180 = scmp.lt.s32.totalorder %s179, 22
        %s181 = scalar_select %p180, %s179, 22
        %s182 = smul.u32 64, %s181
        %s183 = smul.u32 %s182, 4
        %p184 = scmp.lt.s32.totalorder %s178, 42
        %s185 = scalar_select %p184, %s178, 42
        %s186 = smul.addr %s185, 4
        %s187 = smul.addr %s186, 4
        %s188 = scalar_lea.vmem %s0, %s187
        %s189 = smul.u32 22, %s14
        %s190 = ssub.s32 43, %s189
        %p191 = scmp.lt.s32.totalorder %s190, 22
        %s192 = scalar_select %p191, %s190, 22
        %s193 = smul.u32 64, %s192
        %s194 = smul.u32 %s193, 4
        %s195 = smul.u32 22, %s14
        %s196 = ssub.s32 43, %s195
        %p197 = scmp.lt.s32.totalorder %s196, 22
        %s198 = scalar_select %p197, %s196, 22
        %s199 = smul.u32 64, %s198
        %v201 = vld [vmem:[%s188] sm:$0xff]
        %v202 = vld [vmem:[%s188 + $0x8] sm:$0xff]
        %v203 = vld [vmem:[%s188 + $0x10] sm:$0xff]
        %v204 = vld [vmem:[%s188 + $0x18] sm:$0xff]
        %v205 = vld [vmem:[%s188 + $0x20] sm:$0xff]
        %v206 = vld [vmem:[%s188 + $0x28] sm:$0xff]
        %v207 = vld [vmem:[%s188 + $0x30] sm:$0xff]
        %v208 = vld [vmem:[%s188 + $0x38] sm:$0xff]
        %v209 = vld [vmem:[%s188 + $0x40] sm:$0xff]
        %v210 = vld [vmem:[%s188 + $0x48] sm:$0xff]
        %v211 = vld [vmem:[%s188 + $0x50] sm:$0xff]
        %v212 = vld [vmem:[%s188 + $0x58] sm:$0xff]
        %v213 = vld [vmem:[%s188 + $0x60] sm:$0xff]
        %v214 = vld [vmem:[%s188 + $0x68] sm:$0xff]
        %v215 = vld [vmem:[%s188 + $0x70] sm:$0xff]
        %v216 = vld [vmem:[%s188 + $0x78] sm:$0xff]
        %v217 = vld [vmem:[%s188 + $0x80] sm:$0xff]
        %v218 = vld [vmem:[%s188 + $0x88] sm:$0xff]
        %v219 = vld [vmem:[%s188 + $0x90] sm:$0xff]
        %v220 = vld [vmem:[%s188 + $0x98] sm:$0xff]
        %v221 = vld [vmem:[%s188 + $0xa0] sm:$0xff]
        %v222 = vld [vmem:[%s188 + $0xa8] sm:$0xff]
        %v223 = vld [vmem:[%s188 + $0xb0] sm:$0xff]
        %v224 = vld [vmem:[%s188 + $0xb8] sm:$0xff]
        %v225 = vld [vmem:[%s188 + $0xc0] sm:$0xff]
        %v226 = vld [vmem:[%s188 + $0xc8] sm:$0xff]
        %v227 = vld [vmem:[%s188 + $0xd0] sm:$0xff]
        %v228 = vld [vmem:[%s188 + $0xd8] sm:$0xff]
        %v229 = vld [vmem:[%s188 + $0xe0] sm:$0xff]
        %v230 = vld [vmem:[%s188 + $0xe8] sm:$0xff]
        %v231 = vld [vmem:[%s188 + $0xf0] sm:$0xff]
        %v232 = vld [vmem:[%s188 + $0xf8] sm:$0xff]
        %v233 = vld [vmem:[%s188 + $0x100] sm:$0xff]
        %v234 = vld [vmem:[%s188 + $0x108] sm:$0xff]
        %v235 = vld [vmem:[%s188 + $0x110] sm:$0xff]
        %v236 = vld [vmem:[%s188 + $0x118] sm:$0xff]
        %v237 = vld [vmem:[%s188 + $0x120] sm:$0xff]
        %v238 = vld [vmem:[%s188 + $0x128] sm:$0xff]
        %v239 = vld [vmem:[%s188 + $0x130] sm:$0xff]
        %v240 = vld [vmem:[%s188 + $0x138] sm:$0xff]
        %v241 = vld [vmem:[%s188 + $0x140] sm:$0xff]
        %v242 = vld [vmem:[%s188 + $0x148] sm:$0xff]
        %v243 = vld [vmem:[%s188 + $0x150] sm:$0xff]
        %v244 = vld [vmem:[%s188 + $0x158] sm:$0xff]
        %v245 = vld [vmem:[%s1] sm:$0xf]
        %v246 = vld [vmem:[%s1 + $0x4] sm:$0xf]
        %v247 = vld [vmem:[%s1 + $0x8] sm:$0xf]
        %v248 = vld [vmem:[%s1 + $0xc] sm:$0xf]
        %v249 = vld [vmem:[%s1 + $0x10] sm:$0xf]
        %v250 = vld [vmem:[%s1 + $0x14] sm:$0xf]
        %v251 = vld [vmem:[%s1 + $0x18] sm:$0xf]
        %v252 = vld [vmem:[%s1 + $0x1c] sm:$0xf]
        %v253 = vld [vmem:[%s1 + $0x20] sm:$0xf]
        %v254 = vld [vmem:[%s1 + $0x24] sm:$0xf]
        %v255 = vld [vmem:[%s1 + $0x28] sm:$0xf]
        %v256 = vld [vmem:[%s1 + $0x2c] sm:$0xf]
        %v257 = vld [vmem:[%s1 + $0x30] sm:$0xf]
        %v258 = vld [vmem:[%s1 + $0x34] sm:$0xf]
        %v259 = vld [vmem:[%s1 + $0x38] sm:$0xf]
        %v260 = vld [vmem:[%s1 + $0x3c] sm:$0xf]
        %v261 = vld [vmem:[%s1 + $0x40] sm:$0xf]
        %v262 = vld [vmem:[%s1 + $0x44] sm:$0xf]
        %v263 = vld [vmem:[%s1 + $0x48] sm:$0xf]
        %v264 = vld [vmem:[%s1 + $0x4c] sm:$0xf]
        %v265 = vld [vmem:[%s1 + $0x50] sm:$0xf]
        %v266 = vld [vmem:[%s1 + $0x54] sm:$0xf]
        %v267 = vld [vmem:[%s1 + $0x58] sm:$0xf]
        %v268 = vld [vmem:[%s1 + $0x5c] sm:$0xf]
        %v269 = vld [vmem:[%s1 + $0x60] sm:$0xf]
        %v270 = vld [vmem:[%s1 + $0x64] sm:$0xf]
        %v271 = vld [vmem:[%s1 + $0x68] sm:$0xf]
        %v272 = vld [vmem:[%s1 + $0x6c] sm:$0xf]
        %v273 = vld [vmem:[%s1 + $0x70] sm:$0xf]
        %v274 = vld [vmem:[%s1 + $0x74] sm:$0xf]
        %v275 = vld [vmem:[%s1 + $0x78] sm:$0xf]
        %v276 = vld [vmem:[%s1 + $0x7c] sm:$0xf]
        %v277 = vld [vmem:[%s1 + $0x80] sm:$0xf]
        %v278 = vld [vmem:[%s1 + $0x84] sm:$0xf]
        %v279 = vld [vmem:[%s1 + $0x88] sm:$0xf]
        %v280 = vld [vmem:[%s1 + $0x8c] sm:$0xf]
        %v281 = vld [vmem:[%s1 + $0x90] sm:$0xf]
        %v282 = vld [vmem:[%s1 + $0x94] sm:$0xf]
        %v283 = vld [vmem:[%s1 + $0x98] sm:$0xf]
        %v284 = vld [vmem:[%s1 + $0x9c] sm:$0xf]
        %v285 = vld [vmem:[%s1 + $0xa0] sm:$0xf]
        %v286 = vld [vmem:[%s1 + $0xa4] sm:$0xf]
        %v287 = vld [vmem:[%s1 + $0xa8] sm:$0xf]
        %v288 = vld [vmem:[%s1 + $0xac] sm:$0xf]
        %v289 = vld [vmem:[%s1 + $0xb0] sm:$0xf]
        %v290 = vld [vmem:[%s1 + $0xb4] sm:$0xf]
        %v291 = vld [vmem:[%s1 + $0xb8] sm:$0xf]
        %v292 = vld [vmem:[%s1 + $0xbc] sm:$0xf]
        %v293 = vld [vmem:[%s1 + $0xc0] sm:$0xf]
        %v294 = vld [vmem:[%s1 + $0xc4] sm:$0xf]
        %v295 = vld [vmem:[%s1 + $0xc8] sm:$0xf]
        %v296 = vld [vmem:[%s1 + $0xcc] sm:$0xf]
        %v297 = vld [vmem:[%s1 + $0xd0] sm:$0xf]
        %v298 = vld [vmem:[%s1 + $0xd4] sm:$0xf]
        %v299 = vld [vmem:[%s1 + $0xd8] sm:$0xf]
        %v300 = vld [vmem:[%s1 + $0xdc] sm:$0xf]
        %v301 = vld [vmem:[%s1 + $0xe0] sm:$0xf]
        %v302 = vld [vmem:[%s1 + $0xe4] sm:$0xf]
        %v303 = vld [vmem:[%s1 + $0xe8] sm:$0xf]
        %v304 = vld [vmem:[%s1 + $0xec] sm:$0xf]
        %v305 = vld [vmem:[%s1 + $0xf0] sm:$0xf]
        %v306 = vld [vmem:[%s1 + $0xf4] sm:$0xf]
        %v307 = vld [vmem:[%s1 + $0xf8] sm:$0xf]
        %v308 = vld [vmem:[%s1 + $0xfc] sm:$0xf]
        %v309 = vld [vmem:[%s2] sm:$0x1]
        %v311 = vlaneseq
        %v312 = vshrl.u32 %v311, 7
        %v313 = vsub.s32 0, %v312
        %v314 = vrot.slane %v309, %v313
        %v360 = vunpack.c.l.b16 %v201
        %v361 = vunpack.c.h.b16 %v201
        %v362 = vunpack.c.l.b16 %v202
        %v363 = vunpack.c.h.b16 %v202
        %v364 = vunpack.c.l.b16 %v203
        %v365 = vunpack.c.h.b16 %v203
        %v366 = vunpack.c.l.b16 %v204
        %v367 = vunpack.c.h.b16 %v204
        %v368 = vunpack.c.l.b16 %v205
        %v369 = vunpack.c.h.b16 %v205
        %v370 = vunpack.c.l.b16 %v206
        %v371 = vunpack.c.h.b16 %v206
        %v372 = vunpack.c.l.b16 %v207
        %v373 = vunpack.c.h.b16 %v207
        %v374 = vunpack.c.l.b16 %v208
        %v375 = vunpack.c.h.b16 %v208
        %v376 = vunpack.c.l.b16 %v209
        %v377 = vunpack.c.h.b16 %v209
        %v378 = vunpack.c.l.b16 %v210
        %v379 = vunpack.c.h.b16 %v210
        %v380 = vunpack.c.l.b16 %v211
        %v381 = vunpack.c.h.b16 %v211
        %v382 = vunpack.c.l.b16 %v212
        %v383 = vunpack.c.h.b16 %v212
        %v384 = vunpack.c.l.b16 %v213
        %v385 = vunpack.c.h.b16 %v213
        %v386 = vunpack.c.l.b16 %v214
        %v387 = vunpack.c.h.b16 %v214
        %v388 = vunpack.c.l.b16 %v215
        %v389 = vunpack.c.h.b16 %v215
        %v390 = vunpack.c.l.b16 %v216
        %v391 = vunpack.c.h.b16 %v216
        %v392 = vunpack.c.l.b16 %v217
        %v393 = vunpack.c.h.b16 %v217
        %v394 = vunpack.c.l.b16 %v218
        %v395 = vunpack.c.h.b16 %v218
        %v396 = vunpack.c.l.b16 %v219
        %v397 = vunpack.c.h.b16 %v219
        %v398 = vunpack.c.l.b16 %v220
        %v399 = vunpack.c.h.b16 %v220
        %v400 = vunpack.c.l.b16 %v221
        %v401 = vunpack.c.h.b16 %v221
        %v402 = vunpack.c.l.b16 %v222
        %v403 = vunpack.c.h.b16 %v222
        %v404 = vunpack.c.l.b16 %v223
        %v405 = vunpack.c.h.b16 %v223
        %v406 = vunpack.c.l.b16 %v224
        %v407 = vunpack.c.h.b16 %v224
        %v408 = vunpack.c.l.b16 %v225
        %v409 = vunpack.c.h.b16 %v225
        %v410 = vunpack.c.l.b16 %v226
        %v411 = vunpack.c.h.b16 %v226
        %v412 = vunpack.c.l.b16 %v227
        %v413 = vunpack.c.h.b16 %v227
        %v414 = vunpack.c.l.b16 %v228
        %v415 = vunpack.c.h.b16 %v228
        %v416 = vunpack.c.l.b16 %v229
        %v417 = vunpack.c.h.b16 %v229
        %v418 = vunpack.c.l.b16 %v230
        %v419 = vunpack.c.h.b16 %v230
        %v420 = vunpack.c.l.b16 %v231
        %v421 = vunpack.c.h.b16 %v231
        %v422 = vunpack.c.l.b16 %v232
        %v423 = vunpack.c.h.b16 %v232
        %v424 = vunpack.c.l.b16 %v233
        %v425 = vunpack.c.h.b16 %v233
        %v426 = vunpack.c.l.b16 %v234
        %v427 = vunpack.c.h.b16 %v234
        %v428 = vunpack.c.l.b16 %v235
        %v429 = vunpack.c.h.b16 %v235
        %v430 = vunpack.c.l.b16 %v236
        %v431 = vunpack.c.h.b16 %v236
        %v432 = vunpack.c.l.b16 %v237
        %v433 = vunpack.c.h.b16 %v237
        %v434 = vunpack.c.l.b16 %v238
        %v435 = vunpack.c.h.b16 %v238
        %v436 = vunpack.c.l.b16 %v239
        %v437 = vunpack.c.h.b16 %v239
        %v438 = vunpack.c.l.b16 %v240
        %v439 = vunpack.c.h.b16 %v240
        %v440 = vunpack.c.l.b16 %v241
        %v441 = vunpack.c.h.b16 %v241
        %v442 = vunpack.c.l.b16 %v242
        %v443 = vunpack.c.h.b16 %v242
        %v444 = vunpack.c.l.b16 %v243
        %v445 = vunpack.c.h.b16 %v243
        %v446 = vunpack.c.l.b16 %v244
        %v447 = vunpack.c.h.b16 %v244
        %v448 = vpack.c.b16 %v364, %v360
        %v449 = vpack.c.b16 %v365, %v361
        %v450 = vpack.c.b16 %v366, %v362
        %v451 = vpack.c.b16 %v367, %v363
        %v452 = vpack.c.b16 %v372, %v368
        %v453 = vpack.c.b16 %v373, %v369
        %v454 = vpack.c.b16 %v374, %v370
        %v455 = vpack.c.b16 %v375, %v371
        %v456 = vpack.c.b16 %v380, %v376
        %v457 = vpack.c.b16 %v381, %v377
        %v458 = vpack.c.b16 %v382, %v378
        %v459 = vpack.c.b16 %v383, %v379
        %v460 = vpack.c.b16 %v388, %v384
        %v461 = vpack.c.b16 %v389, %v385
        %v462 = vpack.c.b16 %v390, %v386
        %v463 = vpack.c.b16 %v391, %v387
        %v464 = vpack.c.b16 %v396, %v392
        %v465 = vpack.c.b16 %v397, %v393
        %v466 = vpack.c.b16 %v398, %v394
        %v467 = vpack.c.b16 %v399, %v395
        %v468 = vpack.c.b16 %v404, %v400
        %v469 = vpack.c.b16 %v405, %v401
        %v470 = vpack.c.b16 %v406, %v402
        %v471 = vpack.c.b16 %v407, %v403
        %v472 = vpack.c.b16 %v412, %v408
        %v473 = vpack.c.b16 %v413, %v409
        %v474 = vpack.c.b16 %v414, %v410
        %v475 = vpack.c.b16 %v415, %v411
        %v476 = vpack.c.b16 %v420, %v416
        %v477 = vpack.c.b16 %v421, %v417
        %v478 = vpack.c.b16 %v422, %v418
        %v479 = vpack.c.b16 %v423, %v419
        %v480 = vpack.c.b16 %v428, %v424
        %v481 = vpack.c.b16 %v429, %v425
        %v482 = vpack.c.b16 %v430, %v426
        %v483 = vpack.c.b16 %v431, %v427
        %v484 = vpack.c.b16 %v436, %v432
        %v485 = vpack.c.b16 %v437, %v433
        %v486 = vpack.c.b16 %v438, %v434
        %v487 = vpack.c.b16 %v439, %v435
        %v488 = vpack.c.b16 %v444, %v440
        %v489 = vpack.c.b16 %v445, %v441
        %v490 = vpack.c.b16 %v446, %v442
        %v491 = vpack.c.b16 %v447, %v443
        %v600 = vunpack.c.l.b16 %v245
        %v601 = vunpack.c.l.b16 %v246
        %v602 = vunpack.c.l.b16 %v247
        %v603 = vunpack.c.l.b16 %v248
        %v604 = vunpack.c.l.b16 %v249
        %v605 = vunpack.c.l.b16 %v250
        %v606 = vunpack.c.l.b16 %v251
        %v607 = vunpack.c.l.b16 %v252
        %v608 = vunpack.c.l.b16 %v253
        %v609 = vunpack.c.l.b16 %v254
        %v610 = vunpack.c.l.b16 %v255
        %v611 = vunpack.c.l.b16 %v256
        %v612 = vunpack.c.l.b16 %v257
        %v613 = vunpack.c.l.b16 %v258
        %v614 = vunpack.c.l.b16 %v259
        %v615 = vunpack.c.l.b16 %v260
        %v616 = vunpack.c.l.b16 %v261
        %v617 = vunpack.c.l.b16 %v262
        %v618 = vunpack.c.l.b16 %v263
        %v619 = vunpack.c.l.b16 %v264
        %v620 = vunpack.c.l.b16 %v265
        %v621 = vunpack.c.l.b16 %v266
        %v622 = vunpack.c.l.b16 %v267
        %v623 = vunpack.c.l.b16 %v268
        %v624 = vunpack.c.l.b16 %v269
        %v625 = vunpack.c.l.b16 %v270
        %v626 = vunpack.c.l.b16 %v271
        %v627 = vunpack.c.l.b16 %v272
        %v628 = vunpack.c.l.b16 %v273
        %v629 = vunpack.c.l.b16 %v274
        %v630 = vunpack.c.l.b16 %v275
        %v631 = vunpack.c.l.b16 %v276
        %v632 = vunpack.c.l.b16 %v277
        %v633 = vunpack.c.l.b16 %v278
        %v634 = vunpack.c.l.b16 %v279
        %v635 = vunpack.c.l.b16 %v280
        %v636 = vunpack.c.l.b16 %v281
        %v637 = vunpack.c.l.b16 %v282
        %v638 = vunpack.c.l.b16 %v283
        %v639 = vunpack.c.l.b16 %v284
        %v640 = vunpack.c.l.b16 %v285
        %v641 = vunpack.c.l.b16 %v286
        %v642 = vunpack.c.l.b16 %v287
        %v643 = vunpack.c.l.b16 %v288
        %v644 = vunpack.c.l.b16 %v289
        %v645 = vunpack.c.l.b16 %v290
        %v646 = vunpack.c.l.b16 %v291
        %v647 = vunpack.c.l.b16 %v292
        %v648 = vunpack.c.l.b16 %v293
        %v649 = vunpack.c.l.b16 %v294
        %v650 = vunpack.c.l.b16 %v295
        %v651 = vunpack.c.l.b16 %v296
        %v652 = vunpack.c.l.b16 %v297
        %v653 = vunpack.c.l.b16 %v298
        %v654 = vunpack.c.l.b16 %v299
        %v655 = vunpack.c.l.b16 %v300
        %v656 = vunpack.c.l.b16 %v301
        %v657 = vunpack.c.l.b16 %v302
        %v658 = vunpack.c.l.b16 %v303
        %v659 = vunpack.c.l.b16 %v304
        %v660 = vunpack.c.l.b16 %v305
        %v661 = vunpack.c.l.b16 %v306
        %v662 = vunpack.c.l.b16 %v307
        %v663 = vunpack.c.l.b16 %v308
        %v664 = vpack.c.b16 %v601, %v600
        %v665 = vpack.c.b16 %v603, %v602
        %v666 = vpack.c.b16 %v605, %v604
        %v667 = vpack.c.b16 %v607, %v606
        %v668 = vpack.c.b16 %v609, %v608
        %v669 = vpack.c.b16 %v611, %v610
        %v670 = vpack.c.b16 %v613, %v612
        %v671 = vpack.c.b16 %v615, %v614
        %v672 = vpack.c.b16 %v617, %v616
        %v673 = vpack.c.b16 %v619, %v618
        %v674 = vpack.c.b16 %v621, %v620
        %v675 = vpack.c.b16 %v623, %v622
        %v676 = vpack.c.b16 %v625, %v624
        %v677 = vpack.c.b16 %v627, %v626
        %v678 = vpack.c.b16 %v629, %v628
        %v679 = vpack.c.b16 %v631, %v630
        %v680 = vpack.c.b16 %v633, %v632
        %v681 = vpack.c.b16 %v635, %v634
        %v682 = vpack.c.b16 %v637, %v636
        %v683 = vpack.c.b16 %v639, %v638
        %v684 = vpack.c.b16 %v641, %v640
        %v685 = vpack.c.b16 %v643, %v642
        %v686 = vpack.c.b16 %v645, %v644
        %v687 = vpack.c.b16 %v647, %v646
        %v688 = vpack.c.b16 %v649, %v648
        %v689 = vpack.c.b16 %v651, %v650
        %v690 = vpack.c.b16 %v653, %v652
        %v691 = vpack.c.b16 %v655, %v654
        %v692 = vpack.c.b16 %v657, %v656
        %v693 = vpack.c.b16 %v659, %v658
        %v694 = vpack.c.b16 %v661, %v660
        %v695 = vpack.c.b16 %v663, %v662
        %728 = vmatprep.subr.bf16.mxu0 0
        %729 = vmatpush1.bf16.msra.mxu0 %v664
        %730 = vmatprep.subr.bf16.mxu0 0
        %731 = vmatpush1.bf16.msra.mxu0 %v665
        %732 = vmatprep.subr.bf16.mxu0 0
        %733 = vmatpush1.bf16.msra.mxu0 %v666
        %734 = vmatprep.subr.bf16.mxu0 0
        %735 = vmatpush1.bf16.msra.mxu0 %v667
        %736 = vmatprep.subr.bf16.mxu0 0
        %737 = vmatpush1.bf16.msra.mxu0 %v668
        %738 = vmatprep.subr.bf16.mxu0 0
        %739 = vmatpush1.bf16.msra.mxu0 %v669
        %740 = vmatprep.subr.bf16.mxu0 0
        %741 = vmatpush1.bf16.msra.mxu0 %v670
        %742 = vmatprep.subr.bf16.mxu0 0
        %743 = vmatpush1.bf16.msra.mxu0 %v671
        %744 = vmatprep.subr.bf16.mxu0 0
        %745 = vmatpush1.bf16.msra.mxu0 %v672
        %746 = vmatprep.subr.bf16.mxu0 0
        %747 = vmatpush1.bf16.msra.mxu0 %v673
        %748 = vmatprep.subr.bf16.mxu0 0
        %749 = vmatpush1.bf16.msra.mxu0 %v674
        %750 = vmatprep.subr.bf16.mxu0 0
        %751 = vmatpush1.bf16.msra.mxu0 %v675
        %752 = vmatprep.subr.bf16.mxu0 0
        %753 = vmatpush1.bf16.msra.mxu0 %v676
        %754 = vmatprep.subr.bf16.mxu0 0
        %755 = vmatpush1.bf16.msra.mxu0 %v677
        %756 = vmatprep.subr.bf16.mxu0 0
        %757 = vmatpush1.bf16.msra.mxu0 %v678
        %758 = vmatprep.subr.bf16.mxu0 0
        %759 = vmatpush1.bf16.msra.mxu0 %v679
        %760 = vmatprep.mubr.bf16.mxu0 %v449
        %761 = vmatmul.mubr.bf16.gmra.mrb[0].mxu0 %v448
        %v762 = vpop.f32.mrb[0].mxu0
        %v763 = vadd.f32 %v314, %v762
        %v764 = vpop.f32.mrb[0].mxu0
        %v765 = vpop.f32.mrb[0].mxu0
        %v766 = vadd.f32 %v314, %v765
        %v767 = vpop.f32.mrb[0].mxu0
        %768 = vmatprep.mubr.bf16.mxu0 %v453
        %769 = vmatmul.mubr.bf16.gmra.mrb[0].mxu0 %v452
        %v770 = vpop.f32.mrb[0].mxu0
        %v771 = vadd.f32 %v314, %v770
        %v772 = vpop.f32.mrb[0].mxu0
        %v773 = vpop.f32.mrb[0].mxu0
        %v774 = vadd.f32 %v314, %v773
        %v775 = vpop.f32.mrb[0].mxu0
        %776 = vmatprep.mubr.bf16.mxu0 %v457
        %777 = vmatmul.mubr.bf16.gmra.mrb[0].mxu0 %v456
        %v778 = vpop.f32.mrb[0].mxu0
        %v779 = vadd.f32 %v314, %v778
        %v780 = vpop.f32.mrb[0].mxu0
        %v781 = vpop.f32.mrb[0].mxu0
        %v782 = vadd.f32 %v314, %v781
        %v783 = vpop.f32.mrb[0].mxu0
        %784 = vmatprep.mubr.bf16.mxu0 %v461
        %785 = vmatmul.mubr.bf16.gmra.mrb[0].mxu0 %v460
        %v786 = vpop.f32.mrb[0].mxu0
        %v787 = vadd.f32 %v314, %v786
        %v788 = vpop.f32.mrb[0].mxu0
        %v789 = vpop.f32.mrb[0].mxu0
        %v790 = vadd.f32 %v314, %v789
        %v791 = vpop.f32.mrb[0].mxu0
        %792 = vmatprep.mubr.bf16.mxu0 %v465
        %793 = vmatmul.mubr.bf16.gmra.mrb[0].mxu0 %v464
        %v794 = vpop.f32.mrb[0].mxu0
        %v795 = vadd.f32 %v314, %v794
        %v796 = vpop.f32.mrb[0].mxu0
        %v797 = vpop.f32.mrb[0].mxu0
        %v798 = vadd.f32 %v314, %v797
        %v799 = vpop.f32.mrb[0].mxu0
        %800 = vmatprep.mubr.bf16.mxu0 %v469
        %801 = vmatmul.mubr.bf16.gmra.mrb[0].mxu0 %v468
        %v802 = vpop.f32.mrb[0].mxu0
        %v803 = vadd.f32 %v314, %v802
        %v804 = vpop.f32.mrb[0].mxu0
        %v805 = vpop.f32.mrb[0].mxu0
        %v806 = vadd.f32 %v314, %v805
        %v807 = vpop.f32.mrb[0].mxu0
        %808 = vmatprep.mubr.bf16.mxu0 %v473
        %809 = vmatmul.mubr.bf16.gmra.mrb[0].mxu0 %v472
        %v810 = vpop.f32.mrb[0].mxu0
        %v811 = vadd.f32 %v314, %v810
        %v812 = vpop.f32.mrb[0].mxu0
        %v813 = vpop.f32.mrb[0].mxu0
        %v814 = vadd.f32 %v314, %v813
        %v815 = vpop.f32.mrb[0].mxu0
        %816 = vmatprep.mubr.bf16.mxu0 %v477
        %817 = vmatmul.mubr.bf16.gmra.mrb[0].mxu0 %v476
        %v818 = vpop.f32.mrb[0].mxu0
        %v819 = vadd.f32 %v314, %v818
        %v820 = vpop.f32.mrb[0].mxu0
        %v821 = vpop.f32.mrb[0].mxu0
        %v822 = vadd.f32 %v314, %v821
        %v823 = vpop.f32.mrb[0].mxu0
        %824 = vmatprep.mubr.bf16.mxu0 %v481
        %825 = vmatmul.mubr.bf16.gmra.mrb[0].mxu0 %v480
        %v826 = vpop.f32.mrb[0].mxu0
        %v827 = vadd.f32 %v314, %v826
        %v828 = vpop.f32.mrb[0].mxu0
        %v829 = vpop.f32.mrb[0].mxu0
        %v830 = vadd.f32 %v314, %v829
        %v831 = vpop.f32.mrb[0].mxu0
        %832 = vmatprep.mubr.bf16.mxu0 %v485
        %833 = vmatmul.mubr.bf16.gmra.mrb[0].mxu0 %v484
        %v834 = vpop.f32.mrb[0].mxu0
        %v835 = vadd.f32 %v314, %v834
        %v836 = vpop.f32.mrb[0].mxu0
        %v837 = vpop.f32.mrb[0].mxu0
        %v838 = vadd.f32 %v314, %v837
        %v839 = vpop.f32.mrb[0].mxu0
        %840 = vmatprep.mubr.bf16.mxu0 %v489
        %841 = vmatmul.mubr.bf16.gmra.mrb[0].mxu0 %v488
        %v842 = vpop.f32.mrb[0].mxu0
        %v843 = vadd.f32 %v314, %v842
        %v844 = vpop.f32.mrb[0].mxu0
        %v845 = vpop.f32.mrb[0].mxu0
        %v846 = vadd.f32 %v314, %v845
        %v847 = vpop.f32.mrb[0].mxu0
        %848 = vdwg.mxu0
        %849 = vmatprep.subr.bf16.mxu0 0
        %850 = vmatpush1.bf16.msra.mxu0 %v680
        %851 = vmatprep.subr.bf16.mxu0 0
        %852 = vmatpush1.bf16.msra.mxu0 %v681
        %853 = vmatprep.subr.bf16.mxu0 0
        %854 = vmatpush1.bf16.msra.mxu0 %v682
        %855 = vmatprep.subr.bf16.mxu0 0
        %856 = vmatpush1.bf16.msra.mxu0 %v683
        %857 = vmatprep.subr.bf16.mxu0 0
        %858 = vmatpush1.bf16.msra.mxu0 %v684
        %859 = vmatprep.subr.bf16.mxu0 0
        %860 = vmatpush1.bf16.msra.mxu0 %v685
        %861 = vmatprep.subr.bf16.mxu0 0
        %862 = vmatpush1.bf16.msra.mxu0 %v686
        %863 = vmatprep.subr.bf16.mxu0 0
        %864 = vmatpush1.bf16.msra.mxu0 %v687
        %865 = vmatprep.subr.bf16.mxu0 0
        %866 = vmatpush1.bf16.msra.mxu0 %v688
        %867 = vmatprep.subr.bf16.mxu0 0
        %868 = vmatpush1.bf16.msra.mxu0 %v689
        %869 = vmatprep.subr.bf16.mxu0 0
        %870 = vmatpush1.bf16.msra.mxu0 %v690
        %871 = vmatprep.subr.bf16.mxu0 0
        %872 = vmatpush1.bf16.msra.mxu0 %v691
        %873 = vmatprep.subr.bf16.mxu0 0
        %874 = vmatpush1.bf16.msra.mxu0 %v692
        %875 = vmatprep.subr.bf16.mxu0 0
        %876 = vmatpush1.bf16.msra.mxu0 %v693
        %877 = vmatprep.subr.bf16.mxu0 0
        %878 = vmatpush1.bf16.msra.mxu0 %v694
        %879 = vmatprep.subr.bf16.mxu0 0
        %880 = vmatpush1.bf16.msra.mxu0 %v695
        %881 = vmatprep.mubr.bf16.mxu0 %v451
        %882 = vmatmul.mubr.bf16.gmra.mrb[0].mxu0 %v450
        %v883 = vpop.f32.mrb[0].mxu0
        %v884 = vadd.f32 %v763, %v883
        %v885 = vpop.f32.mrb[0].mxu0
        %v886 = vpop.f32.mrb[0].mxu0
        %v887 = vadd.f32 %v766, %v886
        %v888 = vpop.f32.mrb[0].mxu0
        %889 = vmatprep.mubr.bf16.mxu0 %v455
        %890 = vmatmul.mubr.bf16.gmra.mrb[0].mxu0 %v454
        %v891 = vpop.f32.mrb[0].mxu0
        %v892 = vadd.f32 %v771, %v891
        %v893 = vpop.f32.mrb[0].mxu0
        %v894 = vpop.f32.mrb[0].mxu0
        %v895 = vadd.f32 %v774, %v894
        %v896 = vpop.f32.mrb[0].mxu0
        %897 = vmatprep.mubr.bf16.mxu0 %v459
        %898 = vmatmul.mubr.bf16.gmra.mrb[0].mxu0 %v458
        %v899 = vpop.f32.mrb[0].mxu0
        %v900 = vadd.f32 %v779, %v899
        %v901 = vpop.f32.mrb[0].mxu0
        %v902 = vpop.f32.mrb[0].mxu0
        %v903 = vadd.f32 %v782, %v902
        %v904 = vpop.f32.mrb[0].mxu0
        %905 = vmatprep.mubr.bf16.mxu0 %v463
        %906 = vmatmul.mubr.bf16.gmra.mrb[0].mxu0 %v462
        %v907 = vpop.f32.mrb[0].mxu0
        %v908 = vadd.f32 %v787, %v907
        %v909 = vpop.f32.mrb[0].mxu0
        %v910 = vpop.f32.mrb[0].mxu0
        %v911 = vadd.f32 %v790, %v910
        %v912 = vpop.f32.mrb[0].mxu0
        %913 = vmatprep.mubr.bf16.mxu0 %v467
        %914 = vmatmul.mubr.bf16.gmra.mrb[0].mxu0 %v466
        %v915 = vpop.f32.mrb[0].mxu0
        %v916 = vadd.f32 %v795, %v915
        %v917 = vpop.f32.mrb[0].mxu0
        %v918 = vpop.f32.mrb[0].mxu0
        %v919 = vadd.f32 %v798, %v918
        %v920 = vpop.f32.mrb[0].mxu0
        %921 = vmatprep.mubr.bf16.mxu0 %v471
        %922 = vmatmul.mubr.bf16.gmra.mrb[0].mxu0 %v470
        %v923 = vpop.f32.mrb[0].mxu0
        %v924 = vadd.f32 %v803, %v923
        %v925 = vpop.f32.mrb[0].mxu0
        %v926 = vpop.f32.mrb[0].mxu0
        %v927 = vadd.f32 %v806, %v926
        %v928 = vpop.f32.mrb[0].mxu0
        %929 = vmatprep.mubr.bf16.mxu0 %v475
        %930 = vmatmul.mubr.bf16.gmra.mrb[0].mxu0 %v474
        %v931 = vpop.f32.mrb[0].mxu0
        %v932 = vadd.f32 %v811, %v931
        %v933 = vpop.f32.mrb[0].mxu0
        %v934 = vpop.f32.mrb[0].mxu0
        %v935 = vadd.f32 %v814, %v934
        %v936 = vpop.f32.mrb[0].mxu0
        %937 = vmatprep.mubr.bf16.mxu0 %v479
        %938 = vmatmul.mubr.bf16.gmra.mrb[0].mxu0 %v478
        %v939 = vpop.f32.mrb[0].mxu0
        %v940 = vadd.f32 %v819, %v939
        %v941 = vpop.f32.mrb[0].mxu0
        %v942 = vpop.f32.mrb[0].mxu0
        %v943 = vadd.f32 %v822, %v942
        %v944 = vpop.f32.mrb[0].mxu0
        %945 = vmatprep.mubr.bf16.mxu0 %v483
        %946 = vmatmul.mubr.bf16.gmra.mrb[0].mxu0 %v482
        %v947 = vpop.f32.mrb[0].mxu0
        %v948 = vadd.f32 %v827, %v947
        %v949 = vpop.f32.mrb[0].mxu0
        %v950 = vpop.f32.mrb[0].mxu0
        %v951 = vadd.f32 %v830, %v950
        %v952 = vpop.f32.mrb[0].mxu0
        %953 = vmatprep.mubr.bf16.mxu0 %v487
        %954 = vmatmul.mubr.bf16.gmra.mrb[0].mxu0 %v486
        %v955 = vpop.f32.mrb[0].mxu0
        %v956 = vadd.f32 %v835, %v955
        %v957 = vpop.f32.mrb[0].mxu0
        %v958 = vpop.f32.mrb[0].mxu0
        %v959 = vadd.f32 %v838, %v958
        %v960 = vpop.f32.mrb[0].mxu0
        %961 = vmatprep.mubr.bf16.mxu0 %v491
        %962 = vmatmul.mubr.bf16.gmra.mrb[0].mxu0 %v490
        %v963 = vpop.f32.mrb[0].mxu0
        %v964 = vadd.f32 %v843, %v963
        %v965 = vpop.f32.mrb[0].mxu0
        %v966 = vpop.f32.mrb[0].mxu0
        %v967 = vadd.f32 %v846, %v966
        %v968 = vpop.f32.mrb[0].mxu0
        %969 = vdwg.mxu0
        %v970 = vmax.f32 %v884, 0.0
        %v971 = vmax.f32 %v887, 0.0
        %v972 = vmax.f32 %v892, 0.0
        %v973 = vmax.f32 %v895, 0.0
        %v974 = vmax.f32 %v900, 0.0
        %v975 = vmax.f32 %v903, 0.0
        %v976 = vmax.f32 %v908, 0.0
        %v977 = vmax.f32 %v911, 0.0
        %v978 = vmax.f32 %v916, 0.0
        %v979 = vmax.f32 %v919, 0.0
        %v980 = vmax.f32 %v924, 0.0
        %v981 = vmax.f32 %v927, 0.0
        %v982 = vmax.f32 %v932, 0.0
        %v983 = vmax.f32 %v935, 0.0
        %v984 = vmax.f32 %v940, 0.0
        %v985 = vmax.f32 %v943, 0.0
        %v986 = vmax.f32 %v948, 0.0
        %v987 = vmax.f32 %v951, 0.0
        %v988 = vmax.f32 %v956, 0.0
        %v989 = vmax.f32 %v959, 0.0
        %v990 = vmax.f32 %v964, 0.0
        %v991 = vmax.f32 %v967, 0.0
        %v992 = vpack.c.bf16 %v971, %v970
        %v993 = vpack.c.bf16 %v973, %v972
        %v994 = vpack.c.bf16 %v975, %v974
        %v995 = vpack.c.bf16 %v977, %v976
        %v996 = vpack.c.bf16 %v979, %v978
        %v997 = vpack.c.bf16 %v981, %v980
        %v998 = vpack.c.bf16 %v983, %v982
        %v999 = vpack.c.bf16 %v985, %v984
        %v1000 = vpack.c.bf16 %v987, %v986
        %v1001 = vpack.c.bf16 %v989, %v988
        %v1002 = vpack.c.bf16 %v991, %v990
        %v1014 = vunpack.c.l.b16 %v992
        %v1015 = vunpack.c.h.b16 %v992
        %v1016 = vunpack.c.l.b16 %v993
        %v1017 = vunpack.c.h.b16 %v993
        %v1018 = vunpack.c.l.b16 %v994
        %v1019 = vunpack.c.h.b16 %v994
        %v1020 = vunpack.c.l.b16 %v995
        %v1021 = vunpack.c.h.b16 %v995
        %v1022 = vunpack.c.l.b16 %v996
        %v1023 = vunpack.c.h.b16 %v996
        %v1024 = vunpack.c.l.b16 %v997
        %v1025 = vunpack.c.h.b16 %v997
        %v1026 = vunpack.c.l.b16 %v998
        %v1027 = vunpack.c.h.b16 %v998
        %v1028 = vunpack.c.l.b16 %v999
        %v1029 = vunpack.c.h.b16 %v999
        %v1030 = vunpack.c.l.b16 %v1000
        %v1031 = vunpack.c.h.b16 %v1000
        %v1032 = vunpack.c.l.b16 %v1001
        %v1033 = vunpack.c.h.b16 %v1001
        %v1034 = vunpack.c.l.b16 %v1002
        %v1035 = vunpack.c.h.b16 %v1002
        %v1036 = vpack.c.b16 %v1014, %v1014
        %v1037 = vpack.c.b16 %v1015, %v1015
        %v1038 = vpack.c.b16 %v1016, %v1016
        %v1039 = vpack.c.b16 %v1017, %v1017
        %v1040 = vpack.c.b16 %v1018, %v1018
        %v1041 = vpack.c.b16 %v1019, %v1019
        %v1042 = vpack.c.b16 %v1020, %v1020
        %v1043 = vpack.c.b16 %v1021, %v1021
        %v1044 = vpack.c.b16 %v1022, %v1022
        %v1045 = vpack.c.b16 %v1023, %v1023
        %v1046 = vpack.c.b16 %v1024, %v1024
        %v1047 = vpack.c.b16 %v1025, %v1025
        %v1048 = vpack.c.b16 %v1026, %v1026
        %v1049 = vpack.c.b16 %v1027, %v1027
        %v1050 = vpack.c.b16 %v1028, %v1028
        %v1051 = vpack.c.b16 %v1029, %v1029
        %v1052 = vpack.c.b16 %v1030, %v1030
        %v1053 = vpack.c.b16 %v1031, %v1031
        %v1054 = vpack.c.b16 %v1032, %v1032
        %v1055 = vpack.c.b16 %v1033, %v1033
        %v1056 = vpack.c.b16 %v1034, %v1034
        %v1057 = vpack.c.b16 %v1035, %v1035
        %vm1080 = vcmask 519168
        %1081 = vst.msk [vmem:[%s177] sm:$0xf] %vm1080, %v1036
        %1082 = vst.msk [vmem:[%s177 + $0x4] sm:$0xf] %vm1080, %v1037
        %1083 = vst.msk [vmem:[%s177 + $0x8] sm:$0xf] %vm1080, %v1038
        %1084 = vst.msk [vmem:[%s177 + $0xc] sm:$0xf] %vm1080, %v1039
        %1085 = vst.msk [vmem:[%s177 + $0x10] sm:$0xf] %vm1080, %v1040
        %1086 = vst.msk [vmem:[%s177 + $0x14] sm:$0xf] %vm1080, %v1041
        %1087 = vst.msk [vmem:[%s177 + $0x18] sm:$0xf] %vm1080, %v1042
        %1088 = vst.msk [vmem:[%s177 + $0x1c] sm:$0xf] %vm1080, %v1043
        %1089 = vst.msk [vmem:[%s177 + $0x20] sm:$0xf] %vm1080, %v1044
        %1090 = vst.msk [vmem:[%s177 + $0x24] sm:$0xf] %vm1080, %v1045
        %1091 = vst.msk [vmem:[%s177 + $0x28] sm:$0xf] %vm1080, %v1046
        %1092 = vst.msk [vmem:[%s177 + $0x2c] sm:$0xf] %vm1080, %v1047
        %1093 = vst.msk [vmem:[%s177 + $0x30] sm:$0xf] %vm1080, %v1048
        %1094 = vst.msk [vmem:[%s177 + $0x34] sm:$0xf] %vm1080, %v1049
        %1095 = vst.msk [vmem:[%s177 + $0x38] sm:$0xf] %vm1080, %v1050
        %1096 = vst.msk [vmem:[%s177 + $0x3c] sm:$0xf] %vm1080, %v1051
        %1097 = vst.msk [vmem:[%s177 + $0x40] sm:$0xf] %vm1080, %v1052
        %1098 = vst.msk [vmem:[%s177 + $0x44] sm:$0xf] %vm1080, %v1053
        %1099 = vst.msk [vmem:[%s177 + $0x48] sm:$0xf] %vm1080, %v1054
        %1100 = vst.msk [vmem:[%s177 + $0x4c] sm:$0xf] %vm1080, %v1055
        %1101 = vst.msk [vmem:[%s177 + $0x50] sm:$0xf] %vm1080, %v1056
        %1102 = vst.msk [vmem:[%s177 + $0x54] sm:$0xf] %vm1080, %v1057
        %s1103 = sand.u32 %s90, 1
        %s1104 = sand.u32 %s90, 1
        %s1105 = smul.addr %s1104, 88
        %s1106 = scalar_lea.vmem [#allocation2], %s1105
        // Predicated region
        $region33: #{soft_q_twin_forward.4} parent=31 // pred_check
          %p1107 = pneg %p100
        $region34: #{soft_q_twin_forward.4} parent=31 // pred_check_branch
          %1109 = sbr.rel (%p1107) target = $region36
        $region35: #{soft_q_twin_forward.4} parent=31 // pred_region
          %s1110 = smul.u32 22, %s14
          %s1111 = ssub.s32 43, %s1110
          %p1112 = scmp.lt.s32.totalorder %s1111, 22
          %s1113 = scalar_select %p1112, %s1111, 22
          %s1114 = smul.u32 64, %s1113
          %p1115 = scmp.ne.s32.totalorder 0, %s1114
          %s1116 = smul.addr %s1110, 4
          %s1117 = scalar_lea.vmem %s3, %s1116
          // Predicated region
          $region37: #{soft_q_twin_forward.4} parent=35 // pred_check
            %p1118 = pneg %p1115
          $region38: #{soft_q_twin_forward.4} parent=35 // pred_check_branch
            %1120 = sbr.rel (%p1118) target = $region40
          $region39: #{soft_q_twin_forward.4} parent=35 // pred_region
            // Predicated region
            $region41: #{soft_q_twin_forward.4} parent=39 // pred_check
              _
            $region42: #{soft_q_twin_forward.4} parent=39 // pred_check_branch
              %1122 = sbr.rel target = $region44
            $region43: #{soft_q_twin_forward.4} parent=39 // pred_region
              // Predicated region
              $region63: #{soft_q_twin_forward.4} parent=43 // pred_check
                _
              $region64: #{soft_q_twin_forward.4} parent=43 // pred_check_branch
                %1214 = sbr.rel (0) target = $region66
              $region65: #{soft_q_twin_forward.4} parent=43 // pred_region
                %s1216 = sdiv.u32.pop %s1113, 22
                %s1217 = srem.u32.pop %s1113, 22
                // While loop
                $region67: #{soft_q_twin_forward.4} parent=65 // loop_pre_header
                  _
                $region68: #{soft_q_twin_forward.4} parent=65 // loop_header
                  %s1219 = sphi 0, %s1221
                  %p1220 = scmp.ge.s32.totalorder %s1219, %s1216
                  %s1224 = sphi 0, %s1273
                  %s1225 = sphi %s1106, %s1276
                  %s1226 = sphi %s1117, %s1277
                $region69: #{soft_q_twin_forward.4} parent=65 // loop_header_branch
                  %1223 = sbr.rel (%p1220) target = $region73
                $region70: #{soft_q_twin_forward.4} parent=65 // loop_body
                  %v1227 = vld [vmem:[%s1225] sm:$0xf]
                  %1228 = vst [vmem:[%s1226] sm:$0xf] %v1227
                  %v1229 = vld [vmem:[%s1225 + $0x4] sm:$0xf]
                  %1230 = vst [vmem:[%s1226 + $0x4] sm:$0xf] %v1229
                  %v1231 = vld [vmem:[%s1225 + $0x8] sm:$0xf]
                  %1232 = vst [vmem:[%s1226 + $0x8] sm:$0xf] %v1231
                  %v1233 = vld [vmem:[%s1225 + $0xc] sm:$0xf]
                  %1234 = vst [vmem:[%s1226 + $0xc] sm:$0xf] %v1233
                  %v1235 = vld [vmem:[%s1225 + $0x10] sm:$0xf]
                  %1236 = vst [vmem:[%s1226 + $0x10] sm:$0xf] %v1235
                  %v1237 = vld [vmem:[%s1225 + $0x14] sm:$0xf]
                  %1238 = vst [vmem:[%s1226 + $0x14] sm:$0xf] %v1237
                  %v1239 = vld [vmem:[%s1225 + $0x18] sm:$0xf]
                  %1240 = vst [vmem:[%s1226 + $0x18] sm:$0xf] %v1239
                  %v1241 = vld [vmem:[%s1225 + $0x1c] sm:$0xf]
                  %1242 = vst [vmem:[%s1226 + $0x1c] sm:$0xf] %v1241
                  %v1243 = vld [vmem:[%s1225 + $0x20] sm:$0xf]
                  %1244 = vst [vmem:[%s1226 + $0x20] sm:$0xf] %v1243
                  %v1245 = vld [vmem:[%s1225 + $0x24] sm:$0xf]
                  %1246 = vst [vmem:[%s1226 + $0x24] sm:$0xf] %v1245
                  %v1247 = vld [vmem:[%s1225 + $0x28] sm:$0xf]
                  %1248 = vst [vmem:[%s1226 + $0x28] sm:$0xf] %v1247
                  %v1249 = vld [vmem:[%s1225 + $0x2c] sm:$0xf]
                  %1250 = vst [vmem:[%s1226 + $0x2c] sm:$0xf] %v1249
                  %v1251 = vld [vmem:[%s1225 + $0x30] sm:$0xf]
                  %1252 = vst [vmem:[%s1226 + $0x30] sm:$0xf] %v1251
                  %v1253 = vld [vmem:[%s1225 + $0x34] sm:$0xf]
                  %1254 = vst [vmem:[%s1226 + $0x34] sm:$0xf] %v1253
                  %v1255 = vld [vmem:[%s1225 + $0x38] sm:$0xf]
                  %1256 = vst [vmem:[%s1226 + $0x38] sm:$0xf] %v1255
                  %v1257 = vld [vmem:[%s1225 + $0x3c] sm:$0xf]
                  %1258 = vst [vmem:[%s1226 + $0x3c] sm:$0xf] %v1257
                  %v1259 = vld [vmem:[%s1225 + $0x40] sm:$0xf]
                  %1260 = vst [vmem:[%s1226 + $0x40] sm:$0xf] %v1259
                  %v1261 = vld [vmem:[%s1225 + $0x44] sm:$0xf]
                  %1262 = vst [vmem:[%s1226 + $0x44] sm:$0xf] %v1261
                  %v1263 = vld [vmem:[%s1225 + $0x48] sm:$0xf]
                  %1264 = vst [vmem:[%s1226 + $0x48] sm:$0xf] %v1263
                  %v1265 = vld [vmem:[%s1225 + $0x4c] sm:$0xf]
                  %1266 = vst [vmem:[%s1226 + $0x4c] sm:$0xf] %v1265
                  %v1267 = vld [vmem:[%s1225 + $0x50] sm:$0xf]
                  %1268 = vst [vmem:[%s1226 + $0x50] sm:$0xf] %v1267
                  %v1269 = vld [vmem:[%s1225 + $0x54] sm:$0xf]
                  %1270 = vst [vmem:[%s1226 + $0x54] sm:$0xf] %v1269
                  %s1271 = sadd.s32 1, %s1224
                  %p1272 = scmp.ge.s32.totalorder %s1271, %s1216
                  %s1273 = scalar_select %p1272, 0, %s1271
                  %s1274 = smul.u32 %s1273, 88
                  %s1275 = smul.u32 %s1273, 88
                  %s1276 = scalar_lea.vmem %s1106, %s1274 [#allocation2]
                  %s1277 = scalar_lea.vmem %s1117, %s1275
                $region71: #{soft_q_twin_forward.4} parent=65 // loop_footer
                  %s1221 = sadd.s32 %s1219, 1
                $region72: #{soft_q_twin_forward.4} parent=65 // loop_footer_branch
                  %1218 = sbr.rel target = $region68
                $region73: #{soft_q_twin_forward.4} parent=65 // loop_exit
                  _
                %s1278 = sdiv.u32.pop %s1113, 22
                %s1279 = srem.u32.pop %s1113, 22
                %s1280 = smul.u32 %s1278, 22
                %s1281 = smul.u32 4, %s1280
                %s1282 = scalar_lea.vmem %s1106, %s1281 [#allocation2]
                %s1283 = smul.u32 4, %s1280
                %s1284 = scalar_lea.vmem %s1117, %s1283
                // While loop
                $region74: #{soft_q_twin_forward.4} parent=65 // loop_pre_header
                  _
                $region75: #{soft_q_twin_forward.4} parent=65 // loop_header
                  %s1286 = sphi 0, %s1288
                  %p1287 = scmp.ge.s32.totalorder %s1286, %s1279
                  %s1291 = sphi 0, %s1298
                  %s1292 = sphi %s1282, %s1301
                  %s1293 = sphi %s1284, %s1302
                $region76: #{soft_q_twin_forward.4} parent=65 // loop_header_branch
                  %1290 = sbr.rel (%p1287) target = $region80
                $region77: #{soft_q_twin_forward.4} parent=65 // loop_body
                  %v1294 = vld [vmem:[%s1292] sm:$0xf]
                  %1295 = vst [vmem:[%s1293] sm:$0xf] %v1294
                  %s1296 = sadd.s32 1, %s1291
                  %p1297 = scmp.ge.s32.totalorder %s1296, %s1279
                  %s1298 = scalar_select %p1297, 0, %s1296
                  %s1299 = smul.u32 %s1298, 4
                  %s1300 = smul.u32 %s1298, 4
                  %s1301 = scalar_lea.vmem %s1282, %s1299 [#allocation2]
                  %s1302 = scalar_lea.vmem %s1284, %s1300
                $region78: #{soft_q_twin_forward.4} parent=65 // loop_footer
                  %s1288 = sadd.s32 %s1286, 1
                $region79: #{soft_q_twin_forward.4} parent=65 // loop_footer_branch
                  %1285 = sbr.rel target = $region75
                $region80: #{soft_q_twin_forward.4} parent=65 // loop_exit
                  _
              $region66: #{soft_q_twin_forward.4} parent=43 // pred_fallthru
                _
            $region44: #{soft_q_twin_forward.4} parent=39 // pred_fallthru
              _
            // Predicated region
            $region45: #{soft_q_twin_forward.4} parent=39 // pred_check
              _
            $region46: #{soft_q_twin_forward.4} parent=39 // pred_check_branch
              %1124 = sbr.rel (0) target = $region48
            $region47: #{soft_q_twin_forward.4} parent=39 // pred_region
              %s1126 = sdiv.u32.pop %s1113, 22
              %s1127 = srem.u32.pop %s1113, 22
              // While loop
              $region49: #{soft_q_twin_forward.4} parent=47 // loop_pre_header
                _
              $region50: #{soft_q_twin_forward.4} parent=47 // loop_header
                %s1129 = sphi 0, %s1131
                %p1130 = scmp.ge.s32.totalorder %s1129, %s1126
                %s1134 = sphi 0, %s1183
                %s1135 = sphi %s1106, %s1186
                %s1136 = sphi %s1117, %s1187
              $region51: #{soft_q_twin_forward.4} parent=47 // loop_header_branch
                %1133 = sbr.rel (%p1130) target = $region55
              $region52: #{soft_q_twin_forward.4} parent=47 // loop_body
                %v1137 = vld [vmem:[%s1135] sm:$0xf]
                %1138 = vst [vmem:[%s1136] sm:$0xf] %v1137
                %v1139 = vld [vmem:[%s1135 + $0x4] sm:$0xf]
                %1140 = vst [vmem:[%s1136 + $0x4] sm:$0xf] %v1139
                %v1141 = vld [vmem:[%s1135 + $0x8] sm:$0xf]
                %1142 = vst [vmem:[%s1136 + $0x8] sm:$0xf] %v1141
                %v1143 = vld [vmem:[%s1135 + $0xc] sm:$0xf]
                %1144 = vst [vmem:[%s1136 + $0xc] sm:$0xf] %v1143
                %v1145 = vld [vmem:[%s1135 + $0x10] sm:$0xf]
                %1146 = vst [vmem:[%s1136 + $0x10] sm:$0xf] %v1145
                %v1147 = vld [vmem:[%s1135 + $0x14] sm:$0xf]
                %1148 = vst [vmem:[%s1136 + $0x14] sm:$0xf] %v1147
                %v1149 = vld [vmem:[%s1135 + $0x18] sm:$0xf]
                %1150 = vst [vmem:[%s1136 + $0x18] sm:$0xf] %v1149
                %v1151 = vld [vmem:[%s1135 + $0x1c] sm:$0xf]
                %1152 = vst [vmem:[%s1136 + $0x1c] sm:$0xf] %v1151
                %v1153 = vld [vmem:[%s1135 + $0x20] sm:$0xf]
                %1154 = vst [vmem:[%s1136 + $0x20] sm:$0xf] %v1153
                %v1155 = vld [vmem:[%s1135 + $0x24] sm:$0xf]
                %1156 = vst [vmem:[%s1136 + $0x24] sm:$0xf] %v1155
                %v1157 = vld [vmem:[%s1135 + $0x28] sm:$0xf]
                %1158 = vst [vmem:[%s1136 + $0x28] sm:$0xf] %v1157
                %v1159 = vld [vmem:[%s1135 + $0x2c] sm:$0xf]
                %1160 = vst [vmem:[%s1136 + $0x2c] sm:$0xf] %v1159
                %v1161 = vld [vmem:[%s1135 + $0x30] sm:$0xf]
                %1162 = vst [vmem:[%s1136 + $0x30] sm:$0xf] %v1161
                %v1163 = vld [vmem:[%s1135 + $0x34] sm:$0xf]
                %1164 = vst [vmem:[%s1136 + $0x34] sm:$0xf] %v1163
                %v1165 = vld [vmem:[%s1135 + $0x38] sm:$0xf]
                %1166 = vst [vmem:[%s1136 + $0x38] sm:$0xf] %v1165
                %v1167 = vld [vmem:[%s1135 + $0x3c] sm:$0xf]
                %1168 = vst [vmem:[%s1136 + $0x3c] sm:$0xf] %v1167
                %v1169 = vld [vmem:[%s1135 + $0x40] sm:$0xf]
                %1170 = vst [vmem:[%s1136 + $0x40] sm:$0xf] %v1169
                %v1171 = vld [vmem:[%s1135 + $0x44] sm:$0xf]
                %1172 = vst [vmem:[%s1136 + $0x44] sm:$0xf] %v1171
                %v1173 = vld [vmem:[%s1135 + $0x48] sm:$0xf]
                %1174 = vst [vmem:[%s1136 + $0x48] sm:$0xf] %v1173
                %v1175 = vld [vmem:[%s1135 + $0x4c] sm:$0xf]
                %1176 = vst [vmem:[%s1136 + $0x4c] sm:$0xf] %v1175
                %v1177 = vld [vmem:[%s1135 + $0x50] sm:$0xf]
                %1178 = vst [vmem:[%s1136 + $0x50] sm:$0xf] %v1177
                %v1179 = vld [vmem:[%s1135 + $0x54] sm:$0xf]
                %1180 = vst [vmem:[%s1136 + $0x54] sm:$0xf] %v1179
                %s1181 = sadd.s32 1, %s1134
                %p1182 = scmp.ge.s32.totalorder %s1181, %s1126
                %s1183 = scalar_select %p1182, 0, %s1181
                %s1184 = smul.u32 %s1183, 88
                %s1185 = smul.u32 %s1183, 88
                %s1186 = scalar_lea.vmem %s1106, %s1184 [#allocation2]
                %s1187 = scalar_lea.vmem %s1117, %s1185
              $region53: #{soft_q_twin_forward.4} parent=47 // loop_footer
                %s1131 = sadd.s32 %s1129, 1
              $region54: #{soft_q_twin_forward.4} parent=47 // loop_footer_branch
                %1128 = sbr.rel target = $region50
              $region55: #{soft_q_twin_forward.4} parent=47 // loop_exit
                _
              %s1188 = sdiv.u32.pop %s1113, 22
              %s1189 = srem.u32.pop %s1113, 22
              %s1190 = smul.u32 %s1188, 22
              %s1191 = smul.u32 4, %s1190
              %s1192 = scalar_lea.vmem %s1106, %s1191 [#allocation2]
              %s1193 = smul.u32 4, %s1190
              %s1194 = scalar_lea.vmem %s1117, %s1193
              // While loop
              $region56: #{soft_q_twin_forward.4} parent=47 // loop_pre_header
                _
              $region57: #{soft_q_twin_forward.4} parent=47 // loop_header
                %s1196 = sphi 0, %s1198
                %p1197 = scmp.ge.s32.totalorder %s1196, %s1189
                %s1201 = sphi 0, %s1208
                %s1202 = sphi %s1192, %s1211
                %s1203 = sphi %s1194, %s1212
              $region58: #{soft_q_twin_forward.4} parent=47 // loop_header_branch
                %1200 = sbr.rel (%p1197) target = $region62
              $region59: #{soft_q_twin_forward.4} parent=47 // loop_body
                %v1204 = vld [vmem:[%s1202] sm:$0xf]
                %1205 = vst [vmem:[%s1203] sm:$0xf] %v1204
                %s1206 = sadd.s32 1, %s1201
                %p1207 = scmp.ge.s32.totalorder %s1206, %s1189
                %s1208 = scalar_select %p1207, 0, %s1206
                %s1209 = smul.u32 %s1208, 4
                %s1210 = smul.u32 %s1208, 4
                %s1211 = scalar_lea.vmem %s1192, %s1209 [#allocation2]
                %s1212 = scalar_lea.vmem %s1194, %s1210
              $region60: #{soft_q_twin_forward.4} parent=47 // loop_footer
                %s1198 = sadd.s32 %s1196, 1
              $region61: #{soft_q_twin_forward.4} parent=47 // loop_footer_branch
                %1195 = sbr.rel target = $region57
              $region62: #{soft_q_twin_forward.4} parent=47 // loop_exit
                _
            $region48: #{soft_q_twin_forward.4} parent=39 // pred_fallthru
              _
          $region40: #{soft_q_twin_forward.4} parent=35 // pred_fallthru
            _
          %1303 = vnop
        $region36: #{soft_q_twin_forward.4} parent=31 // pred_fallthru
          _
      $region32: #{soft_q_twin_forward.4} parent=5 // pred_fallthru
        _
      %p1304 = scmp.le.s32.totalorder 2, %s9
      // Predicated region
      $region81: #{soft_q_twin_forward.4} parent=5 // pred_check
        %p1305 = pneg %p1304
      $region82: #{soft_q_twin_forward.4} parent=5 // pred_check_branch
        %1307 = sbr.rel (%p1305) target = $region84
      $region83: #{soft_q_twin_forward.4} parent=5 // pred_region
        %s1308 = ssub.s32 %s9, 2
        // Predicated region
        $region85: #{soft_q_twin_forward.4} parent=83 // pred_check
          %p1309 = pneg %p106
        $region86: #{soft_q_twin_forward.4} parent=83 // pred_check_branch
          %1311 = sbr.rel (%p1309) target = $region88
        $region87: #{soft_q_twin_forward.4} parent=83 // pred_region
          %s1312 = sand.u32 %s91, 1
          %s1313 = sand.u32 %s91, 1
          %s1314 = smul.addr %s1313, 88
          %s1315 = scalar_lea.vmem [#allocation2], %s1314
        $region88: #{soft_q_twin_forward.4} parent=83 // pred_fallthru
          _
      $region84: #{soft_q_twin_forward.4} parent=5 // pred_fallthru
        _
    $region6: #{soft_q_twin_forward.4} parent=1 // loop_footer
      %s13 = sadd.s32 1, %s9
    $region7: #{soft_q_twin_forward.4} parent=1 // loop_footer_branch
      %8 = sbr.rel target = $region3
    $region8: #{soft_q_twin_forward.4} parent=1 // loop_exit
      _

// kernel: soft_q_twin_forward.5
$region0: #{soft_q_twin_forward.5}
  #allocation0 [shape = 'u32[]', space=smem, size = 0x4, offset = 0x4, fixed_abs, tag = 'smem constant byte address 0x4 - core index']
  #allocation1 [shape = 'u32[144,128]{1,0:T(1,128)}', space=vmem, size = 0x12000, scoped, tag = 'internal scratch']
  #allocation2 [shape = 'f32[2,128]{1,0:T(2,128)}', space=vmem, size = 0x400, scoped, tag = 'scratch operand']
  %s0 = inlined_call_operand.vmem [shape: bf16[121,2,576], index: 0, kind: input, shape index: {}]
  %s1 = inlined_call_operand.vmem [shape: bf16[576,64], index: 1, kind: input, shape index: {}]
  %s2 = inlined_call_operand.vmem [shape: f32[1,64], index: 2, kind: input, shape index: {}]
  %s3 = inlined_call_operand.vmem [shape: bf16[121,64,128], index: 3, kind: input, shape index: {}]
  %s4 = inlined_call_operand.vmem [shape: f32[1,128], index: 4, kind: input, shape index: {}]
  %s5 = inlined_call_operand.vmem [shape: bf16[128,128], index: 5, kind: input, shape index: {}]
  %s6 = inlined_call_operand.vmem [shape: f32[1,128], index: 6, kind: input, shape index: {}]
  %s7 = inlined_call_operand.vmem [shape: f32[2,128], index: 7, kind: output, shape index: {}]
  %s8 = sld [smem:[#allocation0]]
  $region69: #{soft_q_twin_forward.5} parent=0
    _
  %s10 = ssub.s32 1, %s8
  %s11 = scalar_select 0, %s10, %s8
  loop: start=0, step=1, limit=13
  $region2: #{soft_q_twin_forward.5} parent=0 // loop_pre_header
    _
  $region3: #{soft_q_twin_forward.5} parent=0 // loop_header
    %s13 = sphi 0, %s17
    %p14 = scmp.ge.s32.totalorder %s13, 13
    %s20 = sphi 0, %s32
    %s21 = sphi 0, %s28
    %s22 = sphi 0, %s20
    %s23 = sphi 0, %s21
    %s24 = sphi 0, %s22
    %s25 = sphi 0, %s23
    %s37 = sphi 0, %s39
    %s40 = sphi 0, %s37
    %s41 = sphi 0, %s40
    %s57 = sphi 0, %s41
    %s61 = sphi 0, %s61
    %s63 = sphi 0, %s61
    %s64 = sphi 0, %s63
    %s78 = sphi 0, %s64
    %s82 = sphi 0, %s82
    %s84 = sphi 0, %s82
    %s85 = sphi 0, %s84
    %s99 = sphi 0, %s85
    %s105 = sphi 0, %s107
    %s108 = sphi 0, %s105
    %s109 = sphi 0, %s108
    %s125 = sphi 0, %s109
    %s129 = sphi 0, %s129
    %s131 = sphi 0, %s129
    %s132 = sphi 0, %s131
    %s146 = sphi 0, %s132
    %s150 = sphi 0, %s150
    %s152 = sphi 0, %s150
    %s153 = sphi 0, %s152
    %s167 = sphi 0, %s153
    %s171 = sphi 0, %s171
    %s173 = sphi 0, %s171
    %s174 = sphi 0, %s173
    %s188 = sphi 0, %s174
    %s194 = sphi 0, %s196
    %s197 = sphi 0, %s194
    %s198 = sphi 0, %s197
    %s214 = sphi 0, %s198
  $region4: #{soft_q_twin_forward.5} parent=0 // loop_header_branch
    %16 = sbr.rel (%p14) target = $region8
  $region5: #{soft_q_twin_forward.5} parent=0 // loop_body
    %s18 = ssub.s32 %s13, 1
    %s19 = ssub.s32 %s13, 2
    %s26 = sadd.s32 1, %s21
    %p27 = scmp.ge.s32.totalorder %s26, 11
    %s28 = scalar_select %p27, 0, %s26
    %s29 = sadd.s32 1, %s20
    %s30 = scalar_select %p27, %s29, %s20
    %p31 = scmp.ge.s32.totalorder %s30, 1
    %s32 = scalar_select %p31, 0, %s30
    %s33 = ssub.s32 %s21, %s28
    %s34 = ssub.s32 %s20, %s32
    %s35 = sor.u32 %s33, %s34
    %p36 = scmp.eq.s32.totalorder %s35, 0
    %s38 = sadd.s32 %s37, 1
    %s39 = scalar_select %p36, %s37, %s38
    %p42 = pneg %p36
    %p43 = scmp.eq.s32.totalorder %s13, 10
    %p44 = por %p42, %p43
    %p45 = scmp.ne.s32.totalorder %s37, %s40
    %p46 = scmp.eq.s32.totalorder %s13, 0
    %p47 = por %p45, %p46
    %p48 = scmp.ne.s32.totalorder %s37, %s40
    %p49 = scmp.eq.s32.totalorder %s18, 10
    %p50 = por %p48, %p49
    %p51 = scmp.ne.s32.totalorder %s40, %s41
    %p52 = scmp.eq.s32.totalorder %s18, 0
    %p53 = por %p51, %p52
    %p54 = scmp.ne.s32.totalorder %s40, %s41
    %p55 = scmp.eq.s32.totalorder %s19, 10
    %p56 = por %p54, %p55
    %p58 = scmp.ne.s32.totalorder %s41, %s57
    %p59 = scmp.eq.s32.totalorder %s19, 0
    %p60 = por %p58, %p59
    %s62 = sadd.s32 %s61, 1
    %p65 = scmp.eq.s32.totalorder %s13, 10
    %p66 = scmp.ne.s32.totalorder %s61, %s63
    %p67 = scmp.eq.s32.totalorder %s13, 0
    %p68 = por %p66, %p67
    %p69 = scmp.ne.s32.totalorder %s61, %s63
    %p70 = scmp.eq.s32.totalorder %s18, 10
    %p71 = por %p69, %p70
    %p72 = scmp.ne.s32.totalorder %s63, %s64
    %p73 = scmp.eq.s32.totalorder %s18, 0
    %p74 = por %p72, %p73
    %p75 = scmp.ne.s32.totalorder %s63, %s64
    %p76 = scmp.eq.s32.totalorder %s19, 10
    %p77 = por %p75, %p76
    %p79 = scmp.ne.s32.totalorder %s64, %s78
    %p80 = scmp.eq.s32.totalorder %s19, 0
    %p81 = por %p79, %p80
    %s83 = sadd.s32 %s82, 1
    %p86 = scmp.eq.s32.totalorder %s13, 10
    %p87 = scmp.ne.s32.totalorder %s82, %s84
    %p88 = scmp.eq.s32.totalorder %s13, 0
    %p89 = por %p87, %p88
    %p90 = scmp.ne.s32.totalorder %s82, %s84
    %p91 = scmp.eq.s32.totalorder %s18, 10
    %p92 = por %p90, %p91
    %p93 = scmp.ne.s32.totalorder %s84, %s85
    %p94 = scmp.eq.s32.totalorder %s18, 0
    %p95 = por %p93, %p94
    %p96 = scmp.ne.s32.totalorder %s84, %s85
    %p97 = scmp.eq.s32.totalorder %s19, 10
    %p98 = por %p96, %p97
    %p100 = scmp.ne.s32.totalorder %s85, %s99
    %p101 = scmp.eq.s32.totalorder %s19, 0
    %p102 = por %p100, %p101
    %s103 = ssub.s32 %s21, %s28
    %p104 = scmp.eq.s32.totalorder %s103, 0
    %s106 = sadd.s32 %s105, 1
    %s107 = scalar_select %p104, %s105, %s106
    %p110 = pneg %p104
    %p111 = scmp.eq.s32.totalorder %s13, 10
    %p112 = por %p110, %p111
    %p113 = scmp.ne.s32.totalorder %s105, %s108
    %p114 = scmp.eq.s32.totalorder %s13, 0
    %p115 = por %p113, %p114
    %p116 = scmp.ne.s32.totalorder %s105, %s108
    %p117 = scmp.eq.s32.totalorder %s18, 10
    %p118 = por %p116, %p117
    %p119 = scmp.ne.s32.totalorder %s108, %s109
    %p120 = scmp.eq.s32.totalorder %s18, 0
    %p121 = por %p119, %p120
    %p122 = scmp.ne.s32.totalorder %s108, %s109
    %p123 = scmp.eq.s32.totalorder %s19, 10
    %p124 = por %p122, %p123
    %p126 = scmp.ne.s32.totalorder %s109, %s125
    %p127 = scmp.eq.s32.totalorder %s19, 0
    %p128 = por %p126, %p127
    %s130 = sadd.s32 %s129, 1
    %p133 = scmp.eq.s32.totalorder %s13, 10
    %p134 = scmp.ne.s32.totalorder %s129, %s131
    %p135 = scmp.eq.s32.totalorder %s13, 0
    %p136 = por %p134, %p135
    %p137 = scmp.ne.s32.totalorder %s129, %s131
    %p138 = scmp.eq.s32.totalorder %s18, 10
    %p139 = por %p137, %p138
    %p140 = scmp.ne.s32.totalorder %s131, %s132
    %p141 = scmp.eq.s32.totalorder %s18, 0
    %p142 = por %p140, %p141
    %p143 = scmp.ne.s32.totalorder %s131, %s132
    %p144 = scmp.eq.s32.totalorder %s19, 10
    %p145 = por %p143, %p144
    %p147 = scmp.ne.s32.totalorder %s132, %s146
    %p148 = scmp.eq.s32.totalorder %s19, 0
    %p149 = por %p147, %p148
    %s151 = sadd.s32 %s150, 1
    %p154 = scmp.eq.s32.totalorder %s13, 10
    %p155 = scmp.ne.s32.totalorder %s150, %s152
    %p156 = scmp.eq.s32.totalorder %s13, 0
    %p157 = por %p155, %p156
    %p158 = scmp.ne.s32.totalorder %s150, %s152
    %p159 = scmp.eq.s32.totalorder %s18, 10
    %p160 = por %p158, %p159
    %p161 = scmp.ne.s32.totalorder %s152, %s153
    %p162 = scmp.eq.s32.totalorder %s18, 0
    %p163 = por %p161, %p162
    %p164 = scmp.ne.s32.totalorder %s152, %s153
    %p165 = scmp.eq.s32.totalorder %s19, 10
    %p166 = por %p164, %p165
    %p168 = scmp.ne.s32.totalorder %s153, %s167
    %p169 = scmp.eq.s32.totalorder %s19, 0
    %p170 = por %p168, %p169
    %s172 = sadd.s32 %s171, 1
    %p175 = scmp.eq.s32.totalorder %s13, 10
    %p176 = scmp.ne.s32.totalorder %s171, %s173
    %p177 = scmp.eq.s32.totalorder %s13, 0
    %p178 = por %p176, %p177
    %p179 = scmp.ne.s32.totalorder %s171, %s173
    %p180 = scmp.eq.s32.totalorder %s18, 10
    %p181 = por %p179, %p180
    %p182 = scmp.ne.s32.totalorder %s173, %s174
    %p183 = scmp.eq.s32.totalorder %s18, 0
    %p184 = por %p182, %p183
    %p185 = scmp.ne.s32.totalorder %s173, %s174
    %p186 = scmp.eq.s32.totalorder %s19, 10
    %p187 = por %p185, %p186
    %p189 = scmp.ne.s32.totalorder %s174, %s188
    %p190 = scmp.eq.s32.totalorder %s19, 0
    %p191 = por %p189, %p190
    %s192 = ssub.s32 %s20, %s32
    %p193 = scmp.eq.s32.totalorder %s192, 0
    %s195 = sadd.s32 %s194, 1
    %s196 = scalar_select %p193, %s194, %s195
    %p199 = pneg %p193
    %p200 = scmp.eq.s32.totalorder %s13, 10
    %p201 = por %p199, %p200
    %p202 = scmp.ne.s32.totalorder %s194, %s197
    %p203 = scmp.eq.s32.totalorder %s13, 0
    %p204 = por %p202, %p203
    %p205 = scmp.ne.s32.totalorder %s194, %s197
    %p206 = scmp.eq.s32.totalorder %s18, 10
    %p207 = por %p205, %p206
    %p208 = scmp.ne.s32.totalorder %s197, %s198
    %p209 = scmp.eq.s32.totalorder %s18, 0
    %p210 = por %p208, %p209
    %p211 = scmp.ne.s32.totalorder %s197, %s198
    %p212 = scmp.eq.s32.totalorder %s19, 10
    %p213 = por %p211, %p212
    %p215 = scmp.ne.s32.totalorder %s198, %s214
    %p216 = scmp.eq.s32.totalorder %s19, 0
    %p217 = por %p215, %p216
    %p218 = scmp.le.s32.totalorder 1, %s13
    %p219 = scmp.lt.s32.totalorder %s13, 12
    %p220 = pnand %p218, %p219
    %p221 = pneg %p220
    // Predicated region
    $region9: #{soft_q_twin_forward.5} parent=5 // pred_check
      _
    $region10: #{soft_q_twin_forward.5} parent=5 // pred_check_branch
      %223 = sbr.rel (%p220) target = $region12
    $region11: #{soft_q_twin_forward.5} parent=5 // pred_region
      %s224 = ssub.s32 %s13, 1
      // Predicated region
      $region13: #{soft_q_twin_forward.5} parent=11 // pred_check
        %p225 = pneg %p74
      $region14: #{soft_q_twin_forward.5} parent=11 // pred_check_branch
        %227 = sbr.rel (%p225) target = $region16
      $region15: #{soft_q_twin_forward.5} parent=11 // pred_region
        _
      $region16: #{soft_q_twin_forward.5} parent=11 // pred_fallthru
        _
      // Predicated region
      $region17: #{soft_q_twin_forward.5} parent=11 // pred_check
        %p228 = pneg %p95
      $region18: #{soft_q_twin_forward.5} parent=11 // pred_check_branch
        %230 = sbr.rel (%p228) target = $region20
      $region19: #{soft_q_twin_forward.5} parent=11 // pred_region
        _
      $region20: #{soft_q_twin_forward.5} parent=11 // pred_fallthru
        _
      // Predicated region
      $region21: #{soft_q_twin_forward.5} parent=11 // pred_check
        %p231 = pneg %p142
      $region22: #{soft_q_twin_forward.5} parent=11 // pred_check_branch
        %233 = sbr.rel (%p231) target = $region24
      $region23: #{soft_q_twin_forward.5} parent=11 // pred_region
        _
      $region24: #{soft_q_twin_forward.5} parent=11 // pred_fallthru
        _
      // Predicated region
      $region25: #{soft_q_twin_forward.5} parent=11 // pred_check
        %p234 = pneg %p163
      $region26: #{soft_q_twin_forward.5} parent=11 // pred_check_branch
        %236 = sbr.rel (%p234) target = $region28
      $region27: #{soft_q_twin_forward.5} parent=11 // pred_region
        _
      $region28: #{soft_q_twin_forward.5} parent=11 // pred_fallthru
        _
      // Predicated region
      $region29: #{soft_q_twin_forward.5} parent=11 // pred_check
        %p237 = pneg %p184
      $region30: #{soft_q_twin_forward.5} parent=11 // pred_check_branch
        %239 = sbr.rel (%p237) target = $region32
      $region31: #{soft_q_twin_forward.5} parent=11 // pred_region
        _
      $region32: #{soft_q_twin_forward.5} parent=11 // pred_fallthru
        _
    $region12: #{soft_q_twin_forward.5} parent=5 // pred_fallthru
      _
    %p240 = scmp.lt.s32.totalorder %s13, 11
    // Predicated region
    $region33: #{soft_q_twin_forward.5} parent=5 // pred_check
      %p241 = pneg %p240
    $region34: #{soft_q_twin_forward.5} parent=5 // pred_check_branch
      %243 = sbr.rel (%p241) target = $region36
    $region35: #{soft_q_twin_forward.5} parent=5 // pred_region
      // Predicated region
      $region37: #{soft_q_twin_forward.5} parent=35 // pred_check
        %p244 = pneg %p47
      $region38: #{soft_q_twin_forward.5} parent=35 // pred_check_branch
        %246 = sbr.rel (%p244) target = $region40
      $region39: #{soft_q_twin_forward.5} parent=35 // pred_region
        %s247 = smul.u32 11, %s21
        %p248 = scmp.lt.s32.totalorder %s247, 120
        %s249 = scalar_select %p248, %s247, 120
        %p250 = scmp.lt.s32.totalorder %s20, 0
        %s251 = scalar_select %p250, %s20, 0
        %s252 = smul.addr %s251, 5
        %s253 = smul.addr %s249, 5
        %s254 = sadd.s32 %s252, %s253
        %s255 = scalar_lea.vmem %s0, %s254
        %s256 = smul.u32 11, %s21
      $region40: #{soft_q_twin_forward.5} parent=35 // pred_fallthru
        _
      // Predicated region
      $region41: #{soft_q_twin_forward.5} parent=35 // pred_check
        %p257 = pneg %p115
      $region42: #{soft_q_twin_forward.5} parent=35 // pred_check_branch
        %259 = sbr.rel (%p257) target = $region44
      $region43: #{soft_q_twin_forward.5} parent=35 // pred_region
        %s260 = smul.u32 11, %s21
        %p261 = scmp.lt.s32.totalorder %s260, 120
        %s262 = scalar_select %p261, %s260, 120
        %s263 = smul.addr %s262, 8
        %s264 = smul.addr %s263, 4
        %s265 = scalar_lea.vmem %s3, %s264
        %s266 = smul.u32 11, %s21
      $region44: #{soft_q_twin_forward.5} parent=35 // pred_fallthru
        _
    $region36: #{soft_q_twin_forward.5} parent=5 // pred_fallthru
      _
    %p267 = scmp.le.s32.totalorder 1, %s13
    %p268 = scmp.lt.s32.totalorder %s13, 12
    %p269 = pnand %p267, %p268
    %p270 = pneg %p269
    // Predicated region
    $region45: #{soft_q_twin_forward.5} parent=5 // pred_check
      _
    $region46: #{soft_q_twin_forward.5} parent=5 // pred_check_branch
      %272 = sbr.rel (%p269) target = $region48
    $region47: #{soft_q_twin_forward.5} parent=5 // pred_region
      %s273 = ssub.s32 %s13, 1
      %s274 = smul.u32 11, %s23
      %p275 = scmp.lt.s32.totalorder %s274, 120
      %s276 = scalar_select %p275, %s274, 120
      %p277 = scmp.lt.s32.totalorder %s22, 0
      %s278 = scalar_select %p277, %s22, 0
      %s279 = smul.addr %s278, 5
      %s280 = smul.addr %s276, 5
      %s281 = sadd.s32 %s279, %s280
      %s282 = scalar_lea.vmem %s0, %s281
      %p283 = pneg %p53
      %p284 = pneg %p50
      %p285 = pneg %p74
      %p286 = pneg %p71
      %p287 = pneg %p95
      %p288 = pneg %p92
      %s289 = smul.u32 11, %s23
      %p290 = scmp.lt.s32.totalorder %s289, 120
      %s291 = scalar_select %p290, %s289, 120
      %s292 = smul.addr %s291, 8
      %s293 = smul.addr %s292, 4
      %s294 = scalar_lea.vmem %s3, %s293
      %p295 = pneg %p121
      %p296 = pneg %p118
      %p297 = pneg %p142
      %p298 = pneg %p139
      %p299 = pneg %p163
      %p300 = pneg %p160
      %p301 = pneg %p184
      %p302 = pneg %p181
      %p303 = pneg %p210
      %p304 = pneg %p207
      %p305 = scmp.lt.s32.totalorder %s22, 0
      %s306 = scalar_select %p305, %s22, 0
      %s307 = smul.addr %s306, 2
      %s308 = scalar_lea.vmem %s7, %s307
      %s309 = smul.u32 11, %s23
      %p310 = scmp.lt.s32.totalorder %s309, 120
      %s311 = scalar_select %p310, %s309, 120
      %p312 = scmp.lt.s32.totalorder %s22, 0
      %s313 = scalar_select %p312, %s22, 0
      %s314 = smul.addr %s313, 5
      %s315 = smul.addr %s311, 5
      %s316 = sadd.s32 %s314, %s315
      %s317 = scalar_lea.vmem %s0, %s316
      %s318 = smul.u32 11, %s23
      %s319 = smul.u32 11, %s23
      %p320 = scmp.lt.s32.totalorder %s319, 120
      %s321 = scalar_select %p320, %s319, 120
      %s322 = smul.addr %s321, 8
      %s323 = smul.addr %s322, 4
      %s324 = scalar_lea.vmem %s3, %s323
      %s325 = smul.u32 11, %s23
      %p326 = scmp.lt.s32.totalorder %s22, 0
      %s327 = scalar_select %p326, %s22, 0
      %s328 = smul.addr %s327, 2
      %s329 = scalar_lea.vmem %s7, %s328
      %p331 = scmp.eq.s32.totalorder %s23, 0
      // Predicated region
      $region49: #{soft_q_twin_forward.5} parent=47 // pred_check
        %p332 = pneg %p331
      $region50: #{soft_q_twin_forward.5} parent=47 // pred_check_branch
        %334 = sbr.rel (%p332) target = $region52
      $region51: #{soft_q_twin_forward.5} parent=47 // pred_region
        %335 = vst [vmem:[#allocation2] sm:$0x3] 0.0
      $region52: #{soft_q_twin_forward.5} parent=47 // pred_fallthru
        _
      %v336 = vld [vmem:[#allocation2] sm:$0x3]
      %v337 = vld [vmem:[%s317] sm:$0x1f]
      %v338 = vld [vmem:[%s1] sm:$0xf]
      %v339 = vld [vmem:[%s1 + $0x4] sm:$0xf]
      %v340 = vld [vmem:[%s1 + $0x8] sm:$0xf]
      %v341 = vld [vmem:[%s1 + $0xc] sm:$0xf]
      %v342 = vld [vmem:[%s1 + $0x10] sm:$0xf]
      %v343 = vld [vmem:[%s1 + $0x14] sm:$0xf]
      %v344 = vld [vmem:[%s1 + $0x18] sm:$0xf]
      %v345 = vld [vmem:[%s1 + $0x1c] sm:$0xf]
      %v346 = vld [vmem:[%s1 + $0x20] sm:$0xf]
      %v347 = vld [vmem:[%s1 + $0x24] sm:$0xf]
      %v348 = vld [vmem:[%s1 + $0x28] sm:$0xf]
      %v349 = vld [vmem:[%s1 + $0x2c] sm:$0xf]
      %v350 = vld [vmem:[%s1 + $0x30] sm:$0xf]
      %v351 = vld [vmem:[%s1 + $0x34] sm:$0xf]
      %v352 = vld [vmem:[%s1 + $0x38] sm:$0xf]
      %v353 = vld [vmem:[%s1 + $0x3c] sm:$0xf]
      %v354 = vld [vmem:[%s1 + $0x40] sm:$0xf]
      %v355 = vld [vmem:[%s1 + $0x44] sm:$0xf]
      %v356 = vld [vmem:[%s1 + $0x48] sm:$0xf]
      %v357 = vld [vmem:[%s1 + $0x4c] sm:$0xf]
      %v358 = vld [vmem:[%s1 + $0x50] sm:$0xf]
      %v359 = vld [vmem:[%s1 + $0x54] sm:$0xf]
      %v360 = vld [vmem:[%s1 + $0x58] sm:$0xf]
      %v361 = vld [vmem:[%s1 + $0x5c] sm:$0xf]
      %v362 = vld [vmem:[%s1 + $0x60] sm:$0xf]
      %v363 = vld [vmem:[%s1 + $0x64] sm:$0xf]
      %v364 = vld [vmem:[%s1 + $0x68] sm:$0xf]
      %v365 = vld [vmem:[%s1 + $0x6c] sm:$0xf]
      %v366 = vld [vmem:[%s1 + $0x70] sm:$0xf]
      %v367 = vld [vmem:[%s1 + $0x74] sm:$0xf]
      %v368 = vld [vmem:[%s1 + $0x78] sm:$0xf]
      %v369 = vld [vmem:[%s1 + $0x7c] sm:$0xf]
      %v370 = vld [vmem:[%s1 + $0x80] sm:$0xf]
      %v371 = vld [vmem:[%s1 + $0x84] sm:$0xf]
      %v372 = vld [vmem:[%s1 + $0x88] sm:$0xf]
      %v373 = vld [vmem:[%s1 + $0x8c] sm:$0xf]
      %v374 = vld [vmem:[%s1 + $0x90] sm:$0xf]
      %v375 = vld [vmem:[%s1 + $0x94] sm:$0xf]
      %v376 = vld [vmem:[%s1 + $0x98] sm:$0xf]
      %v377 = vld [vmem:[%s1 + $0x9c] sm:$0xf]
      %v378 = vld [vmem:[%s1 + $0xa0] sm:$0xf]
      %v379 = vld [vmem:[%s1 + $0xa4] sm:$0xf]
      %v380 = vld [vmem:[%s1 + $0xa8] sm:$0xf]
      %v381 = vld [vmem:[%s1 + $0xac] sm:$0xf]
      %v382 = vld [vmem:[%s1 + $0xb0] sm:$0xf]
      %v383 = vld [vmem:[%s1 + $0xb4] sm:$0xf]
      %v384 = vld [vmem:[%s1 + $0xb8] sm:$0xf]
      %v385 = vld [vmem:[%s1 + $0xbc] sm:$0xf]
      %v386 = vld [vmem:[%s1 + $0xc0] sm:$0xf]
      %v387 = vld [vmem:[%s1 + $0xc4] sm:$0xf]
      %v388 = vld [vmem:[%s1 + $0xc8] sm:$0xf]
      %v389 = vld [vmem:[%s1 + $0xcc] sm:$0xf]
      %v390 = vld [vmem:[%s1 + $0xd0] sm:$0xf]
      %v391 = vld [vmem:[%s1 + $0xd4] sm:$0xf]
      %v392 = vld [vmem:[%s1 + $0xd8] sm:$0xf]
      %v393 = vld [vmem:[%s1 + $0xdc] sm:$0xf]
      %v394 = vld [vmem:[%s1 + $0xe0] sm:$0xf]
      %v395 = vld [vmem:[%s1 + $0xe4] sm:$0xf]
      %v396 = vld [vmem:[%s1 + $0xe8] sm:$0xf]
      %v397 = vld [vmem:[%s1 + $0xec] sm:$0xf]
      %v398 = vld [vmem:[%s1 + $0xf0] sm:$0xf]
      %v399 = vld [vmem:[%s1 + $0xf4] sm:$0xf]
      %v400 = vld [vmem:[%s1 + $0xf8] sm:$0xf]
      %v401 = vld [vmem:[%s1 + $0xfc] sm:$0xf]
      %v402 = vld [vmem:[%s1 + $0x100] sm:$0xf]
      %v403 = vld [vmem:[%s1 + $0x104] sm:$0xf]
      %v404 = vld [vmem:[%s1 + $0x108] sm:$0xf]
      %v405 = vld [vmem:[%s1 + $0x10c] sm:$0xf]
      %v406 = vld [vmem:[%s1 + $0x110] sm:$0xf]
      %v407 = vld [vmem:[%s1 + $0x114] sm:$0xf]
      %v408 = vld [vmem:[%s1 + $0x118] sm:$0xf]
      %v409 = vld [vmem:[%s1 + $0x11c] sm:$0xf]
      %v410 = vld [vmem:[%s2] sm:$0x1]
      %v412 = vlaneseq
      %v413 = vshrl.u32 %v412, 7
      %v414 = vsub.s32 0, %v413
      %v415 = vrot.slane %v410, %v414
      %v418 = vcombine.high %v337, %v337
      %v420 = vunpack.c.l.s4 1966171168
      %v421 = vunpack.c.0.s8 %v420
      %v422 = vlaneseq
      %v423 = vshrl.u32 %v422, 7
      %v424 = vsub.s32 %v421, %v423
      %v425 = vrot.slane %v337, %v424
      %v427 = vunpack.c.l.s4 1966171168
      %v428 = vunpack.c.0.s8 %v427
      %v429 = vlaneseq
      %v430 = vshrl.u32 %v429, 7
      %v431 = vsub.s32 %v428, %v430
      %v432 = vrot.slane %v418, %v431
      %v433 = vcombine.high %v425, %v425
      %v435 = vunpack.c.l.s4 1966171168
      %v436 = vunpack.c.0.s8 %v435
      %v437 = vlaneseq
      %v438 = vshrl.u32 %v437, 7
      %v439 = vsub.s32 %v436, %v438
      %v440 = vrot.slane %v425, %v439
      %v442 = vunpack.c.l.s4 1966171168
      %v443 = vunpack.c.0.s8 %v442
      %v444 = vlaneseq
      %v445 = vshrl.u32 %v444, 7
      %v446 = vsub.s32 %v443, %v445
      %v447 = vrot.slane %v432, %v446
      %v449 = vunpack.c.l.s4 1966171168
      %v450 = vunpack.c.0.s8 %v449
      %v451 = vlaneseq
      %v452 = vshrl.u32 %v451, 7
      %v453 = vsub.s32 %v450, %v452
      %v454 = vrot.slane %v433, %v453
      %v455 = vcombine.high %v440, %v440
      %v456 = vcombine.high %v454, %v454
      %v533 = vunpack.c.l.b16 %v338
      %v534 = vunpack.c.l.b16 %v339
      %v535 = vunpack.c.l.b16 %v340
      %v536 = vunpack.c.l.b16 %v341
      %v537 = vunpack.c.l.b16 %v342
      %v538 = vunpack.c.l.b16 %v343
      %v539 = vunpack.c.l.b16 %v344
      %v540 = vunpack.c.l.b16 %v345
      %v541 = vunpack.c.l.b16 %v346
      %v542 = vunpack.c.l.b16 %v347
      %v543 = vunpack.c.l.b16 %v348
      %v544 = vunpack.c.l.b16 %v349
      %v545 = vunpack.c.l.b16 %v350
      %v546 = vunpack.c.l.b16 %v351
      %v547 = vunpack.c.l.b16 %v352
      %v548 = vunpack.c.l.b16 %v353
      %v549 = vunpack.c.l.b16 %v354
      %v550 = vunpack.c.l.b16 %v355
      %v551 = vunpack.c.l.b16 %v356
      %v552 = vunpack.c.l.b16 %v357
      %v553 = vunpack.c.l.b16 %v358
      %v554 = vunpack.c.l.b16 %v359
      %v555 = vunpack.c.l.b16 %v360
      %v556 = vunpack.c.l.b16 %v361
      %v557 = vunpack.c.l.b16 %v362
      %v558 = vunpack.c.l.b16 %v363
      %v559 = vunpack.c.l.b16 %v364
      %v560 = vunpack.c.l.b16 %v365
      %v561 = vunpack.c.l.b16 %v366
      %v562 = vunpack.c.l.b16 %v367
      %v563 = vunpack.c.l.b16 %v368
      %v564 = vunpack.c.l.b16 %v369
      %v565 = vunpack.c.l.b16 %v370
      %v566 = vunpack.c.l.b16 %v371
      %v567 = vunpack.c.l.b16 %v372
      %v568 = vunpack.c.l.b16 %v373
      %v569 = vunpack.c.l.b16 %v374
      %v570 = vunpack.c.l.b16 %v375
      %v571 = vunpack.c.l.b16 %v376
      %v572 = vunpack.c.l.b16 %v377
      %v573 = vunpack.c.l.b16 %v378
      %v574 = vunpack.c.l.b16 %v379
      %v575 = vunpack.c.l.b16 %v380
      %v576 = vunpack.c.l.b16 %v381
      %v577 = vunpack.c.l.b16 %v382
      %v578 = vunpack.c.l.b16 %v383
      %v579 = vunpack.c.l.b16 %v384
      %v580 = vunpack.c.l.b16 %v385
      %v581 = vunpack.c.l.b16 %v386
      %v582 = vunpack.c.l.b16 %v387
      %v583 = vunpack.c.l.b16 %v388
      %v584 = vunpack.c.l.b16 %v389
      %v585 = vunpack.c.l.b16 %v390
      %v586 = vunpack.c.l.b16 %v391
      %v587 = vunpack.c.l.b16 %v392
      %v588 = vunpack.c.l.b16 %v393
      %v589 = vunpack.c.l.b16 %v394
      %v590 = vunpack.c.l.b16 %v395
      %v591 = vunpack.c.l.b16 %v396
      %v592 = vunpack.c.l.b16 %v397
      %v593 = vunpack.c.l.b16 %v398
      %v594 = vunpack.c.l.b16 %v399
      %v595 = vunpack.c.l.b16 %v400
      %v596 = vunpack.c.l.b16 %v401
      %v597 = vunpack.c.l.b16 %v402
      %v598 = vunpack.c.l.b16 %v403
      %v599 = vunpack.c.l.b16 %v404
      %v600 = vunpack.c.l.b16 %v405
      %v601 = vunpack.c.l.b16 %v406
      %v602 = vunpack.c.l.b16 %v407
      %v603 = vunpack.c.l.b16 %v408
      %v604 = vunpack.c.l.b16 %v409
      %v605 = vpack.c.b16 %v534, %v533
      %v606 = vpack.c.b16 %v536, %v535
      %v607 = vpack.c.b16 %v538, %v537
      %v608 = vpack.c.b16 %v540, %v539
      %v609 = vpack.c.b16 %v542, %v541
      %v610 = vpack.c.b16 %v544, %v543
      %v611 = vpack.c.b16 %v546, %v545
      %v612 = vpack.c.b16 %v548, %v547
      %v613 = vpack.c.b16 %v550, %v549
      %v614 = vpack.c.b16 %v552, %v551
      %v615 = vpack.c.b16 %v554, %v553
      %v616 = vpack.c.b16 %v556, %v555
      %v617 = vpack.c.b16 %v558, %v557
      %v618 = vpack.c.b16 %v560, %v559
      %v619 = vpack.c.b16 %v562, %v561
      %v620 = vpack.c.b16 %v564, %v563
      %v621 = vpack.c.b16 %v566, %v565
      %v622 = vpack.c.b16 %v568, %v567
      %v623 = vpack.c.b16 %v570, %v569
      %v624 = vpack.c.b16 %v572, %v571
      %v625 = vpack.c.b16 %v574, %v573
      %v626 = vpack.c.b16 %v576, %v575
      %v627 = vpack.c.b16 %v578, %v577
      %v628 = vpack.c.b16 %v580, %v579
      %v629 = vpack.c.b16 %v582, %v581
      %v630 = vpack.c.b16 %v584, %v583
      %v631 = vpack.c.b16 %v586, %v585
      %v632 = vpack.c.b16 %v588, %v587
      %v633 = vpack.c.b16 %v590, %v589
      %v634 = vpack.c.b16 %v592, %v591
      %v635 = vpack.c.b16 %v594, %v593
      %v636 = vpack.c.b16 %v596, %v595
      %v637 = vpack.c.b16 %v598, %v597
      %v638 = vpack.c.b16 %v600, %v599
      %v639 = vpack.c.b16 %v602, %v601
      %v640 = vpack.c.b16 %v604, %v603
      %vm677 = vcmask 523264
      %v679 = vsel %vm677, %v447, 0
      %681 = vmatprep.subr.bf16.mxu0 0
      %682 = vmatpush1.bf16.msra.mxu0 %v605
      %683 = vmatprep.subr.bf16.mxu0 0
      %684 = vmatpush1.bf16.msra.mxu0 %v606
      %685 = vmatprep.subr.bf16.mxu0 0
      %686 = vmatpush1.bf16.msra.mxu0 %v607
      %687 = vmatprep.subr.bf16.mxu0 0
      %688 = vmatpush1.bf16.msra.mxu0 %v608
      %689 = vmatprep.subr.bf16.mxu0 0
      %690 = vmatpush1.bf16.msra.mxu0 %v609
      %691 = vmatprep.subr.bf16.mxu0 0
      %692 = vmatpush1.bf16.msra.mxu0 %v610
      %693 = vmatprep.subr.bf16.mxu0 0
      %694 = vmatpush1.bf16.msra.mxu0 %v611
      %695 = vmatprep.subr.bf16.mxu0 0
      %696 = vmatpush1.bf16.msra.mxu0 %v612
      %697 = vmatprep.subr.bf16.mxu0 0
      %698 = vmatpush1.bf16.msra.mxu0 %v613
      %699 = vmatprep.subr.bf16.mxu0 0
      %700 = vmatpush1.bf16.msra.mxu0 %v614
      %701 = vmatprep.subr.bf16.mxu0 0
      %702 = vmatpush1.bf16.msra.mxu0 %v615
      %703 = vmatprep.subr.bf16.mxu0 0
      %704 = vmatpush1.bf16.msra.mxu0 %v616
      %705 = vmatprep.subr.bf16.mxu0 0
      %706 = vmatpush1.bf16.msra.mxu0 %v617
      %707 = vmatprep.subr.bf16.mxu0 0
      %708 = vmatpush1.bf16.msra.mxu0 %v618
      %709 = vmatprep.subr.bf16.mxu0 0
      %710 = vmatpush1.bf16.msra.mxu0 %v619
      %711 = vmatprep.subr.bf16.mxu0 0
      %712 = vmatpush1.bf16.msra.mxu0 %v620
      %713 = vmatprep.mubr.bf16.mxu0 %v454
      %714 = vmatmul.mubr.bf16.gmra.mrb[0].mxu0 %v440
      %v715 = vpop.f32.mrb[0].mxu0
      %v716 = vadd.f32 %v415, %v715
      %v717 = vpop.f32.mrb[0].mxu0
      %v718 = vpop.f32.mrb[0].mxu0
      %v719 = vpop.f32.mrb[0].mxu0
      %720 = vdwg.mxu0
      %721 = vmatprep.subr.bf16.mxu0 0
      %722 = vmatpush1.bf16.msra.mxu0 %v621
      %723 = vmatprep.subr.bf16.mxu0 0
      %724 = vmatpush1.bf16.msra.mxu0 %v622
      %725 = vmatprep.subr.bf16.mxu0 0
      %726 = vmatpush1.bf16.msra.mxu0 %v623
      %727 = vmatprep.subr.bf16.mxu0 0
      %728 = vmatpush1.bf16.msra.mxu0 %v624
      %729 = vmatprep.subr.bf16.mxu0 0
      %730 = vmatpush1.bf16.msra.mxu0 %v625
      %731 = vmatprep.subr.bf16.mxu0 0
      %732 = vmatpush1.bf16.msra.mxu0 %v626
      %733 = vmatprep.subr.bf16.mxu0 0
      %734 = vmatpush1.bf16.msra.mxu0 %v627
      %735 = vmatprep.subr.bf16.mxu0 0
      %736 = vmatpush1.bf16.msra.mxu0 %v628
      %737 = vmatprep.subr.bf16.mxu0 0
      %738 = vmatpush1.bf16.msra.mxu0 %v629
      %739 = vmatprep.subr.bf16.mxu0 0
      %740 = vmatpush1.bf16.msra.mxu0 %v630
      %741 = vmatprep.subr.bf16.mxu0 0
      %742 = vmatpush1.bf16.msra.mxu0 %v631
      %743 = vmatprep.subr.bf16.mxu0 0
      %744 = vmatpush1.bf16.msra.mxu0 %v632
      %745 = vmatprep.subr.bf16.mxu0 0
      %746 = vmatpush1.bf16.msra.mxu0 %v633
      %747 = vmatprep.subr.bf16.mxu0 0
      %748 = vmatpush1.bf16.msra.mxu0 %v634
      %749 = vmatprep.subr.bf16.mxu0 0
      %750 = vmatpush1.bf16.msra.mxu0 %v635
      %751 = vmatprep.subr.bf16.mxu0 0
      %752 = vmatpush1.bf16.msra.mxu0 %v636
      %753 = vmatprep.mubr.bf16.mxu0 %v456
      %754 = vmatmul.mubr.bf16.gmra.mrb[0].mxu0 %v455
      %v755 = vpop.f32.mrb[0].mxu0
      %v756 = vadd.f32 %v716, %v755
      %v757 = vpop.f32.mrb[0].mxu0
      %v758 = vpop.f32.mrb[0].mxu0
      %v759 = vpop.f32.mrb[0].mxu0
      %760 = vdwg.mxu0
      %761 = vmatprep.subr.bf16.mxu0 0
      %762 = vmatpush1.bf16.msra.mxu0 %v637
      %763 = vmatprep.subr.bf16.mxu0 0
      %764 = vmatpush1.bf16.msra.mxu0 %v638
      %765 = vmatprep.subr.bf16.mxu0 0
      %766 = vmatpush1.bf16.msra.mxu0 %v639
      %767 = vmatprep.subr.bf16.mxu0 0
      %768 = vmatpush1.bf16.msra.mxu0 %v640
      %769 = vmatprep.subr.bf16.mxu0 0
      %770 = vmatpush1.bf16.msra.mxu0 0
      %771 = vmatprep.subr.bf16.mxu0 0
      %772 = vmatpush1.bf16.msra.mxu0 0
      %773 = vmatprep.subr.bf16.mxu0 0
      %774 = vmatpush1.bf16.msra.mxu0 0
      %775 = vmatprep.subr.bf16.mxu0 0
      %776 = vmatpush1.bf16.msra.mxu0 0
      %777 = vmatprep.subr.bf16.mxu0 0
      %778 = vmatpush1.bf16.msra.mxu0 0
      %779 = vmatprep.subr.bf16.mxu0 0
      %780 = vmatpush1.bf16.msra.mxu0 0
      %781 = vmatprep.subr.bf16.mxu0 0
      %782 = vmatpush1.bf16.msra.mxu0 0
      %783 = vmatprep.subr.bf16.mxu0 0
      %784 = vmatpush1.bf16.msra.mxu0 0
      %785 = vmatprep.subr.bf16.mxu0 0
      %786 = vmatpush1.bf16.msra.mxu0 0
      %787 = vmatprep.subr.bf16.mxu0 0
      %788 = vmatpush1.bf16.msra.mxu0 0
      %789 = vmatprep.subr.bf16.mxu0 0
      %790 = vmatpush1.bf16.msra.mxu0 0
      %791 = vmatprep.subr.bf16.mxu0 0
      %792 = vmatpush1.bf16.msra.mxu0 0
      %793 = vmatprep.mubr.bf16.mxu0 0
      %794 = vmatmul.mubr.bf16.gmra.mrb[0].mxu0 %v679
      %v795 = vpop.f32.mrb[0].mxu0
      %v796 = vadd.f32 %v756, %v795
      %v797 = vpop.f32.mrb[0].mxu0
      %v798 = vpop.f32.mrb[0].mxu0
      %v799 = vpop.f32.mrb[0].mxu0
      %800 = vdwg.mxu0
      %v801 = vmax.f32 %v796, 0.0
      %v802 = vpack.c.bf16 %v801, %v801
      %v803 = vld [vmem:[%s324] sm:$0xf]
      %v804 = vld [vmem:[%s324 + $0x4] sm:$0xf]
      %v805 = vld [vmem:[%s324 + $0x8] sm:$0xf]
      %v806 = vld [vmem:[%s324 + $0xc] sm:$0xf]
      %v807 = vld [vmem:[%s324 + $0x10] sm:$0xf]
      %v808 = vld [vmem:[%s324 + $0x14] sm:$0xf]
      %v809 = vld [vmem:[%s324 + $0x18] sm:$0xf]
      %v810 = vld [vmem:[%s324 + $0x1c] sm:$0xf]
      %v819 = vunpack.c.l.b16 %v803
      %v820 = vunpack.c.l.b16 %v804
      %v821 = vunpack.c.l.b16 %v805
      %v822 = vunpack.c.l.b16 %v806
      %v823 = vunpack.c.l.b16 %v807
      %v824 = vunpack.c.l.b16 %v808
      %v825 = vunpack.c.l.b16 %v809
      %v826 = vunpack.c.l.b16 %v810
      %v827 = vpack.c.b16 %v820, %v819
      %v828 = vpack.c.b16 %v822, %v821
      %v829 = vpack.c.b16 %v824, %v823
      %v830 = vpack.c.b16 %v826, %v825
      %v836 = vsel %vm677, %v802, 0
      %838 = vmatprep.subr.bf16.mxu0 0
      %839 = vmatpush1.bf16.msra.mxu0 %v827
      %840 = vmatprep.subr.bf16.mxu0 0
      %841 = vmatpush1.bf16.msra.mxu0 %v828
      %842 = vmatprep.subr.bf16.mxu0 0
      %843 = vmatpush1.bf16.msra.mxu0 %v829
      %844 = vmatprep.subr.bf16.mxu0 0
      %845 = vmatpush1.bf16.msra.mxu0 %v830
      %846 = vmatprep.subr.bf16.mxu0 0
      %847 = vmatpush1.bf16.msra.mxu0 0
      %848 = vmatprep.subr.bf16.mxu0 0
      %849 = vmatpush1.bf16.msra.mxu0 0
      %850 = vmatprep.subr.bf16.mxu0 0
      %851 = vmatpush1.bf16.msra.mxu0 0
      %852 = vmatprep.subr.bf16.mxu0 0
      %853 = vmatpush1.bf16.msra.mxu0 0
      %854 = vmatprep.subr.bf16.mxu0 0
      %855 = vmatpush1.bf16.msra.mxu0 0
      %856 = vmatprep.subr.bf16.mxu0 0
      %857 = vmatpush1.bf16.msra.mxu0 0
      %858 = vmatprep.subr.bf16.mxu0 0
      %859 = vmatpush1.bf16.msra.mxu0 0
      %860 = vmatprep.subr.bf16.mxu0 0
      %861 = vmatpush1.bf16.msra.mxu0 0
      %862 = vmatprep.subr.bf16.mxu0 0
      %863 = vmatpush1.bf16.msra.mxu0 0
      %864 = vmatprep.subr.bf16.mxu0 0
      %865 = vmatpush1.bf16.msra.mxu0 0
      %866 = vmatprep.subr.bf16.mxu0 0
      %867 = vmatpush1.bf16.msra.mxu0 0
      %868 = vmatprep.subr.bf16.mxu0 0
      %869 = vmatpush1.bf16.msra.mxu0 0
      %870 = vmatprep.mubr.bf16.mxu0 0
      %871 = vmatmul.mubr.bf16.gmra.mrb[0].mxu0 %v836
      %v872 = vpop.f32.mrb[0].mxu0
      %v873 = vadd.f32 0.0, %v872
      %v874 = vpop.f32.mrb[0].mxu0
      %v875 = vpop.f32.mrb[0].mxu0
      %v876 = vpop.f32.mrb[0].mxu0
      %877 = vdwg.mxu0
      %v878 = vadd.f32 %v336, %v873
      %s879 = scalar_lea.vmem %s317, 5
      %v880 = vld [vmem:[%s879] sm:$0x1f]
      %v882 = vcombine.high %v880, %v880
      %v884 = vunpack.c.l.s4 1966171168
      %v885 = vunpack.c.0.s8 %v884
      %v886 = vlaneseq
      %v887 = vshrl.u32 %v886, 7
      %v888 = vsub.s32 %v885, %v887
      %v889 = vrot.slane %v880, %v888
      %v891 = vunpack.c.l.s4 1966171168
      %v892 = vunpack.c.0.s8 %v891
      %v893 = vlaneseq
      %v894 = vshrl.u32 %v893, 7
      %v895 = vsub.s32 %v892, %v894
      %v896 = vrot.slane %v882, %v895
      %v897 = vcombine.high %v889, %v889
      %v899 = vunpack.c.l.s4 1966171168
      %v900 = vunpack.c.0.s8 %v899
      %v901 = vlaneseq
      %v902 = vshrl.u32 %v901, 7
      %v903 = vsub.s32 %v900, %v902
      %v904 = vrot.slane %v889, %v903
      %v906 = vunpack.c.l.s4 1966171168
      %v907 = vunpack.c.0.s8 %v906
      %v908 = vlaneseq
      %v909 = vshrl.u32 %v908, 7
      %v910 = vsub.s32 %v907, %v909
      %v911 = vrot.slane %v896, %v910
      %v913 = vunpack.c.l.s4 1966171168
      %v914 = vunpack.c.0.s8 %v913
      %v915 = vlaneseq
      %v916 = vshrl.u32 %v915, 7
      %v917 = vsub.s32 %v914, %v916
      %v918 = vrot.slane %v897, %v917
      %v919 = vcombine.high %v904, %v904
      %v920 = vcombine.high %v918, %v918
      %v926 = vsel %vm677, %v911, 0
      %928 = vmatprep.subr.bf16.mxu0 0
      %929 = vmatpush1.bf16.msra.mxu0 %v605
      %930 = vmatprep.subr.bf16.mxu0 0
      %931 = vmatpush1.bf16.msra.mxu0 %v606
      %932 = vmatprep.subr.bf16.mxu0 0
      %933 = vmatpush1.bf16.msra.mxu0 %v607
      %934 = vmatprep.subr.bf16.mxu0 0
      %935 = vmatpush1.bf16.msra.mxu0 %v608
      %936 = vmatprep.subr.bf16.mxu0 0
      %937 = vmatpush1.bf16.msra.mxu0 %v609
      %938 = vmatprep.subr.bf16.mxu0 0
      %939 = vmatpush1.bf16.msra.mxu0 %v610
      %940 = vmatprep.subr.bf16.mxu0 0
      %941 = vmatpush1.bf16.msra.mxu0 %v611
      %942 = vmatprep.subr.bf16.mxu0 0
      %943 = vmatpush1.bf16.msra.mxu0 %v612
      %944 = vmatprep.subr.bf16.mxu0 0
      %945 = vmatpush1.bf16.msra.mxu0 %v613
      %946 = vmatprep.subr.bf16.mxu0 0
      %947 = vmatpush1.bf16.msra.mxu0 %v614
      %948 = vmatprep.subr.bf16.mxu0 0
      %949 = vmatpush1.bf16.msra.mxu0 %v615
      %950 = vmatprep.subr.bf16.mxu0 0
      %951 = vmatpush1.bf16.msra.mxu0 %v616
      %952 = vmatprep.subr.bf16.mxu0 0
      %953 = vmatpush1.bf16.msra.mxu0 %v617
      %954 = vmatprep.subr.bf16.mxu0 0
      %955 = vmatpush1.bf16.msra.mxu0 %v618
      %956 = vmatprep.subr.bf16.mxu0 0
      %957 = vmatpush1.bf16.msra.mxu0 %v619
      %958 = vmatprep.subr.bf16.mxu0 0
      %959 = vmatpush1.bf16.msra.mxu0 %v620
      %960 = vmatprep.mubr.bf16.mxu0 %v918
      %961 = vmatmul.mubr.bf16.gmra.mrb[0].mxu0 %v904
      %v962 = vpop.f32.mrb[0].mxu0
      %v963 = vadd.f32 %v415, %v962
      %v964 = vpop.f32.mrb[0].mxu0
      %v965 = vpop.f32.mrb[0].mxu0
      %v966 = vpop.f32.mrb[0].mxu0
      %967 = vdwg.mxu0
      %968 = vmatprep.subr.bf16.mxu0 0
      %969 = vmatpush1.bf16.msra.mxu0 %v621
      %970 = vmatprep.subr.bf16.mxu0 0
      %971 = vmatpush1.bf16.msra.mxu0 %v622
      %972 = vmatprep.subr.bf16.mxu0 0
      %973 = vmatpush1.bf16.msra.mxu0 %v623
      %974 = vmatprep.subr.bf16.mxu0 0
      %975 = vmatpush1.bf16.msra.mxu0 %v624
      %976 = vmatprep.subr.bf16.mxu0 0
      %977 = vmatpush1.bf16.msra.mxu0 %v625
      %978 = vmatprep.subr.bf16.mxu0 0
      %979 = vmatpush1.bf16.msra.mxu0 %v626
      %980 = vmatprep.subr.bf16.mxu0 0
      %981 = vmatpush1.bf16.msra.mxu0 %v627
      %982 = vmatprep.subr.bf16.mxu0 0
      %983 = vmatpush1.bf16.msra.mxu0 %v628
      %984 = vmatprep.subr.bf16.mxu0 0
      %985 = vmatpush1.bf16.msra.mxu0 %v629
      %986 = vmatprep.subr.bf16.mxu0 0
      %987 = vmatpush1.bf16.msra.mxu0 %v630
      %988 = vmatprep.subr.bf16.mxu0 0
      %989 = vmatpush1.bf16.msra.mxu0 %v631
      %990 = vmatprep.subr.bf16.mxu0 0
      %991 = vmatpush1.bf16.msra.mxu0 %v632
      %992 = vmatprep.subr.bf16.mxu0 0
      %993 = vmatpush1.bf16.msra.mxu0 %v633
      %994 = vmatprep.subr.bf16.mxu0 0
      %995 = vmatpush1.bf16.msra.mxu0 %v634
      %996 = vmatprep.subr.bf16.mxu0 0
      %997 = vmatpush1.bf16.msra.mxu0 %v635
      %998 = vmatprep.subr.bf16.mxu0 0
      %999 = vmatpush1.bf16.msra.mxu0 %v636
      %1000 = vmatprep.mubr.bf16.mxu0 %v920
      %1001 = vmatmul.mubr.bf16.gmra.mrb[0].mxu0 %v919
      %v1002 = vpop.f32.mrb[0].mxu0
      %v1003 = vadd.f32 %v963, %v1002
      %v1004 = vpop.f32.mrb[0].mxu0
      %v1005 = vpop.f32.mrb[0].mxu0
      %v1006 = vpop.f32.mrb[0].mxu0
      %1007 = vdwg.mxu0
      %1008 = vmatprep.subr.bf16.mxu0 0
      %1009 = vmatpush1.bf16.msra.mxu0 %v637
      %1010 = vmatprep.subr.bf16.mxu0 0
      %1011 = vmatpush1.bf16.msra.mxu0 %v638
      %1012 = vmatprep.subr.bf16.mxu0 0
      %1013 = vmatpush1.bf16.msra.mxu0 %v639
      %1014 = vmatprep.subr.bf16.mxu0 0
      %1015 = vmatpush1.bf16.msra.mxu0 %v640
      %1016 = vmatprep.subr.bf16.mxu0 0
      %1017 = vmatpush1.bf16.msra.mxu0 0
      %1018 = vmatprep.subr.bf16.mxu0 0
      %1019 = vmatpush1.bf16.msra.mxu0 0
      %1020 = vmatprep.subr.bf16.mxu0 0
      %1021 = vmatpush1.bf16.msra.mxu0 0
      %1022 = vmatprep.subr.bf16.mxu0 0
      %1023 = vmatpush1.bf16.msra.mxu0 0
      %1024 = vmatprep.subr.bf16.mxu0 0
      %1025 = vmatpush1.bf16.msra.mxu0 0
      %1026 = vmatprep.subr.bf16.mxu0 0
      %1027 = vmatpush1.bf16.msra.mxu0 0
      %1028 = vmatprep.subr.bf16.mxu0 0
      %1029 = vmatpush1.bf16.msra.mxu0 0
      %1030 = vmatprep.subr.bf16.mxu0 0
      %1031 = vmatpush1.bf16.msra.mxu0 0
      %1032 = vmatprep.subr.bf16.mxu0 0
      %1033 = vmatpush1.bf16.msra.mxu0 0
      %1034 = vmatprep.subr.bf16.mxu0 0
      %1035 = vmatpush1.bf16.msra.mxu0 0
      %1036 = vmatprep.subr.bf16.mxu0 0
      %1037 = vmatpush1.bf16.msra.mxu0 0
      %1038 = vmatprep.subr.bf16.mxu0 0
      %1039 = vmatpush1.bf16.msra.mxu0 0
      %1040 = vmatprep.mubr.bf16.mxu0 0
      %1041 = vmatmul.mubr.bf16.gmra.mrb[0].mxu0 %v926
      %v1042 = vpop.f32.mrb[0].mxu0
      %v1043 = vadd.f32 %v1003, %v1042
      %v1044 = vpop.f32.mrb[0].mxu0
      %v1045 = vpop.f32.mrb[0].mxu0
      %v1046 = vpop.f32.mrb[0].mxu0
      %1047 = vdwg.mxu0
      %v1048 = vmax.f32 %v1043, 0.0
      %v1049 = vpack.c.bf16 %v1048, %v1048
      %s1050 = scalar_lea.vmem %s324, 32
      %v1051 = vld [vmem:[%s1050] sm:$0xf]
      %v1052 = vld [vmem:[%s1050 + $0x4] sm:$0xf]
      %v1053 = vld [vmem:[%s1050 + $0x8] sm:$0xf]
      %v1054 = vld [vmem:[%s1050 + $0xc] sm:$0xf]
      %v1055 = vld [vmem:[%s1050 + $0x10] sm:$0xf]
      %v1056 = vld [vmem:[%s1050 + $0x14] sm:$0xf]
      %v1057 = vld [vmem:[%s1050 + $0x18] sm:$0xf]
      %v1058 = vld [vmem:[%s1050 + $0x1c] sm:$0xf]
      %v1067 = vunpack.c.l.b16 %v1051
      %v1068 = vunpack.c.l.b16 %v1052
      %v1069 = vunpack.c.l.b16 %v1053
      %v1070 = vunpack.c.l.b16 %v1054
      %v1071 = vunpack.c.l.b16 %v1055
      %v1072 = vunpack.c.l.b16 %v1056
      %v1073 = vunpack.c.l.b16 %v1057
      %v1074 = vunpack.c.l.b16 %v1058
      %v1075 = vpack.c.b16 %v1068, %v1067
      %v1076 = vpack.c.b16 %v1070, %v1069
      %v1077 = vpack.c.b16 %v1072, %v1071
      %v1078 = vpack.c.b16 %v1074, %v1073
      %v1084 = vsel %vm677, %v1049, 0
      %1086 = vmatprep.subr.bf16.mxu0 0
      %1087 = vmatpush1.bf16.msra.mxu0 %v1075
      %1088 = vmatprep.subr.bf16.mxu0 0
      %1089 = vmatpush1.bf16.msra.mxu0 %v1076
      %1090 = vmatprep.subr.bf16.mxu0 0
      %1091 = vmatpush1.bf16.msra.mxu0 %v1077
      %1092 = vmatprep.subr.bf16.mxu0 0
      %1093 = vmatpush1.bf16.msra.mxu0 %v1078
      %1094 = vmatprep.subr.bf16.mxu0 0
      %1095 = vmatpush1.bf16.msra.mxu0 0
      %1096 = vmatprep.subr.bf16.mxu0 0
      %1097 = vmatpush1.bf16.msra.mxu0 0
      %1098 = vmatprep.subr.bf16.mxu0 0
      %1099 = vmatpush1.bf16.msra.mxu0 0
      %1100 = vmatprep.subr.bf16.mxu0 0
      %1101 = vmatpush1.bf16.msra.mxu0 0
      %1102 = vmatprep.subr.bf16.mxu0 0
      %1103 = vmatpush1.bf16.msra.mxu0 0
      %1104 = vmatprep.subr.bf16.mxu0 0
      %1105 = vmatpush1.bf16.msra.mxu0 0
      %1106 = vmatprep.subr.bf16.mxu0 0
      %1107 = vmatpush1.bf16.msra.mxu0 0
      %1108 = vmatprep.subr.bf16.mxu0 0
      %1109 = vmatpush1.bf16.msra.mxu0 0
      %1110 = vmatprep.subr.bf16.mxu0 0
      %1111 = vmatpush1.bf16.msra.mxu0 0
      %1112 = vmatprep.subr.bf16.mxu0 0
      %1113 = vmatpush1.bf16.msra.mxu0 0
      %1114 = vmatprep.subr.bf16.mxu0 0
      %1115 = vmatpush1.bf16.msra.mxu0 0
      %1116 = vmatprep.subr.bf16.mxu0 0
      %1117 = vmatpush1.bf16.msra.mxu0 0
      %1118 = vmatprep.mubr.bf16.mxu0 0
      %1119 = vmatmul.mubr.bf16.gmra.mrb[0].mxu0 %v1084
      %v1120 = vpop.f32.mrb[0].mxu0
      %v1121 = vadd.f32 0.0, %v1120
      %v1122 = vpop.f32.mrb[0].mxu0
      %v1123 = vpop.f32.mrb[0].mxu0
      %v1124 = vpop.f32.mrb[0].mxu0
      %1125 = vdwg.mxu0
      %v1126 = vadd.f32 %v878, %v1121
      %s1127 = scalar_lea.vmem %s317, 10
      %v1128 = vld [vmem:[%s1127] sm:$0x1f]
      %v1130 = vcombine.high %v1128, %v1128
      %v1132 = vunpack.c.l.s4 1966171168
      %v1133 = vunpack.c.0.s8 %v1132
      %v1134 = vlaneseq
      %v1135 = vshrl.u32 %v1134, 7
      %v1136 = vsub.s32 %v1133, %v1135
      %v1137 = vrot.slane %v1128, %v1136
      %v1139 = vunpack.c.l.s4 1966171168
      %v1140 = vunpack.c.0.s8 %v1139
      %v1141 = vlaneseq
      %v1142 = vshrl.u32 %v1141, 7
      %v1143 = vsub.s32 %v1140, %v1142
      %v1144 = vrot.slane %v1130, %v1143
      %v1145 = vcombine.high %v1137, %v1137
      %v1147 = vunpack.c.l.s4 1966171168
      %v1148 = vunpack.c.0.s8 %v1147
      %v1149 = vlaneseq
      %v1150 = vshrl.u32 %v1149, 7
      %v1151 = vsub.s32 %v1148, %v1150
      %v1152 = vrot.slane %v1137, %v1151
      %v1154 = vunpack.c.l.s4 1966171168
      %v1155 = vunpack.c.0.s8 %v1154
      %v1156 = vlaneseq
      %v1157 = vshrl.u32 %v1156, 7
      %v1158 = vsub.s32 %v1155, %v1157
      %v1159 = vrot.slane %v1144, %v1158
      %v1161 = vunpack.c.l.s4 1966171168
      %v1162 = vunpack.c.0.s8 %v1161
      %v1163 = vlaneseq
      %v1164 = vshrl.u32 %v1163, 7
      %v1165 = vsub.s32 %v1162, %v1164
      %v1166 = vrot.slane %v1145, %v1165
      %v1167 = vcombine.high %v1152, %v1152
      %v1168 = vcombine.high %v1166, %v1166
      %v1174 = vsel %vm677, %v1159, 0
      %1176 = vmatprep.subr.bf16.mxu0 0
      %1177 = vmatpush1.bf16.msra.mxu0 %v605
      %1178 = vmatprep.subr.bf16.mxu0 0
      %1179 = vmatpush1.bf16.msra.mxu0 %v606
      %1180 = vmatprep.subr.bf16.mxu0 0
      %1181 = vmatpush1.bf16.msra.mxu0 %v607
      %1182 = vmatprep.subr.bf16.mxu0 0
      %1183 = vmatpush1.bf16.msra.mxu0 %v608
      %1184 = vmatprep.subr.bf16.mxu0 0
      %1185 = vmatpush1.bf16.msra.mxu0 %v609
      %1186 = vmatprep.subr.bf16.mxu0 0
      %1187 = vmatpush1.bf16.msra.mxu0 %v610
      %1188 = vmatprep.subr.bf16.mxu0 0
      %1189 = vmatpush1.bf16.msra.mxu0 %v611
      %1190 = vmatprep.subr.bf16.mxu0 0
      %1191 = vmatpush1.bf16.msra.mxu0 %v612
      %1192 = vmatprep.subr.bf16.mxu0 0
      %1193 = vmatpush1.bf16.msra.mxu0 %v613
      %1194 = vmatprep.subr.bf16.mxu0 0
      %1195 = vmatpush1.bf16.msra.mxu0 %v614
      %1196 = vmatprep.subr.bf16.mxu0 0
      %1197 = vmatpush1.bf16.msra.mxu0 %v615
      %1198 = vmatprep.subr.bf16.mxu0 0
      %1199 = vmatpush1.bf16.msra.mxu0 %v616
      %1200 = vmatprep.subr.bf16.mxu0 0
      %1201 = vmatpush1.bf16.msra.mxu0 %v617
      %1202 = vmatprep.subr.bf16.mxu0 0
      %1203 = vmatpush1.bf16.msra.mxu0 %v618
      %1204 = vmatprep.subr.bf16.mxu0 0
      %1205 = vmatpush1.bf16.msra.mxu0 %v619
      %1206 = vmatprep.subr.bf16.mxu0 0
      %1207 = vmatpush1.bf16.msra.mxu0 %v620
      %1208 = vmatprep.mubr.bf16.mxu0 %v1166
      %1209 = vmatmul.mubr.bf16.gmra.mrb[0].mxu0 %v1152
      %v1210 = vpop.f32.mrb[0].mxu0
      %v1211 = vadd.f32 %v415, %v1210
      %v1212 = vpop.f32.mrb[0].mxu0
      %v1213 = vpop.f32.mrb[0].mxu0
      %v1214 = vpop.f32.mrb[0].mxu0
      %1215 = vdwg.mxu0
      %1216 = vmatprep.subr.bf16.mxu0 0
      %1217 = vmatpush1.bf16.msra.mxu0 %v621
      %1218 = vmatprep.subr.bf16.mxu0 0
      %1219 = vmatpush1.bf16.msra.mxu0 %v622
      %1220 = vmatprep.subr.bf16.mxu0 0
      %1221 = vmatpush1.bf16.msra.mxu0 %v623
      %1222 = vmatprep.subr.bf16.mxu0 0
      %1223 = vmatpush1.bf16.msra.mxu0 %v624
      %1224 = vmatprep.subr.bf16.mxu0 0
      %1225 = vmatpush1.bf16.msra.mxu0 %v625
      %1226 = vmatprep.subr.bf16.mxu0 0
      %1227 = vmatpush1.bf16.msra.mxu0 %v626
      %1228 = vmatprep.subr.bf16.mxu0 0
      %1229 = vmatpush1.bf16.msra.mxu0 %v627
      %1230 = vmatprep.subr.bf16.mxu0 0
      %1231 = vmatpush1.bf16.msra.mxu0 %v628
      %1232 = vmatprep.subr.bf16.mxu0 0
      %1233 = vmatpush1.bf16.msra.mxu0 %v629
      %1234 = vmatprep.subr.bf16.mxu0 0
      %1235 = vmatpush1.bf16.msra.mxu0 %v630
      %1236 = vmatprep.subr.bf16.mxu0 0
      %1237 = vmatpush1.bf16.msra.mxu0 %v631
      %1238 = vmatprep.subr.bf16.mxu0 0
      %1239 = vmatpush1.bf16.msra.mxu0 %v632
      %1240 = vmatprep.subr.bf16.mxu0 0
      %1241 = vmatpush1.bf16.msra.mxu0 %v633
      %1242 = vmatprep.subr.bf16.mxu0 0
      %1243 = vmatpush1.bf16.msra.mxu0 %v634
      %1244 = vmatprep.subr.bf16.mxu0 0
      %1245 = vmatpush1.bf16.msra.mxu0 %v635
      %1246 = vmatprep.subr.bf16.mxu0 0
      %1247 = vmatpush1.bf16.msra.mxu0 %v636
      %1248 = vmatprep.mubr.bf16.mxu0 %v1168
      %1249 = vmatmul.mubr.bf16.gmra.mrb[0].mxu0 %v1167
      %v1250 = vpop.f32.mrb[0].mxu0
      %v1251 = vadd.f32 %v1211, %v1250
      %v1252 = vpop.f32.mrb[0].mxu0
      %v1253 = vpop.f32.mrb[0].mxu0
      %v1254 = vpop.f32.mrb[0].mxu0
      %1255 = vdwg.mxu0
      %1256 = vmatprep.subr.bf16.mxu0 0
      %1257 = vmatpush1.bf16.msra.mxu0 %v637
      %1258 = vmatprep.subr.bf16.mxu0 0
      %1259 = vmatpush1.bf16.msra.mxu0 %v638
      %1260 = vmatprep.subr.bf16.mxu0 0
      %1261 = vmatpush1.bf16.msra.mxu0 %v639
      %1262 = vmatprep.subr.bf16.mxu0 0
      %1263 = vmatpush1.bf16.msra.mxu0 %v640
      %1264 = vmatprep.subr.bf16.mxu0 0
      %1265 = vmatpush1.bf16.msra.mxu0 0
      %1266 = vmatprep.subr.bf16.mxu0 0
      %1267 = vmatpush1.bf16.msra.mxu0 0
      %1268 = vmatprep.subr.bf16.mxu0 0
      %1269 = vmatpush1.bf16.msra.mxu0 0
      %1270 = vmatprep.subr.bf16.mxu0 0
      %1271 = vmatpush1.bf16.msra.mxu0 0
      %1272 = vmatprep.subr.bf16.mxu0 0
      %1273 = vmatpush1.bf16.msra.mxu0 0
      %1274 = vmatprep.subr.bf16.mxu0 0
      %1275 = vmatpush1.bf16.msra.mxu0 0
      %1276 = vmatprep.subr.bf16.mxu0 0
      %1277 = vmatpush1.bf16.msra.mxu0 0
      %1278 = vmatprep.subr.bf16.mxu0 0
      %1279 = vmatpush1.bf16.msra.mxu0 0
      %1280 = vmatprep.subr.bf16.mxu0 0
      %1281 = vmatpush1.bf16.msra.mxu0 0
      %1282 = vmatprep.subr.bf16.mxu0 0
      %1283 = vmatpush1.bf16.msra.mxu0 0
      %1284 = vmatprep.subr.bf16.mxu0 0
      %1285 = vmatpush1.bf16.msra.mxu0 0
      %1286 = vmatprep.subr.bf16.mxu0 0
      %1287 = vmatpush1.bf16.msra.mxu0 0
      %1288 = vmatprep.mubr.bf16.mxu0 0
      %1289 = vmatmul.mubr.bf16.gmra.mrb[0].mxu0 %v1174
      %v1290 = vpop.f32.mrb[0].mxu0
      %v1291 = vadd.f32 %v1251, %v1290
      %v1292 = vpop.f32.mrb[0].mxu0
      %v1293 = vpop.f32.mrb[0].mxu0
      %v1294 = vpop.f32.mrb[0].mxu0
      %1295 = vdwg.mxu0
      %v1296 = vmax.f32 %v1291, 0.0
      %v1297 = vpack.c.bf16 %v1296, %v1296
      %s1298 = scalar_lea.vmem %s324, 64
      %v1299 = vld [vmem:[%s1298] sm:$0xf]
      %v1300 = vld [vmem:[%s1298 + $0x4] sm:$0xf]
      %v1301 = vld [vmem:[%s1298 + $0x8] sm:$0xf]
      %v1302 = vld [vmem:[%s1298 + $0xc] sm:$0xf]
      %v1303 = vld [vmem:[%s1298 + $0x10] sm:$0xf]
      %v1304 = vld [vmem:[%s1298 + $0x14] sm:$0xf]
      %v1305 = vld [vmem:[%s1298 + $0x18] sm:$0xf]
      %v1306 = vld [vmem:[%s1298 + $0x1c] sm:$0xf]
      %v1315 = vunpack.c.l.b16 %v1299
      %v1316 = vunpack.c.l.b16 %v1300
      %v1317 = vunpack.c.l.b16 %v1301
      %v1318 = vunpack.c.l.b16 %v1302
      %v1319 = vunpack.c.l.b16 %v1303
      %v1320 = vunpack.c.l.b16 %v1304
      %v1321 = vunpack.c.l.b16 %v1305
      %v1322 = vunpack.c.l.b16 %v1306
      %v1323 = vpack.c.b16 %v1316, %v1315
      %v1324 = vpack.c.b16 %v1318, %v1317
      %v1325 = vpack.c.b16 %v1320, %v1319
      %v1326 = vpack.c.b16 %v1322, %v1321
      %v1332 = vsel %vm677, %v1297, 0
      %1334 = vmatprep.subr.bf16.mxu0 0
      %1335 = vmatpush1.bf16.msra.mxu0 %v1323
      %1336 = vmatprep.subr.bf16.mxu0 0
      %1337 = vmatpush1.bf16.msra.mxu0 %v1324
      %1338 = vmatprep.subr.bf16.mxu0 0
      %1339 = vmatpush1.bf16.msra.mxu0 %v1325
      %1340 = vmatprep.subr.bf16.mxu0 0
      %1341 = vmatpush1.bf16.msra.mxu0 %v1326
      %1342 = vmatprep.subr.bf16.mxu0 0
      %1343 = vmatpush1.bf16.msra.mxu0 0
      %1344 = vmatprep.subr.bf16.mxu0 0
      %1345 = vmatpush1.bf16.msra.mxu0 0
      %1346 = vmatprep.subr.bf16.mxu0 0
      %1347 = vmatpush1.bf16.msra.mxu0 0
      %1348 = vmatprep.subr.bf16.mxu0 0
      %1349 = vmatpush1.bf16.msra.mxu0 0
      %1350 = vmatprep.subr.bf16.mxu0 0
      %1351 = vmatpush1.bf16.msra.mxu0 0
      %1352 = vmatprep.subr.bf16.mxu0 0
      %1353 = vmatpush1.bf16.msra.mxu0 0
      %1354 = vmatprep.subr.bf16.mxu0 0
      %1355 = vmatpush1.bf16.msra.mxu0 0
      %1356 = vmatprep.subr.bf16.mxu0 0
      %1357 = vmatpush1.bf16.msra.mxu0 0
      %1358 = vmatprep.subr.bf16.mxu0 0
      %1359 = vmatpush1.bf16.msra.mxu0 0
      %1360 = vmatprep.subr.bf16.mxu0 0
      %1361 = vmatpush1.bf16.msra.mxu0 0
      %1362 = vmatprep.subr.bf16.mxu0 0
      %1363 = vmatpush1.bf16.msra.mxu0 0
      %1364 = vmatprep.subr.bf16.mxu0 0
      %1365 = vmatpush1.bf16.msra.mxu0 0
      %1366 = vmatprep.mubr.bf16.mxu0 0
      %1367 = vmatmul.mubr.bf16.gmra.mrb[0].mxu0 %v1332
      %v1368 = vpop.f32.mrb[0].mxu0
      %v1369 = vadd.f32 0.0, %v1368
      %v1370 = vpop.f32.mrb[0].mxu0
      %v1371 = vpop.f32.mrb[0].mxu0
      %v1372 = vpop.f32.mrb[0].mxu0
      %1373 = vdwg.mxu0
      %v1374 = vadd.f32 %v1126, %v1369
      %s1375 = scalar_lea.vmem %s317, 15
      %v1376 = vld [vmem:[%s1375] sm:$0x1f]
      %v1378 = vcombine.high %v1376, %v1376
      %v1380 = vunpack.c.l.s4 1966171168
      %v1381 = vunpack.c.0.s8 %v1380
      %v1382 = vlaneseq
      %v1383 = vshrl.u32 %v1382, 7
      %v1384 = vsub.s32 %v1381, %v1383
      %v1385 = vrot.slane %v1376, %v1384
      %v1387 = vunpack.c.l.s4 1966171168
      %v1388 = vunpack.c.0.s8 %v1387
      %v1389 = vlaneseq
      %v1390 = vshrl.u32 %v1389, 7
      %v1391 = vsub.s32 %v1388, %v1390
      %v1392 = vrot.slane %v1378, %v1391
      %v1393 = vcombine.high %v1385, %v1385
      %v1395 = vunpack.c.l.s4 1966171168
      %v1396 = vunpack.c.0.s8 %v1395
      %v1397 = vlaneseq
      %v1398 = vshrl.u32 %v1397, 7
      %v1399 = vsub.s32 %v1396, %v1398
      %v1400 = vrot.slane %v1385, %v1399
      %v1402 = vunpack.c.l.s4 1966171168
      %v1403 = vunpack.c.0.s8 %v1402
      %v1404 = vlaneseq
      %v1405 = vshrl.u32 %v1404, 7
      %v1406 = vsub.s32 %v1403, %v1405
      %v1407 = vrot.slane %v1392, %v1406
      %v1409 = vunpack.c.l.s4 1966171168
      %v1410 = vunpack.c.0.s8 %v1409
      %v1411 = vlaneseq
      %v1412 = vshrl.u32 %v1411, 7
      %v1413 = vsub.s32 %v1410, %v1412
      %v1414 = vrot.slane %v1393, %v1413
      %v1415 = vcombine.high %v1400, %v1400
      %v1416 = vcombine.high %v1414, %v1414
      %v1422 = vsel %vm677, %v1407, 0
      %1424 = vmatprep.subr.bf16.mxu0 0
      %1425 = vmatpush1.bf16.msra.mxu0 %v605
      %1426 = vmatprep.subr.bf16.mxu0 0
      %1427 = vmatpush1.bf16.msra.mxu0 %v606
      %1428 = vmatprep.subr.bf16.mxu0 0
      %1429 = vmatpush1.bf16.msra.mxu0 %v607
      %1430 = vmatprep.subr.bf16.mxu0 0
      %1431 = vmatpush1.bf16.msra.mxu0 %v608
      %1432 = vmatprep.subr.bf16.mxu0 0
      %1433 = vmatpush1.bf16.msra.mxu0 %v609
      %1434 = vmatprep.subr.bf16.mxu0 0
      %1435 = vmatpush1.bf16.msra.mxu0 %v610
      %1436 = vmatprep.subr.bf16.mxu0 0
      %1437 = vmatpush1.bf16.msra.mxu0 %v611
      %1438 = vmatprep.subr.bf16.mxu0 0
      %1439 = vmatpush1.bf16.msra.mxu0 %v612
      %1440 = vmatprep.subr.bf16.mxu0 0
      %1441 = vmatpush1.bf16.msra.mxu0 %v613
      %1442 = vmatprep.subr.bf16.mxu0 0
      %1443 = vmatpush1.bf16.msra.mxu0 %v614
      %1444 = vmatprep.subr.bf16.mxu0 0
      %1445 = vmatpush1.bf16.msra.mxu0 %v615
      %1446 = vmatprep.subr.bf16.mxu0 0
      %1447 = vmatpush1.bf16.msra.mxu0 %v616
      %1448 = vmatprep.subr.bf16.mxu0 0
      %1449 = vmatpush1.bf16.msra.mxu0 %v617
      %1450 = vmatprep.subr.bf16.mxu0 0
      %1451 = vmatpush1.bf16.msra.mxu0 %v618
      %1452 = vmatprep.subr.bf16.mxu0 0
      %1453 = vmatpush1.bf16.msra.mxu0 %v619
      %1454 = vmatprep.subr.bf16.mxu0 0
      %1455 = vmatpush1.bf16.msra.mxu0 %v620
      %1456 = vmatprep.mubr.bf16.mxu0 %v1414
      %1457 = vmatmul.mubr.bf16.gmra.mrb[0].mxu0 %v1400
      %v1458 = vpop.f32.mrb[0].mxu0
      %v1459 = vadd.f32 %v415, %v1458
      %v1460 = vpop.f32.mrb[0].mxu0
      %v1461 = vpop.f32.mrb[0].mxu0
      %v1462 = vpop.f32.mrb[0].mxu0
      %1463 = vdwg.mxu0
      %1464 = vmatprep.subr.bf16.mxu0 0
      %1465 = vmatpush1.bf16.msra.mxu0 %v621
      %1466 = vmatprep.subr.bf16.mxu0 0
      %1467 = vmatpush1.bf16.msra.mxu0 %v622
      %1468 = vmatprep.subr.bf16.mxu0 0
      %1469 = vmatpush1.bf16.msra.mxu0 %v623
      %1470 = vmatprep.subr.bf16.mxu0 0
      %1471 = vmatpush1.bf16.msra.mxu0 %v624
      %1472 = vmatprep.subr.bf16.mxu0 0
      %1473 = vmatpush1.bf16.msra.mxu0 %v625
      %1474 = vmatprep.subr.bf16.mxu0 0
      %1475 = vmatpush1.bf16.msra.mxu0 %v626
      %1476 = vmatprep.subr.bf16.mxu0 0
      %1477 = vmatpush1.bf16.msra.mxu0 %v627
      %1478 = vmatprep.subr.bf16.mxu0 0
      %1479 = vmatpush1.bf16.msra.mxu0 %v628
      %1480 = vmatprep.subr.bf16.mxu0 0
      %1481 = vmatpush1.bf16.msra.mxu0 %v629
      %1482 = vmatprep.subr.bf16.mxu0 0
      %1483 = vmatpush1.bf16.msra.mxu0 %v630
      %1484 = vmatprep.subr.bf16.mxu0 0
      %1485 = vmatpush1.bf16.msra.mxu0 %v631
      %1486 = vmatprep.subr.bf16.mxu0 0
      %1487 = vmatpush1.bf16.msra.mxu0 %v632
      %1488 = vmatprep.subr.bf16.mxu0 0
      %1489 = vmatpush1.bf16.msra.mxu0 %v633
      %1490 = vmatprep.subr.bf16.mxu0 0
      %1491 = vmatpush1.bf16.msra.mxu0 %v634
      %1492 = vmatprep.subr.bf16.mxu0 0
      %1493 = vmatpush1.bf16.msra.mxu0 %v635
      %1494 = vmatprep.subr.bf16.mxu0 0
      %1495 = vmatpush1.bf16.msra.mxu0 %v636
      %1496 = vmatprep.mubr.bf16.mxu0 %v1416
      %1497 = vmatmul.mubr.bf16.gmra.mrb[0].mxu0 %v1415
      %v1498 = vpop.f32.mrb[0].mxu0
      %v1499 = vadd.f32 %v1459, %v1498
      %v1500 = vpop.f32.mrb[0].mxu0
      %v1501 = vpop.f32.mrb[0].mxu0
      %v1502 = vpop.f32.mrb[0].mxu0
      %1503 = vdwg.mxu0
      %1504 = vmatprep.subr.bf16.mxu0 0
      %1505 = vmatpush1.bf16.msra.mxu0 %v637
      %1506 = vmatprep.subr.bf16.mxu0 0
      %1507 = vmatpush1.bf16.msra.mxu0 %v638
      %1508 = vmatprep.subr.bf16.mxu0 0
      %1509 = vmatpush1.bf16.msra.mxu0 %v639
      %1510 = vmatprep.subr.bf16.mxu0 0
      %1511 = vmatpush1.bf16.msra.mxu0 %v640
      %1512 = vmatprep.subr.bf16.mxu0 0
      %1513 = vmatpush1.bf16.msra.mxu0 0
      %1514 = vmatprep.subr.bf16.mxu0 0
      %1515 = vmatpush1.bf16.msra.mxu0 0
      %1516 = vmatprep.subr.bf16.mxu0 0
      %1517 = vmatpush1.bf16.msra.mxu0 0
      %1518 = vmatprep.subr.bf16.mxu0 0
      %1519 = vmatpush1.bf16.msra.mxu0 0
      %1520 = vmatprep.subr.bf16.mxu0 0
      %1521 = vmatpush1.bf16.msra.mxu0 0
      %1522 = vmatprep.subr.bf16.mxu0 0
      %1523 = vmatpush1.bf16.msra.mxu0 0
      %1524 = vmatprep.subr.bf16.mxu0 0
      %1525 = vmatpush1.bf16.msra.mxu0 0
      %1526 = vmatprep.subr.bf16.mxu0 0
      %1527 = vmatpush1.bf16.msra.mxu0 0
      %1528 = vmatprep.subr.bf16.mxu0 0
      %1529 = vmatpush1.bf16.msra.mxu0 0
      %1530 = vmatprep.subr.bf16.mxu0 0
      %1531 = vmatpush1.bf16.msra.mxu0 0
      %1532 = vmatprep.subr.bf16.mxu0 0
      %1533 = vmatpush1.bf16.msra.mxu0 0
      %1534 = vmatprep.subr.bf16.mxu0 0
      %1535 = vmatpush1.bf16.msra.mxu0 0
      %1536 = vmatprep.mubr.bf16.mxu0 0
      %1537 = vmatmul.mubr.bf16.gmra.mrb[0].mxu0 %v1422
      %v1538 = vpop.f32.mrb[0].mxu0
      %v1539 = vadd.f32 %v1499, %v1538
      %v1540 = vpop.f32.mrb[0].mxu0
      %v1541 = vpop.f32.mrb[0].mxu0
      %v1542 = vpop.f32.mrb[0].mxu0
      %1543 = vdwg.mxu0
      %v1544 = vmax.f32 %v1539, 0.0
      %v1545 = vpack.c.bf16 %v1544, %v1544
      %s1546 = scalar_lea.vmem %s324, 96
      %v1547 = vld [vmem:[%s1546] sm:$0xf]
      %v1548 = vld [vmem:[%s1546 + $0x4] sm:$0xf]
      %v1549 = vld [vmem:[%s1546 + $0x8] sm:$0xf]
      %v1550 = vld [vmem:[%s1546 + $0xc] sm:$0xf]
      %v1551 = vld [vmem:[%s1546 + $0x10] sm:$0xf]
      %v1552 = vld [vmem:[%s1546 + $0x14] sm:$0xf]
      %v1553 = vld [vmem:[%s1546 + $0x18] sm:$0xf]
      %v1554 = vld [vmem:[%s1546 + $0x1c] sm:$0xf]
      %v1563 = vunpack.c.l.b16 %v1547
      %v1564 = vunpack.c.l.b16 %v1548
      %v1565 = vunpack.c.l.b16 %v1549
      %v1566 = vunpack.c.l.b16 %v1550
      %v1567 = vunpack.c.l.b16 %v1551
      %v1568 = vunpack.c.l.b16 %v1552
      %v1569 = vunpack.c.l.b16 %v1553
      %v1570 = vunpack.c.l.b16 %v1554
      %v1571 = vpack.c.b16 %v1564, %v1563
      %v1572 = vpack.c.b16 %v1566, %v1565
      %v1573 = vpack.c.b16 %v1568, %v1567
      %v1574 = vpack.c.b16 %v1570, %v1569
      %v1580 = vsel %vm677, %v1545, 0
      %1582 = vmatprep.subr.bf16.mxu0 0
      %1583 = vmatpush1.bf16.msra.mxu0 %v1571
      %1584 = vmatprep.subr.bf16.mxu0 0
      %1585 = vmatpush1.bf16.msra.mxu0 %v1572
      %1586 = vmatprep.subr.bf16.mxu0 0
      %1587 = vmatpush1.bf16.msra.mxu0 %v1573
      %1588 = vmatprep.subr.bf16.mxu0 0
      %1589 = vmatpush1.bf16.msra.mxu0 %v1574
      %1590 = vmatprep.subr.bf16.mxu0 0
      %1591 = vmatpush1.bf16.msra.mxu0 0
      %1592 = vmatprep.subr.bf16.mxu0 0
      %1593 = vmatpush1.bf16.msra.mxu0 0
      %1594 = vmatprep.subr.bf16.mxu0 0
      %1595 = vmatpush1.bf16.msra.mxu0 0
      %1596 = vmatprep.subr.bf16.mxu0 0
      %1597 = vmatpush1.bf16.msra.mxu0 0
      %1598 = vmatprep.subr.bf16.mxu0 0
      %1599 = vmatpush1.bf16.msra.mxu0 0
      %1600 = vmatprep.subr.bf16.mxu0 0
      %1601 = vmatpush1.bf16.msra.mxu0 0
      %1602 = vmatprep.subr.bf16.mxu0 0
      %1603 = vmatpush1.bf16.msra.mxu0 0
      %1604 = vmatprep.subr.bf16.mxu0 0
      %1605 = vmatpush1.bf16.msra.mxu0 0
      %1606 = vmatprep.subr.bf16.mxu0 0
      %1607 = vmatpush1.bf16.msra.mxu0 0
      %1608 = vmatprep.subr.bf16.mxu0 0
      %1609 = vmatpush1.bf16.msra.mxu0 0
      %1610 = vmatprep.subr.bf16.mxu0 0
      %1611 = vmatpush1.bf16.msra.mxu0 0
      %1612 = vmatprep.subr.bf16.mxu0 0
      %1613 = vmatpush1.bf16.msra.mxu0 0
      %1614 = vmatprep.mubr.bf16.mxu0 0
      %1615 = vmatmul.mubr.bf16.gmra.mrb[0].mxu0 %v1580
      %v1616 = vpop.f32.mrb[0].mxu0
      %v1617 = vadd.f32 0.0, %v1616
      %v1618 = vpop.f32.mrb[0].mxu0
      %v1619 = vpop.f32.mrb[0].mxu0
      %v1620 = vpop.f32.mrb[0].mxu0
      %1621 = vdwg.mxu0
      %v1622 = vadd.f32 %v1374, %v1617
      %s1623 = scalar_lea.vmem %s317, 20
      %v1624 = vld [vmem:[%s1623] sm:$0x1f]
      %v1626 = vcombine.high %v1624, %v1624
      %v1628 = vunpack.c.l.s4 1966171168
      %v1629 = vunpack.c.0.s8 %v1628
      %v1630 = vlaneseq
      %v1631 = vshrl.u32 %v1630, 7
      %v1632 = vsub.s32 %v1629, %v1631
      %v1633 = vrot.slane %v1624, %v1632
      %v1635 = vunpack.c.l.s4 1966171168
      %v1636 = vunpack.c.0.s8 %v1635
      %v1637 = vlaneseq
      %v1638 = vshrl.u32 %v1637, 7
      %v1639 = vsub.s32 %v1636, %v1638
      %v1640 = vrot.slane %v1626, %v1639
      %v1641 = vcombine.high %v1633, %v1633
      %v1643 = vunpack.c.l.s4 1966171168
      %v1644 = vunpack.c.0.s8 %v1643
      %v1645 = vlaneseq
      %v1646 = vshrl.u32 %v1645, 7
      %v1647 = vsub.s32 %v1644, %v1646
      %v1648 = vrot.slane %v1633, %v1647
      %v1650 = vunpack.c.l.s4 1966171168
      %v1651 = vunpack.c.0.s8 %v1650
      %v1652 = vlaneseq
      %v1653 = vshrl.u32 %v1652, 7
      %v1654 = vsub.s32 %v1651, %v1653
      %v1655 = vrot.slane %v1640, %v1654
      %v1657 = vunpack.c.l.s4 1966171168
      %v1658 = vunpack.c.0.s8 %v1657
      %v1659 = vlaneseq
      %v1660 = vshrl.u32 %v1659, 7
      %v1661 = vsub.s32 %v1658, %v1660
      %v1662 = vrot.slane %v1641, %v1661
      %v1663 = vcombine.high %v1648, %v1648
      %v1664 = vcombine.high %v1662, %v1662
      %v1670 = vsel %vm677, %v1655, 0
      %1672 = vmatprep.subr.bf16.mxu0 0
      %1673 = vmatpush1.bf16.msra.mxu0 %v605
      %1674 = vmatprep.subr.bf16.mxu0 0
      %1675 = vmatpush1.bf16.msra.mxu0 %v606
      %1676 = vmatprep.subr.bf16.mxu0 0
      %1677 = vmatpush1.bf16.msra.mxu0 %v607
      %1678 = vmatprep.subr.bf16.mxu0 0
      %1679 = vmatpush1.bf16.msra.mxu0 %v608
      %1680 = vmatprep.subr.bf16.mxu0 0
      %1681 = vmatpush1.bf16.msra.mxu0 %v609
      %1682 = vmatprep.subr.bf16.mxu0 0
      %1683 = vmatpush1.bf16.msra.mxu0 %v610
      %1684 = vmatprep.subr.bf16.mxu0 0
      %1685 = vmatpush1.bf16.msra.mxu0 %v611
      %1686 = vmatprep.subr.bf16.mxu0 0
      %1687 = vmatpush1.bf16.msra.mxu0 %v612
      %1688 = vmatprep.subr.bf16.mxu0 0
      %1689 = vmatpush1.bf16.msra.mxu0 %v613
      %1690 = vmatprep.subr.bf16.mxu0 0
      %1691 = vmatpush1.bf16.msra.mxu0 %v614
      %1692 = vmatprep.subr.bf16.mxu0 0
      %1693 = vmatpush1.bf16.msra.mxu0 %v615
      %1694 = vmatprep.subr.bf16.mxu0 0
      %1695 = vmatpush1.bf16.msra.mxu0 %v616
      %1696 = vmatprep.subr.bf16.mxu0 0
      %1697 = vmatpush1.bf16.msra.mxu0 %v617
      %1698 = vmatprep.subr.bf16.mxu0 0
      %1699 = vmatpush1.bf16.msra.mxu0 %v618
      %1700 = vmatprep.subr.bf16.mxu0 0
      %1701 = vmatpush1.bf16.msra.mxu0 %v619
      %1702 = vmatprep.subr.bf16.mxu0 0
      %1703 = vmatpush1.bf16.msra.mxu0 %v620
      %1704 = vmatprep.mubr.bf16.mxu0 %v1662
      %1705 = vmatmul.mubr.bf16.gmra.mrb[0].mxu0 %v1648
      %v1706 = vpop.f32.mrb[0].mxu0
      %v1707 = vadd.f32 %v415, %v1706
      %v1708 = vpop.f32.mrb[0].mxu0
      %v1709 = vpop.f32.mrb[0].mxu0
      %v1710 = vpop.f32.mrb[0].mxu0
      %1711 = vdwg.mxu0
      %1712 = vmatprep.subr.bf16.mxu0 0
      %1713 = vmatpush1.bf16.msra.mxu0 %v621
      %1714 = vmatprep.subr.bf16.mxu0 0
      %1715 = vmatpush1.bf16.msra.mxu0 %v622
      %1716 = vmatprep.subr.bf16.mxu0 0
      %1717 = vmatpush1.bf16.msra.mxu0 %v623
      %1718 = vmatprep.subr.bf16.mxu0 0
      %1719 = vmatpush1.bf16.msra.mxu0 %v624
      %1720 = vmatprep.subr.bf16.mxu0 0
      %1721 = vmatpush1.bf16.msra.mxu0 %v625
      %1722 = vmatprep.subr.bf16.mxu0 0
      %1723 = vmatpush1.bf16.msra.mxu0 %v626
      %1724 = vmatprep.subr.bf16.mxu0 0
      %1725 = vmatpush1.bf16.msra.mxu0 %v627
      %1726 = vmatprep.subr.bf16.mxu0 0
      %1727 = vmatpush1.bf16.msra.mxu0 %v628
      %1728 = vmatprep.subr.bf16.mxu0 0
      %1729 = vmatpush1.bf16.msra.mxu0 %v629
      %1730 = vmatprep.subr.bf16.mxu0 0
      %1731 = vmatpush1.bf16.msra.mxu0 %v630
      %1732 = vmatprep.subr.bf16.mxu0 0
      %1733 = vmatpush1.bf16.msra.mxu0 %v631
      %1734 = vmatprep.subr.bf16.mxu0 0
      %1735 = vmatpush1.bf16.msra.mxu0 %v632
      %1736 = vmatprep.subr.bf16.mxu0 0
      %1737 = vmatpush1.bf16.msra.mxu0 %v633
      %1738 = vmatprep.subr.bf16.mxu0 0
      %1739 = vmatpush1.bf16.msra.mxu0 %v634
      %1740 = vmatprep.subr.bf16.mxu0 0
      %1741 = vmatpush1.bf16.msra.mxu0 %v635
      %1742 = vmatprep.subr.bf16.mxu0 0
      %1743 = vmatpush1.bf16.msra.mxu0 %v636
      %1744 = vmatprep.mubr.bf16.mxu0 %v1664
      %1745 = vmatmul.mubr.bf16.gmra.mrb[0].mxu0 %v1663
      %v1746 = vpop.f32.mrb[0].mxu0
      %v1747 = vadd.f32 %v1707, %v1746
      %v1748 = vpop.f32.mrb[0].mxu0
      %v1749 = vpop.f32.mrb[0].mxu0
      %v1750 = vpop.f32.mrb[0].mxu0
      %1751 = vdwg.mxu0
      %1752 = vmatprep.subr.bf16.mxu0 0
      %1753 = vmatpush1.bf16.msra.mxu0 %v637
      %1754 = vmatprep.subr.bf16.mxu0 0
      %1755 = vmatpush1.bf16.msra.mxu0 %v638
      %1756 = vmatprep.subr.bf16.mxu0 0
      %1757 = vmatpush1.bf16.msra.mxu0 %v639
      %1758 = vmatprep.subr.bf16.mxu0 0
      %1759 = vmatpush1.bf16.msra.mxu0 %v640
      %1760 = vmatprep.subr.bf16.mxu0 0
      %1761 = vmatpush1.bf16.msra.mxu0 0
      %1762 = vmatprep.subr.bf16.mxu0 0
      %1763 = vmatpush1.bf16.msra.mxu0 0
      %1764 = vmatprep.subr.bf16.mxu0 0
      %1765 = vmatpush1.bf16.msra.mxu0 0
      %1766 = vmatprep.subr.bf16.mxu0 0
      %1767 = vmatpush1.bf16.msra.mxu0 0
      %1768 = vmatprep.subr.bf16.mxu0 0
      %1769 = vmatpush1.bf16.msra.mxu0 0
      %1770 = vmatprep.subr.bf16.mxu0 0
      %1771 = vmatpush1.bf16.msra.mxu0 0
      %1772 = vmatprep.subr.bf16.mxu0 0
      %1773 = vmatpush1.bf16.msra.mxu0 0
      %1774 = vmatprep.subr.bf16.mxu0 0
      %1775 = vmatpush1.bf16.msra.mxu0 0
      %1776 = vmatprep.subr.bf16.mxu0 0
      %1777 = vmatpush1.bf16.msra.mxu0 0
      %1778 = vmatprep.subr.bf16.mxu0 0
      %1779 = vmatpush1.bf16.msra.mxu0 0
      %1780 = vmatprep.subr.bf16.mxu0 0
      %1781 = vmatpush1.bf16.msra.mxu0 0
      %1782 = vmatprep.subr.bf16.mxu0 0
      %1783 = vmatpush1.bf16.msra.mxu0 0
      %1784 = vmatprep.mubr.bf16.mxu0 0
      %1785 = vmatmul.mubr.bf16.gmra.mrb[0].mxu0 %v1670
      %v1786 = vpop.f32.mrb[0].mxu0
      %v1787 = vadd.f32 %v1747, %v1786
      %v1788 = vpop.f32.mrb[0].mxu0
      %v1789 = vpop.f32.mrb[0].mxu0
      %v1790 = vpop.f32.mrb[0].mxu0
      %1791 = vdwg.mxu0
      %v1792 = vmax.f32 %v1787, 0.0
      %v1793 = vpack.c.bf16 %v1792, %v1792
      %s1794 = scalar_lea.vmem %s324, 128
      %v1795 = vld [vmem:[%s1794] sm:$0xf]
      %v1796 = vld [vmem:[%s1794 + $0x4] sm:$0xf]
      %v1797 = vld [vmem:[%s1794 + $0x8] sm:$0xf]
      %v1798 = vld [vmem:[%s1794 + $0xc] sm:$0xf]
      %v1799 = vld [vmem:[%s1794 + $0x10] sm:$0xf]
      %v1800 = vld [vmem:[%s1794 + $0x14] sm:$0xf]
      %v1801 = vld [vmem:[%s1794 + $0x18] sm:$0xf]
      %v1802 = vld [vmem:[%s1794 + $0x1c] sm:$0xf]
      %v1811 = vunpack.c.l.b16 %v1795
      %v1812 = vunpack.c.l.b16 %v1796
      %v1813 = vunpack.c.l.b16 %v1797
      %v1814 = vunpack.c.l.b16 %v1798
      %v1815 = vunpack.c.l.b16 %v1799
      %v1816 = vunpack.c.l.b16 %v1800
      %v1817 = vunpack.c.l.b16 %v1801
      %v1818 = vunpack.c.l.b16 %v1802
      %v1819 = vpack.c.b16 %v1812, %v1811
      %v1820 = vpack.c.b16 %v1814, %v1813
      %v1821 = vpack.c.b16 %v1816, %v1815
      %v1822 = vpack.c.b16 %v1818, %v1817
      %v1828 = vsel %vm677, %v1793, 0
      %1830 = vmatprep.subr.bf16.mxu0 0
      %1831 = vmatpush1.bf16.msra.mxu0 %v1819
      %1832 = vmatprep.subr.bf16.mxu0 0
      %1833 = vmatpush1.bf16.msra.mxu0 %v1820
      %1834 = vmatprep.subr.bf16.mxu0 0
      %1835 = vmatpush1.bf16.msra.mxu0 %v1821
      %1836 = vmatprep.subr.bf16.mxu0 0
      %1837 = vmatpush1.bf16.msra.mxu0 %v1822
      %1838 = vmatprep.subr.bf16.mxu0 0
      %1839 = vmatpush1.bf16.msra.mxu0 0
      %1840 = vmatprep.subr.bf16.mxu0 0
      %1841 = vmatpush1.bf16.msra.mxu0 0
      %1842 = vmatprep.subr.bf16.mxu0 0
      %1843 = vmatpush1.bf16.msra.mxu0 0
      %1844 = vmatprep.subr.bf16.mxu0 0
      %1845 = vmatpush1.bf16.msra.mxu0 0
      %1846 = vmatprep.subr.bf16.mxu0 0
      %1847 = vmatpush1.bf16.msra.mxu0 0
      %1848 = vmatprep.subr.bf16.mxu0 0
      %1849 = vmatpush1.bf16.msra.mxu0 0
      %1850 = vmatprep.subr.bf16.mxu0 0
      %1851 = vmatpush1.bf16.msra.mxu0 0
      %1852 = vmatprep.subr.bf16.mxu0 0
      %1853 = vmatpush1.bf16.msra.mxu0 0
      %1854 = vmatprep.subr.bf16.mxu0 0
      %1855 = vmatpush1.bf16.msra.mxu0 0
      %1856 = vmatprep.subr.bf16.mxu0 0
      %1857 = vmatpush1.bf16.msra.mxu0 0
      %1858 = vmatprep.subr.bf16.mxu0 0
      %1859 = vmatpush1.bf16.msra.mxu0 0
      %1860 = vmatprep.subr.bf16.mxu0 0
      %1861 = vmatpush1.bf16.msra.mxu0 0
      %1862 = vmatprep.mubr.bf16.mxu0 0
      %1863 = vmatmul.mubr.bf16.gmra.mrb[0].mxu0 %v1828
      %v1864 = vpop.f32.mrb[0].mxu0
      %v1865 = vadd.f32 0.0, %v1864
      %v1866 = vpop.f32.mrb[0].mxu0
      %v1867 = vpop.f32.mrb[0].mxu0
      %v1868 = vpop.f32.mrb[0].mxu0
      %1869 = vdwg.mxu0
      %v1870 = vadd.f32 %v1622, %v1865
      %s1871 = scalar_lea.vmem %s317, 25
      %v1872 = vld [vmem:[%s1871] sm:$0x1f]
      %v1874 = vcombine.high %v1872, %v1872
      %v1876 = vunpack.c.l.s4 1966171168
      %v1877 = vunpack.c.0.s8 %v1876
      %v1878 = vlaneseq
      %v1879 = vshrl.u32 %v1878, 7
      %v1880 = vsub.s32 %v1877, %v1879
      %v1881 = vrot.slane %v1872, %v1880
      %v1883 = vunpack.c.l.s4 1966171168
      %v1884 = vunpack.c.0.s8 %v1883
      %v1885 = vlaneseq
      %v1886 = vshrl.u32 %v1885, 7
      %v1887 = vsub.s32 %v1884, %v1886
      %v1888 = vrot.slane %v1874, %v1887
      %v1889 = vcombine.high %v1881, %v1881
      %v1891 = vunpack.c.l.s4 1966171168
      %v1892 = vunpack.c.0.s8 %v1891
      %v1893 = vlaneseq
      %v1894 = vshrl.u32 %v1893, 7
      %v1895 = vsub.s32 %v1892, %v1894
      %v1896 = vrot.slane %v1881, %v1895
      %v1898 = vunpack.c.l.s4 1966171168
      %v1899 = vunpack.c.0.s8 %v1898
      %v1900 = vlaneseq
      %v1901 = vshrl.u32 %v1900, 7
      %v1902 = vsub.s32 %v1899, %v1901
      %v1903 = vrot.slane %v1888, %v1902
      %v1905 = vunpack.c.l.s4 1966171168
      %v1906 = vunpack.c.0.s8 %v1905
      %v1907 = vlaneseq
      %v1908 = vshrl.u32 %v1907, 7
      %v1909 = vsub.s32 %v1906, %v1908
      %v1910 = vrot.slane %v1889, %v1909
      %v1911 = vcombine.high %v1896, %v1896
      %v1912 = vcombine.high %v1910, %v1910
      %v1918 = vsel %vm677, %v1903, 0
      %1920 = vmatprep.subr.bf16.mxu0 0
      %1921 = vmatpush1.bf16.msra.mxu0 %v605
      %1922 = vmatprep.subr.bf16.mxu0 0
      %1923 = vmatpush1.bf16.msra.mxu0 %v606
      %1924 = vmatprep.subr.bf16.mxu0 0
      %1925 = vmatpush1.bf16.msra.mxu0 %v607
      %1926 = vmatprep.subr.bf16.mxu0 0
      %1927 = vmatpush1.bf16.msra.mxu0 %v608
      %1928 = vmatprep.subr.bf16.mxu0 0
      %1929 = vmatpush1.bf16.msra.mxu0 %v609
      %1930 = vmatprep.subr.bf16.mxu0 0
      %1931 = vmatpush1.bf16.msra.mxu0 %v610
      %1932 = vmatprep.subr.bf16.mxu0 0
      %1933 = vmatpush1.bf16.msra.mxu0 %v611
      %1934 = vmatprep.subr.bf16.mxu0 0
      %1935 = vmatpush1.bf16.msra.mxu0 %v612
      %1936 = vmatprep.subr.bf16.mxu0 0
      %1937 = vmatpush1.bf16.msra.mxu0 %v613
      %1938 = vmatprep.subr.bf16.mxu0 0
      %1939 = vmatpush1.bf16.msra.mxu0 %v614
      %1940 = vmatprep.subr.bf16.mxu0 0
      %1941 = vmatpush1.bf16.msra.mxu0 %v615
      %1942 = vmatprep.subr.bf16.mxu0 0
      %1943 = vmatpush1.bf16.msra.mxu0 %v616
      %1944 = vmatprep.subr.bf16.mxu0 0
      %1945 = vmatpush1.bf16.msra.mxu0 %v617
      %1946 = vmatprep.subr.bf16.mxu0 0
      %1947 = vmatpush1.bf16.msra.mxu0 %v618
      %1948 = vmatprep.subr.bf16.mxu0 0
      %1949 = vmatpush1.bf16.msra.mxu0 %v619
      %1950 = vmatprep.subr.bf16.mxu0 0
      %1951 = vmatpush1.bf16.msra.mxu0 %v620
      %1952 = vmatprep.mubr.bf16.mxu0 %v1910
      %1953 = vmatmul.mubr.bf16.gmra.mrb[0].mxu0 %v1896
      %v1954 = vpop.f32.mrb[0].mxu0
      %v1955 = vadd.f32 %v415, %v1954
      %v1956 = vpop.f32.mrb[0].mxu0
      %v1957 = vpop.f32.mrb[0].mxu0
      %v1958 = vpop.f32.mrb[0].mxu0
      %1959 = vdwg.mxu0
      %1960 = vmatprep.subr.bf16.mxu0 0
      %1961 = vmatpush1.bf16.msra.mxu0 %v621
      %1962 = vmatprep.subr.bf16.mxu0 0
      %1963 = vmatpush1.bf16.msra.mxu0 %v622
      %1964 = vmatprep.subr.bf16.mxu0 0
      %1965 = vmatpush1.bf16.msra.mxu0 %v623
      %1966 = vmatprep.subr.bf16.mxu0 0
      %1967 = vmatpush1.bf16.msra.mxu0 %v624
      %1968 = vmatprep.subr.bf16.mxu0 0
      %1969 = vmatpush1.bf16.msra.mxu0 %v625
      %1970 = vmatprep.subr.bf16.mxu0 0
      %1971 = vmatpush1.bf16.msra.mxu0 %v626
      %1972 = vmatprep.subr.bf16.mxu0 0
      %1973 = vmatpush1.bf16.msra.mxu0 %v627
      %1974 = vmatprep.subr.bf16.mxu0 0
      %1975 = vmatpush1.bf16.msra.mxu0 %v628
      %1976 = vmatprep.subr.bf16.mxu0 0
      %1977 = vmatpush1.bf16.msra.mxu0 %v629
      %1978 = vmatprep.subr.bf16.mxu0 0
      %1979 = vmatpush1.bf16.msra.mxu0 %v630
      %1980 = vmatprep.subr.bf16.mxu0 0
      %1981 = vmatpush1.bf16.msra.mxu0 %v631
      %1982 = vmatprep.subr.bf16.mxu0 0
      %1983 = vmatpush1.bf16.msra.mxu0 %v632
      %1984 = vmatprep.subr.bf16.mxu0 0
      %1985 = vmatpush1.bf16.msra.mxu0 %v633
      %1986 = vmatprep.subr.bf16.mxu0 0
      %1987 = vmatpush1.bf16.msra.mxu0 %v634
      %1988 = vmatprep.subr.bf16.mxu0 0
      %1989 = vmatpush1.bf16.msra.mxu0 %v635
      %1990 = vmatprep.subr.bf16.mxu0 0
      %1991 = vmatpush1.bf16.msra.mxu0 %v636
      %1992 = vmatprep.mubr.bf16.mxu0 %v1912
      %1993 = vmatmul.mubr.bf16.gmra.mrb[0].mxu0 %v1911
      %v1994 = vpop.f32.mrb[0].mxu0
      %v1995 = vadd.f32 %v1955, %v1994
      %v1996 = vpop.f32.mrb[0].mxu0
      %v1997 = vpop.f32.mrb[0].mxu0
      %v1998 = vpop.f32.mrb[0].mxu0
      %1999 = vdwg.mxu0
      %2000 = vmatprep.subr.bf16.mxu0 0
      %2001 = vmatpush1.bf16.msra.mxu0 %v637
      %2002 = vmatprep.subr.bf16.mxu0 0
      %2003 = vmatpush1.bf16.msra.mxu0 %v638
      %2004 = vmatprep.subr.bf16.mxu0 0
      %2005 = vmatpush1.bf16.msra.mxu0 %v639
      %2006 = vmatprep.subr.bf16.mxu0 0
      %2007 = vmatpush1.bf16.msra.mxu0 %v640
      %2008 = vmatprep.subr.bf16.mxu0 0
      %2009 = vmatpush1.bf16.msra.mxu0 0
      %2010 = vmatprep.subr.bf16.mxu0 0
      %2011 = vmatpush1.bf16.msra.mxu0 0
      %2012 = vmatprep.subr.bf16.mxu0 0
      %2013 = vmatpush1.bf16.msra.mxu0 0
      %2014 = vmatprep.subr.bf16.mxu0 0
      %2015 = vmatpush1.bf16.msra.mxu0 0
      %2016 = vmatprep.subr.bf16.mxu0 0
      %2017 = vmatpush1.bf16.msra.mxu0 0
      %2018 = vmatprep.subr.bf16.mxu0 0
      %2019 = vmatpush1.bf16.msra.mxu0 0
      %2020 = vmatprep.subr.bf16.mxu0 0
      %2021 = vmatpush1.bf16.msra.mxu0 0
      %2022 = vmatprep.subr.bf16.mxu0 0
      %2023 = vmatpush1.bf16.msra.mxu0 0
      %2024 = vmatprep.subr.bf16.mxu0 0
      %2025 = vmatpush1.bf16.msra.mxu0 0
      %2026 = vmatprep.subr.bf16.mxu0 0
      %2027 = vmatpush1.bf16.msra.mxu0 0
      %2028 = vmatprep.subr.bf16.mxu0 0
      %2029 = vmatpush1.bf16.msra.mxu0 0
      %2030 = vmatprep.subr.bf16.mxu0 0
      %2031 = vmatpush1.bf16.msra.mxu0 0
      %2032 = vmatprep.mubr.bf16.mxu0 0
      %2033 = vmatmul.mubr.bf16.gmra.mrb[0].mxu0 %v1918
      %v2034 = vpop.f32.mrb[0].mxu0
      %v2035 = vadd.f32 %v1995, %v2034
      %v2036 = vpop.f32.mrb[0].mxu0
      %v2037 = vpop.f32.mrb[0].mxu0
      %v2038 = vpop.f32.mrb[0].mxu0
      %2039 = vdwg.mxu0
      %v2040 = vmax.f32 %v2035, 0.0
      %v2041 = vpack.c.bf16 %v2040, %v2040
      %s2042 = scalar_lea.vmem %s324, 160
      %v2043 = vld [vmem:[%s2042] sm:$0xf]
      %v2044 = vld [vmem:[%s2042 + $0x4] sm:$0xf]
      %v2045 = vld [vmem:[%s2042 + $0x8] sm:$0xf]
      %v2046 = vld [vmem:[%s2042 + $0xc] sm:$0xf]
      %v2047 = vld [vmem:[%s2042 + $0x10] sm:$0xf]
      %v2048 = vld [vmem:[%s2042 + $0x14] sm:$0xf]
      %v2049 = vld [vmem:[%s2042 + $0x18] sm:$0xf]
      %v2050 = vld [vmem:[%s2042 + $0x1c] sm:$0xf]
      %v2059 = vunpack.c.l.b16 %v2043
      %v2060 = vunpack.c.l.b16 %v2044
      %v2061 = vunpack.c.l.b16 %v2045
      %v2062 = vunpack.c.l.b16 %v2046
      %v2063 = vunpack.c.l.b16 %v2047
      %v2064 = vunpack.c.l.b16 %v2048
      %v2065 = vunpack.c.l.b16 %v2049
      %v2066 = vunpack.c.l.b16 %v2050
      %v2067 = vpack.c.b16 %v2060, %v2059
      %v2068 = vpack.c.b16 %v2062, %v2061
      %v2069 = vpack.c.b16 %v2064, %v2063
      %v2070 = vpack.c.b16 %v2066, %v2065
      %v2076 = vsel %vm677, %v2041, 0
      %2078 = vmatprep.subr.bf16.mxu0 0
      %2079 = vmatpush1.bf16.msra.mxu0 %v2067
      %2080 = vmatprep.subr.bf16.mxu0 0
      %2081 = vmatpush1.bf16.msra.mxu0 %v2068
      %2082 = vmatprep.subr.bf16.mxu0 0
      %2083 = vmatpush1.bf16.msra.mxu0 %v2069
      %2084 = vmatprep.subr.bf16.mxu0 0
      %2085 = vmatpush1.bf16.msra.mxu0 %v2070
      %2086 = vmatprep.subr.bf16.mxu0 0
      %2087 = vmatpush1.bf16.msra.mxu0 0
      %2088 = vmatprep.subr.bf16.mxu0 0
      %2089 = vmatpush1.bf16.msra.mxu0 0
      %2090 = vmatprep.subr.bf16.mxu0 0
      %2091 = vmatpush1.bf16.msra.mxu0 0
      %2092 = vmatprep.subr.bf16.mxu0 0
      %2093 = vmatpush1.bf16.msra.mxu0 0
      %2094 = vmatprep.subr.bf16.mxu0 0
      %2095 = vmatpush1.bf16.msra.mxu0 0
      %2096 = vmatprep.subr.bf16.mxu0 0
      %2097 = vmatpush1.bf16.msra.mxu0 0
      %2098 = vmatprep.subr.bf16.mxu0 0
      %2099 = vmatpush1.bf16.msra.mxu0 0
      %2100 = vmatprep.subr.bf16.mxu0 0
      %2101 = vmatpush1.bf16.msra.mxu0 0
      %2102 = vmatprep.subr.bf16.mxu0 0
      %2103 = vmatpush1.bf16.msra.mxu0 0
      %2104 = vmatprep.subr.bf16.mxu0 0
      %2105 = vmatpush1.bf16.msra.mxu0 0
      %2106 = vmatprep.subr.bf16.mxu0 0
      %2107 = vmatpush1.bf16.msra.mxu0 0
      %2108 = vmatprep.subr.bf16.mxu0 0
      %2109 = vmatpush1.bf16.msra.mxu0 0
      %2110 = vmatprep.mubr.bf16.mxu0 0
      %2111 = vmatmul.mubr.bf16.gmra.mrb[0].mxu0 %v2076
      %v2112 = vpop.f32.mrb[0].mxu0
      %v2113 = vadd.f32 0.0, %v2112
      %v2114 = vpop.f32.mrb[0].mxu0
      %v2115 = vpop.f32.mrb[0].mxu0
      %v2116 = vpop.f32.mrb[0].mxu0
      %2117 = vdwg.mxu0
      %v2118 = vadd.f32 %v1870, %v2113
      %s2119 = scalar_lea.vmem %s317, 30
      %v2120 = vld [vmem:[%s2119] sm:$0x1f]
      %v2122 = vcombine.high %v2120, %v2120
      %v2124 = vunpack.c.l.s4 1966171168
      %v2125 = vunpack.c.0.s8 %v2124
      %v2126 = vlaneseq
      %v2127 = vshrl.u32 %v2126, 7
      %v2128 = vsub.s32 %v2125, %v2127
      %v2129 = vrot.slane %v2120, %v2128
      %v2131 = vunpack.c.l.s4 1966171168
      %v2132 = vunpack.c.0.s8 %v2131
      %v2133 = vlaneseq
      %v2134 = vshrl.u32 %v2133, 7
      %v2135 = vsub.s32 %v2132, %v2134
      %v2136 = vrot.slane %v2122, %v2135
      %v2137 = vcombine.high %v2129, %v2129
      %v2139 = vunpack.c.l.s4 1966171168
      %v2140 = vunpack.c.0.s8 %v2139
      %v2141 = vlaneseq
      %v2142 = vshrl.u32 %v2141, 7
      %v2143 = vsub.s32 %v2140, %v2142
      %v2144 = vrot.slane %v2129, %v2143
      %v2146 = vunpack.c.l.s4 1966171168
      %v2147 = vunpack.c.0.s8 %v2146
      %v2148 = vlaneseq
      %v2149 = vshrl.u32 %v2148, 7
      %v2150 = vsub.s32 %v2147, %v2149
      %v2151 = vrot.slane %v2136, %v2150
      %v2153 = vunpack.c.l.s4 1966171168
      %v2154 = vunpack.c.0.s8 %v2153
      %v2155 = vlaneseq
      %v2156 = vshrl.u32 %v2155, 7
      %v2157 = vsub.s32 %v2154, %v2156
      %v2158 = vrot.slane %v2137, %v2157
      %v2159 = vcombine.high %v2144, %v2144
      %v2160 = vcombine.high %v2158, %v2158
      %v2166 = vsel %vm677, %v2151, 0
      %2168 = vmatprep.subr.bf16.mxu0 0
      %2169 = vmatpush1.bf16.msra.mxu0 %v605
      %2170 = vmatprep.subr.bf16.mxu0 0
      %2171 = vmatpush1.bf16.msra.mxu0 %v606
      %2172 = vmatprep.subr.bf16.mxu0 0
      %2173 = vmatpush1.bf16.msra.mxu0 %v607
      %2174 = vmatprep.subr.bf16.mxu0 0
      %2175 = vmatpush1.bf16.msra.mxu0 %v608
      %2176 = vmatprep.subr.bf16.mxu0 0
      %2177 = vmatpush1.bf16.msra.mxu0 %v609
      %2178 = vmatprep.subr.bf16.mxu0 0
      %2179 = vmatpush1.bf16.msra.mxu0 %v610
      %2180 = vmatprep.subr.bf16.mxu0 0
      %2181 = vmatpush1.bf16.msra.mxu0 %v611
      %2182 = vmatprep.subr.bf16.mxu0 0
      %2183 = vmatpush1.bf16.msra.mxu0 %v612
      %2184 = vmatprep.subr.bf16.mxu0 0
      %2185 = vmatpush1.bf16.msra.mxu0 %v613
      %2186 = vmatprep.subr.bf16.mxu0 0
      %2187 = vmatpush1.bf16.msra.mxu0 %v614
      %2188 = vmatprep.subr.bf16.mxu0 0
      %2189 = vmatpush1.bf16.msra.mxu0 %v615
      %2190 = vmatprep.subr.bf16.mxu0 0
      %2191 = vmatpush1.bf16.msra.mxu0 %v616
      %2192 = vmatprep.subr.bf16.mxu0 0
      %2193 = vmatpush1.bf16.msra.mxu0 %v617
      %2194 = vmatprep.subr.bf16.mxu0 0
      %2195 = vmatpush1.bf16.msra.mxu0 %v618
      %2196 = vmatprep.subr.bf16.mxu0 0
      %2197 = vmatpush1.bf16.msra.mxu0 %v619
      %2198 = vmatprep.subr.bf16.mxu0 0
      %2199 = vmatpush1.bf16.msra.mxu0 %v620
      %2200 = vmatprep.mubr.bf16.mxu0 %v2158
      %2201 = vmatmul.mubr.bf16.gmra.mrb[0].mxu0 %v2144
      %v2202 = vpop.f32.mrb[0].mxu0
      %v2203 = vadd.f32 %v415, %v2202
      %v2204 = vpop.f32.mrb[0].mxu0
      %v2205 = vpop.f32.mrb[0].mxu0
      %v2206 = vpop.f32.mrb[0].mxu0
      %2207 = vdwg.mxu0
      %2208 = vmatprep.subr.bf16.mxu0 0
      %2209 = vmatpush1.bf16.msra.mxu0 %v621
      %2210 = vmatprep.subr.bf16.mxu0 0
      %2211 = vmatpush1.bf16.msra.mxu0 %v622
      %2212 = vmatprep.subr.bf16.mxu0 0
      %2213 = vmatpush1.bf16.msra.mxu0 %v623
      %2214 = vmatprep.subr.bf16.mxu0 0
      %2215 = vmatpush1.bf16.msra.mxu0 %v624
      %2216 = vmatprep.subr.bf16.mxu0 0
      %2217 = vmatpush1.bf16.msra.mxu0 %v625
      %2218 = vmatprep.subr.bf16.mxu0 0
      %2219 = vmatpush1.bf16.msra.mxu0 %v626
      %2220 = vmatprep.subr.bf16.mxu0 0
      %2221 = vmatpush1.bf16.msra.mxu0 %v627
      %2222 = vmatprep.subr.bf16.mxu0 0
      %2223 = vmatpush1.bf16.msra.mxu0 %v628
      %2224 = vmatprep.subr.bf16.mxu0 0
      %2225 = vmatpush1.bf16.msra.mxu0 %v629
      %2226 = vmatprep.subr.bf16.mxu0 0
      %2227 = vmatpush1.bf16.msra.mxu0 %v630
      %2228 = vmatprep.subr.bf16.mxu0 0
      %2229 = vmatpush1.bf16.msra.mxu0 %v631
      %2230 = vmatprep.subr.bf16.mxu0 0
      %2231 = vmatpush1.bf16.msra.mxu0 %v632
      %2232 = vmatprep.subr.bf16.mxu0 0
      %2233 = vmatpush1.bf16.msra.mxu0 %v633
      %2234 = vmatprep.subr.bf16.mxu0 0
      %2235 = vmatpush1.bf16.msra.mxu0 %v634
      %2236 = vmatprep.subr.bf16.mxu0 0
      %2237 = vmatpush1.bf16.msra.mxu0 %v635
      %2238 = vmatprep.subr.bf16.mxu0 0
      %2239 = vmatpush1.bf16.msra.mxu0 %v636
      %2240 = vmatprep.mubr.bf16.mxu0 %v2160
      %2241 = vmatmul.mubr.bf16.gmra.mrb[0].mxu0 %v2159
      %v2242 = vpop.f32.mrb[0].mxu0
      %v2243 = vadd.f32 %v2203, %v2242
      %v2244 = vpop.f32.mrb[0].mxu0
      %v2245 = vpop.f32.mrb[0].mxu0
      %v2246 = vpop.f32.mrb[0].mxu0
      %2247 = vdwg.mxu0
      %2248 = vmatprep.subr.bf16.mxu0 0
      %2249 = vmatpush1.bf16.msra.mxu0 %v637
      %2250 = vmatprep.subr.bf16.mxu0 0
      %2251 = vmatpush1.bf16.msra.mxu0 %v638
      %2252 = vmatprep.subr.bf16.mxu0 0
      %2253 = vmatpush1.bf16.msra.mxu0 %v639
      %2254 = vmatprep.subr.bf16.mxu0 0
      %2255 = vmatpush1.bf16.msra.mxu0 %v640
      %2256 = vmatprep.subr.bf16.mxu0 0
      %2257 = vmatpush1.bf16.msra.mxu0 0
      %2258 = vmatprep.subr.bf16.mxu0 0
      %2259 = vmatpush1.bf16.msra.mxu0 0
      %2260 = vmatprep.subr.bf16.mxu0 0
      %2261 = vmatpush1.bf16.msra.mxu0 0
      %2262 = vmatprep.subr.bf16.mxu0 0
      %2263 = vmatpush1.bf16.msra.mxu0 0
      %2264 = vmatprep.subr.bf16.mxu0 0
      %2265 = vmatpush1.bf16.msra.mxu0 0
      %2266 = vmatprep.subr.bf16.mxu0 0
      %2267 = vmatpush1.bf16.msra.mxu0 0
      %2268 = vmatprep.subr.bf16.mxu0 0
      %2269 = vmatpush1.bf16.msra.mxu0 0
      %2270 = vmatprep.subr.bf16.mxu0 0
      %2271 = vmatpush1.bf16.msra.mxu0 0
      %2272 = vmatprep.subr.bf16.mxu0 0
      %2273 = vmatpush1.bf16.msra.mxu0 0
      %2274 = vmatprep.subr.bf16.mxu0 0
      %2275 = vmatpush1.bf16.msra.mxu0 0
      %2276 = vmatprep.subr.bf16.mxu0 0
      %2277 = vmatpush1.bf16.msra.mxu0 0
      %2278 = vmatprep.subr.bf16.mxu0 0
      %2279 = vmatpush1.bf16.msra.mxu0 0
      %2280 = vmatprep.mubr.bf16.mxu0 0
      %2281 = vmatmul.mubr.bf16.gmra.mrb[0].mxu0 %v2166
      %v2282 = vpop.f32.mrb[0].mxu0
      %v2283 = vadd.f32 %v2243, %v2282
      %v2284 = vpop.f32.mrb[0].mxu0
      %v2285 = vpop.f32.mrb[0].mxu0
      %v2286 = vpop.f32.mrb[0].mxu0
      %2287 = vdwg.mxu0
      %v2288 = vmax.f32 %v2283, 0.0
      %v2289 = vpack.c.bf16 %v2288, %v2288
      %s2290 = scalar_lea.vmem %s324, 192
      %v2291 = vld [vmem:[%s2290] sm:$0xf]
      %v2292 = vld [vmem:[%s2290 + $0x4] sm:$0xf]
      %v2293 = vld [vmem:[%s2290 + $0x8] sm:$0xf]
      %v2294 = vld [vmem:[%s2290 + $0xc] sm:$0xf]
      %v2295 = vld [vmem:[%s2290 + $0x10] sm:$0xf]
      %v2296 = vld [vmem:[%s2290 + $0x14] sm:$0xf]
      %v2297 = vld [vmem:[%s2290 + $0x18] sm:$0xf]
      %v2298 = vld [vmem:[%s2290 + $0x1c] sm:$0xf]
      %v2307 = vunpack.c.l.b16 %v2291
      %v2308 = vunpack.c.l.b16 %v2292
      %v2309 = vunpack.c.l.b16 %v2293
      %v2310 = vunpack.c.l.b16 %v2294
      %v2311 = vunpack.c.l.b16 %v2295
      %v2312 = vunpack.c.l.b16 %v2296
      %v2313 = vunpack.c.l.b16 %v2297
      %v2314 = vunpack.c.l.b16 %v2298
      %v2315 = vpack.c.b16 %v2308, %v2307
      %v2316 = vpack.c.b16 %v2310, %v2309
      %v2317 = vpack.c.b16 %v2312, %v2311
      %v2318 = vpack.c.b16 %v2314, %v2313
      %v2324 = vsel %vm677, %v2289, 0
      %2326 = vmatprep.subr.bf16.mxu0 0
      %2327 = vmatpush1.bf16.msra.mxu0 %v2315
      %2328 = vmatprep.subr.bf16.mxu0 0
      %2329 = vmatpush1.bf16.msra.mxu0 %v2316
      %2330 = vmatprep.subr.bf16.mxu0 0
      %2331 = vmatpush1.bf16.msra.mxu0 %v2317
      %2332 = vmatprep.subr.bf16.mxu0 0
      %2333 = vmatpush1.bf16.msra.mxu0 %v2318
      %2334 = vmatprep.subr.bf16.mxu0 0
      %2335 = vmatpush1.bf16.msra.mxu0 0
      %2336 = vmatprep.subr.bf16.mxu0 0
      %2337 = vmatpush1.bf16.msra.mxu0 0
      %2338 = vmatprep.subr.bf16.mxu0 0
      %2339 = vmatpush1.bf16.msra.mxu0 0
      %2340 = vmatprep.subr.bf16.mxu0 0
      %2341 = vmatpush1.bf16.msra.mxu0 0
      %2342 = vmatprep.subr.bf16.mxu0 0
      %2343 = vmatpush1.bf16.msra.mxu0 0
      %2344 = vmatprep.subr.bf16.mxu0 0
      %2345 = vmatpush1.bf16.msra.mxu0 0
      %2346 = vmatprep.subr.bf16.mxu0 0
      %2347 = vmatpush1.bf16.msra.mxu0 0
      %2348 = vmatprep.subr.bf16.mxu0 0
      %2349 = vmatpush1.bf16.msra.mxu0 0
      %2350 = vmatprep.subr.bf16.mxu0 0
      %2351 = vmatpush1.bf16.msra.mxu0 0
      %2352 = vmatprep.subr.bf16.mxu0 0
      %2353 = vmatpush1.bf16.msra.mxu0 0
      %2354 = vmatprep.subr.bf16.mxu0 0
      %2355 = vmatpush1.bf16.msra.mxu0 0
      %2356 = vmatprep.subr.bf16.mxu0 0
      %2357 = vmatpush1.bf16.msra.mxu0 0
      %2358 = vmatprep.mubr.bf16.mxu0 0
      %2359 = vmatmul.mubr.bf16.gmra.mrb[0].mxu0 %v2324
      %v2360 = vpop.f32.mrb[0].mxu0
      %v2361 = vadd.f32 0.0, %v2360
      %v2362 = vpop.f32.mrb[0].mxu0
      %v2363 = vpop.f32.mrb[0].mxu0
      %v2364 = vpop.f32.mrb[0].mxu0
      %2365 = vdwg.mxu0
      %v2366 = vadd.f32 %v2118, %v2361
      %s2367 = scalar_lea.vmem %s317, 35
      %v2368 = vld [vmem:[%s2367] sm:$0x1f]
      %v2370 = vcombine.high %v2368, %v2368
      %v2372 = vunpack.c.l.s4 1966171168
      %v2373 = vunpack.c.0.s8 %v2372
      %v2374 = vlaneseq
      %v2375 = vshrl.u32 %v2374, 7
      %v2376 = vsub.s32 %v2373, %v2375
      %v2377 = vrot.slane %v2368, %v2376
      %v2379 = vunpack.c.l.s4 1966171168
      %v2380 = vunpack.c.0.s8 %v2379
      %v2381 = vlaneseq
      %v2382 = vshrl.u32 %v2381, 7
      %v2383 = vsub.s32 %v2380, %v2382
      %v2384 = vrot.slane %v2370, %v2383
      %v2385 = vcombine.high %v2377, %v2377
      %v2387 = vunpack.c.l.s4 1966171168
      %v2388 = vunpack.c.0.s8 %v2387
      %v2389 = vlaneseq
      %v2390 = vshrl.u32 %v2389, 7
      %v2391 = vsub.s32 %v2388, %v2390
      %v2392 = vrot.slane %v2377, %v2391
      %v2394 = vunpack.c.l.s4 1966171168
      %v2395 = vunpack.c.0.s8 %v2394
      %v2396 = vlaneseq
      %v2397 = vshrl.u32 %v2396, 7
      %v2398 = vsub.s32 %v2395, %v2397
      %v2399 = vrot.slane %v2384, %v2398
      %v2401 = vunpack.c.l.s4 1966171168
      %v2402 = vunpack.c.0.s8 %v2401
      %v2403 = vlaneseq
      %v2404 = vshrl.u32 %v2403, 7
      %v2405 = vsub.s32 %v2402, %v2404
      %v2406 = vrot.slane %v2385, %v2405
      %v2407 = vcombine.high %v2392, %v2392
      %v2408 = vcombine.high %v2406, %v2406
      %v2414 = vsel %vm677, %v2399, 0
      %2416 = vmatprep.subr.bf16.mxu0 0
      %2417 = vmatpush1.bf16.msra.mxu0 %v605
      %2418 = vmatprep.subr.bf16.mxu0 0
      %2419 = vmatpush1.bf16.msra.mxu0 %v606
      %2420 = vmatprep.subr.bf16.mxu0 0
      %2421 = vmatpush1.bf16.msra.mxu0 %v607
      %2422 = vmatprep.subr.bf16.mxu0 0
      %2423 = vmatpush1.bf16.msra.mxu0 %v608
      %2424 = vmatprep.subr.bf16.mxu0 0
      %2425 = vmatpush1.bf16.msra.mxu0 %v609
      %2426 = vmatprep.subr.bf16.mxu0 0
      %2427 = vmatpush1.bf16.msra.mxu0 %v610
      %2428 = vmatprep.subr.bf16.mxu0 0
      %2429 = vmatpush1.bf16.msra.mxu0 %v611
      %2430 = vmatprep.subr.bf16.mxu0 0
      %2431 = vmatpush1.bf16.msra.mxu0 %v612
      %2432 = vmatprep.subr.bf16.mxu0 0
      %2433 = vmatpush1.bf16.msra.mxu0 %v613
      %2434 = vmatprep.subr.bf16.mxu0 0
      %2435 = vmatpush1.bf16.msra.mxu0 %v614
      %2436 = vmatprep.subr.bf16.mxu0 0
      %2437 = vmatpush1.bf16.msra.mxu0 %v615
      %2438 = vmatprep.subr.bf16.mxu0 0
      %2439 = vmatpush1.bf16.msra.mxu0 %v616
      %2440 = vmatprep.subr.bf16.mxu0 0
      %2441 = vmatpush1.bf16.msra.mxu0 %v617
      %2442 = vmatprep.subr.bf16.mxu0 0
      %2443 = vmatpush1.bf16.msra.mxu0 %v618
      %2444 = vmatprep.subr.bf16.mxu0 0
      %2445 = vmatpush1.bf16.msra.mxu0 %v619
      %2446 = vmatprep.subr.bf16.mxu0 0
      %2447 = vmatpush1.bf16.msra.mxu0 %v620
      %2448 = vmatprep.mubr.bf16.mxu0 %v2406
      %2449 = vmatmul.mubr.bf16.gmra.mrb[0].mxu0 %v2392
      %v2450 = vpop.f32.mrb[0].mxu0
      %v2451 = vadd.f32 %v415, %v2450
      %v2452 = vpop.f32.mrb[0].mxu0
      %v2453 = vpop.f32.mrb[0].mxu0
      %v2454 = vpop.f32.mrb[0].mxu0
      %2455 = vdwg.mxu0
      %2456 = vmatprep.subr.bf16.mxu0 0
      %2457 = vmatpush1.bf16.msra.mxu0 %v621
      %2458 = vmatprep.subr.bf16.mxu0 0
      %2459 = vmatpush1.bf16.msra.mxu0 %v622
      %2460 = vmatprep.subr.bf16.mxu0 0
      %2461 = vmatpush1.bf16.msra.mxu0 %v623
      %2462 = vmatprep.subr.bf16.mxu0 0
      %2463 = vmatpush1.bf16.msra.mxu0 %v624
      %2464 = vmatprep.subr.bf16.mxu0 0
      %2465 = vmatpush1.bf16.msra.mxu0 %v625
      %2466 = vmatprep.subr.bf16.mxu0 0
      %2467 = vmatpush1.bf16.msra.mxu0 %v626
      %2468 = vmatprep.subr.bf16.mxu0 0
      %2469 = vmatpush1.bf16.msra.mxu0 %v627
      %2470 = vmatprep.subr.bf16.mxu0 0
      %2471 = vmatpush1.bf16.msra.mxu0 %v628
      %2472 = vmatprep.subr.bf16.mxu0 0
      %2473 = vmatpush1.bf16.msra.mxu0 %v629
      %2474 = vmatprep.subr.bf16.mxu0 0
      %2475 = vmatpush1.bf16.msra.mxu0 %v630
      %2476 = vmatprep.subr.bf16.mxu0 0
      %2477 = vmatpush1.bf16.msra.mxu0 %v631
      %2478 = vmatprep.subr.bf16.mxu0 0
      %2479 = vmatpush1.bf16.msra.mxu0 %v632
      %2480 = vmatprep.subr.bf16.mxu0 0
      %2481 = vmatpush1.bf16.msra.mxu0 %v633
      %2482 = vmatprep.subr.bf16.mxu0 0
      %2483 = vmatpush1.bf16.msra.mxu0 %v634
      %2484 = vmatprep.subr.bf16.mxu0 0
      %2485 = vmatpush1.bf16.msra.mxu0 %v635
      %2486 = vmatprep.subr.bf16.mxu0 0
      %2487 = vmatpush1.bf16.msra.mxu0 %v636
      %2488 = vmatprep.mubr.bf16.mxu0 %v2408
      %2489 = vmatmul.mubr.bf16.gmra.mrb[0].mxu0 %v2407
      %v2490 = vpop.f32.mrb[0].mxu0
      %v2491 = vadd.f32 %v2451, %v2490
      %v2492 = vpop.f32.mrb[0].mxu0
      %v2493 = vpop.f32.mrb[0].mxu0
      %v2494 = vpop.f32.mrb[0].mxu0
      %2495 = vdwg.mxu0
      %2496 = vmatprep.subr.bf16.mxu0 0
      %2497 = vmatpush1.bf16.msra.mxu0 %v637
      %2498 = vmatprep.subr.bf16.mxu0 0
      %2499 = vmatpush1.bf16.msra.mxu0 %v638
      %2500 = vmatprep.subr.bf16.mxu0 0
      %2501 = vmatpush1.bf16.msra.mxu0 %v639
      %2502 = vmatprep.subr.bf16.mxu0 0
      %2503 = vmatpush1.bf16.msra.mxu0 %v640
      %2504 = vmatprep.subr.bf16.mxu0 0
      %2505 = vmatpush1.bf16.msra.mxu0 0
      %2506 = vmatprep.subr.bf16.mxu0 0
      %2507 = vmatpush1.bf16.msra.mxu0 0
      %2508 = vmatprep.subr.bf16.mxu0 0
      %2509 = vmatpush1.bf16.msra.mxu0 0
      %2510 = vmatprep.subr.bf16.mxu0 0
      %2511 = vmatpush1.bf16.msra.mxu0 0
      %2512 = vmatprep.subr.bf16.mxu0 0
      %2513 = vmatpush1.bf16.msra.mxu0 0
      %2514 = vmatprep.subr.bf16.mxu0 0
      %2515 = vmatpush1.bf16.msra.mxu0 0
      %2516 = vmatprep.subr.bf16.mxu0 0
      %2517 = vmatpush1.bf16.msra.mxu0 0
      %2518 = vmatprep.subr.bf16.mxu0 0
      %2519 = vmatpush1.bf16.msra.mxu0 0
      %2520 = vmatprep.subr.bf16.mxu0 0
      %2521 = vmatpush1.bf16.msra.mxu0 0
      %2522 = vmatprep.subr.bf16.mxu0 0
      %2523 = vmatpush1.bf16.msra.mxu0 0
      %2524 = vmatprep.subr.bf16.mxu0 0
      %2525 = vmatpush1.bf16.msra.mxu0 0
      %2526 = vmatprep.subr.bf16.mxu0 0
      %2527 = vmatpush1.bf16.msra.mxu0 0
      %2528 = vmatprep.mubr.bf16.mxu0 0
      %2529 = vmatmul.mubr.bf16.gmra.mrb[0].mxu0 %v2414
      %v2530 = vpop.f32.mrb[0].mxu0
      %v2531 = vadd.f32 %v2491, %v2530
      %v2532 = vpop.f32.mrb[0].mxu0
      %v2533 = vpop.f32.mrb[0].mxu0
      %v2534 = vpop.f32.mrb[0].mxu0
      %2535 = vdwg.mxu0
      %v2536 = vmax.f32 %v2531, 0.0
      %v2537 = vpack.c.bf16 %v2536, %v2536
      %s2538 = scalar_lea.vmem %s324, 224
      %v2539 = vld [vmem:[%s2538] sm:$0xf]
      %v2540 = vld [vmem:[%s2538 + $0x4] sm:$0xf]
      %v2541 = vld [vmem:[%s2538 + $0x8] sm:$0xf]
      %v2542 = vld [vmem:[%s2538 + $0xc] sm:$0xf]
      %v2543 = vld [vmem:[%s2538 + $0x10] sm:$0xf]
      %v2544 = vld [vmem:[%s2538 + $0x14] sm:$0xf]
      %v2545 = vld [vmem:[%s2538 + $0x18] sm:$0xf]
      %v2546 = vld [vmem:[%s2538 + $0x1c] sm:$0xf]
      %v2555 = vunpack.c.l.b16 %v2539
      %v2556 = vunpack.c.l.b16 %v2540
      %v2557 = vunpack.c.l.b16 %v2541
      %v2558 = vunpack.c.l.b16 %v2542
      %v2559 = vunpack.c.l.b16 %v2543
      %v2560 = vunpack.c.l.b16 %v2544
      %v2561 = vunpack.c.l.b16 %v2545
      %v2562 = vunpack.c.l.b16 %v2546
      %v2563 = vpack.c.b16 %v2556, %v2555
      %v2564 = vpack.c.b16 %v2558, %v2557
      %v2565 = vpack.c.b16 %v2560, %v2559
      %v2566 = vpack.c.b16 %v2562, %v2561
      %v2572 = vsel %vm677, %v2537, 0
      %2574 = vmatprep.subr.bf16.mxu0 0
      %2575 = vmatpush1.bf16.msra.mxu0 %v2563
      %2576 = vmatprep.subr.bf16.mxu0 0
      %2577 = vmatpush1.bf16.msra.mxu0 %v2564
      %2578 = vmatprep.subr.bf16.mxu0 0
      %2579 = vmatpush1.bf16.msra.mxu0 %v2565
      %2580 = vmatprep.subr.bf16.mxu0 0
      %2581 = vmatpush1.bf16.msra.mxu0 %v2566
      %2582 = vmatprep.subr.bf16.mxu0 0
      %2583 = vmatpush1.bf16.msra.mxu0 0
      %2584 = vmatprep.subr.bf16.mxu0 0
      %2585 = vmatpush1.bf16.msra.mxu0 0
      %2586 = vmatprep.subr.bf16.mxu0 0
      %2587 = vmatpush1.bf16.msra.mxu0 0
      %2588 = vmatprep.subr.bf16.mxu0 0
      %2589 = vmatpush1.bf16.msra.mxu0 0
      %2590 = vmatprep.subr.bf16.mxu0 0
      %2591 = vmatpush1.bf16.msra.mxu0 0
      %2592 = vmatprep.subr.bf16.mxu0 0
      %2593 = vmatpush1.bf16.msra.mxu0 0
      %2594 = vmatprep.subr.bf16.mxu0 0
      %2595 = vmatpush1.bf16.msra.mxu0 0
      %2596 = vmatprep.subr.bf16.mxu0 0
      %2597 = vmatpush1.bf16.msra.mxu0 0
      %2598 = vmatprep.subr.bf16.mxu0 0
      %2599 = vmatpush1.bf16.msra.mxu0 0
      %2600 = vmatprep.subr.bf16.mxu0 0
      %2601 = vmatpush1.bf16.msra.mxu0 0
      %2602 = vmatprep.subr.bf16.mxu0 0
      %2603 = vmatpush1.bf16.msra.mxu0 0
      %2604 = vmatprep.subr.bf16.mxu0 0
      %2605 = vmatpush1.bf16.msra.mxu0 0
      %2606 = vmatprep.mubr.bf16.mxu0 0
      %2607 = vmatmul.mubr.bf16.gmra.mrb[0].mxu0 %v2572
      %v2608 = vpop.f32.mrb[0].mxu0
      %v2609 = vadd.f32 0.0, %v2608
      %v2610 = vpop.f32.mrb[0].mxu0
      %v2611 = vpop.f32.mrb[0].mxu0
      %v2612 = vpop.f32.mrb[0].mxu0
      %2613 = vdwg.mxu0
      %v2614 = vadd.f32 %v2366, %v2609
      %s2615 = scalar_lea.vmem %s317, 40
      %v2616 = vld [vmem:[%s2615] sm:$0x1f]
      %v2618 = vcombine.high %v2616, %v2616
      %v2620 = vunpack.c.l.s4 1966171168
      %v2621 = vunpack.c.0.s8 %v2620
      %v2622 = vlaneseq
      %v2623 = vshrl.u32 %v2622, 7
      %v2624 = vsub.s32 %v2621, %v2623
      %v2625 = vrot.slane %v2616, %v2624
      %v2627 = vunpack.c.l.s4 1966171168
      %v2628 = vunpack.c.0.s8 %v2627
      %v2629 = vlaneseq
      %v2630 = vshrl.u32 %v2629, 7
      %v2631 = vsub.s32 %v2628, %v2630
      %v2632 = vrot.slane %v2618, %v2631
      %v2633 = vcombine.high %v2625, %v2625
      %v2635 = vunpack.c.l.s4 1966171168
      %v2636 = vunpack.c.0.s8 %v2635
      %v2637 = vlaneseq
      %v2638 = vshrl.u32 %v2637, 7
      %v2639 = vsub.s32 %v2636, %v2638
      %v2640 = vrot.slane %v2625, %v2639
      %v2642 = vunpack.c.l.s4 1966171168
      %v2643 = vunpack.c.0.s8 %v2642
      %v2644 = vlaneseq
      %v2645 = vshrl.u32 %v2644, 7
      %v2646 = vsub.s32 %v2643, %v2645
      %v2647 = vrot.slane %v2632, %v2646
      %v2649 = vunpack.c.l.s4 1966171168
      %v2650 = vunpack.c.0.s8 %v2649
      %v2651 = vlaneseq
      %v2652 = vshrl.u32 %v2651, 7
      %v2653 = vsub.s32 %v2650, %v2652
      %v2654 = vrot.slane %v2633, %v2653
      %v2655 = vcombine.high %v2640, %v2640
      %v2656 = vcombine.high %v2654, %v2654
      %v2662 = vsel %vm677, %v2647, 0
      %2664 = vmatprep.subr.bf16.mxu0 0
      %2665 = vmatpush1.bf16.msra.mxu0 %v605
      %2666 = vmatprep.subr.bf16.mxu0 0
      %2667 = vmatpush1.bf16.msra.mxu0 %v606
      %2668 = vmatprep.subr.bf16.mxu0 0
      %2669 = vmatpush1.bf16.msra.mxu0 %v607
      %2670 = vmatprep.subr.bf16.mxu0 0
      %2671 = vmatpush1.bf16.msra.mxu0 %v608
      %2672 = vmatprep.subr.bf16.mxu0 0
      %2673 = vmatpush1.bf16.msra.mxu0 %v609
      %2674 = vmatprep.subr.bf16.mxu0 0
      %2675 = vmatpush1.bf16.msra.mxu0 %v610
      %2676 = vmatprep.subr.bf16.mxu0 0
      %2677 = vmatpush1.bf16.msra.mxu0 %v611
      %2678 = vmatprep.subr.bf16.mxu0 0
      %2679 = vmatpush1.bf16.msra.mxu0 %v612
      %2680 = vmatprep.subr.bf16.mxu0 0
      %2681 = vmatpush1.bf16.msra.mxu0 %v613
      %2682 = vmatprep.subr.bf16.mxu0 0
      %2683 = vmatpush1.bf16.msra.mxu0 %v614
      %2684 = vmatprep.subr.bf16.mxu0 0
      %2685 = vmatpush1.bf16.msra.mxu0 %v615
      %2686 = vmatprep.subr.bf16.mxu0 0
      %2687 = vmatpush1.bf16.msra.mxu0 %v616
      %2688 = vmatprep.subr.bf16.mxu0 0
      %2689 = vmatpush1.bf16.msra.mxu0 %v617
      %2690 = vmatprep.subr.bf16.mxu0 0
      %2691 = vmatpush1.bf16.msra.mxu0 %v618
      %2692 = vmatprep.subr.bf16.mxu0 0
      %2693 = vmatpush1.bf16.msra.mxu0 %v619
      %2694 = vmatprep.subr.bf16.mxu0 0
      %2695 = vmatpush1.bf16.msra.mxu0 %v620
      %2696 = vmatprep.mubr.bf16.mxu0 %v2654
      %2697 = vmatmul.mubr.bf16.gmra.mrb[0].mxu0 %v2640
      %v2698 = vpop.f32.mrb[0].mxu0
      %v2699 = vadd.f32 %v415, %v2698
      %v2700 = vpop.f32.mrb[0].mxu0
      %v2701 = vpop.f32.mrb[0].mxu0
      %v2702 = vpop.f32.mrb[0].mxu0
      %2703 = vdwg.mxu0
      %2704 = vmatprep.subr.bf16.mxu0 0
      %2705 = vmatpush1.bf16.msra.mxu0 %v621
      %2706 = vmatprep.subr.bf16.mxu0 0
      %2707 = vmatpush1.bf16.msra.mxu0 %v622
      %2708 = vmatprep.subr.bf16.mxu0 0
      %2709 = vmatpush1.bf16.msra.mxu0 %v623
      %2710 = vmatprep.subr.bf16.mxu0 0
      %2711 = vmatpush1.bf16.msra.mxu0 %v624
      %2712 = vmatprep.subr.bf16.mxu0 0
      %2713 = vmatpush1.bf16.msra.mxu0 %v625
      %2714 = vmatprep.subr.bf16.mxu0 0
      %2715 = vmatpush1.bf16.msra.mxu0 %v626
      %2716 = vmatprep.subr.bf16.mxu0 0
      %2717 = vmatpush1.bf16.msra.mxu0 %v627
      %2718 = vmatprep.subr.bf16.mxu0 0
      %2719 = vmatpush1.bf16.msra.mxu0 %v628
      %2720 = vmatprep.subr.bf16.mxu0 0
      %2721 = vmatpush1.bf16.msra.mxu0 %v629
      %2722 = vmatprep.subr.bf16.mxu0 0
      %2723 = vmatpush1.bf16.msra.mxu0 %v630
      %2724 = vmatprep.subr.bf16.mxu0 0
      %2725 = vmatpush1.bf16.msra.mxu0 %v631
      %2726 = vmatprep.subr.bf16.mxu0 0
      %2727 = vmatpush1.bf16.msra.mxu0 %v632
      %2728 = vmatprep.subr.bf16.mxu0 0
      %2729 = vmatpush1.bf16.msra.mxu0 %v633
      %2730 = vmatprep.subr.bf16.mxu0 0
      %2731 = vmatpush1.bf16.msra.mxu0 %v634
      %2732 = vmatprep.subr.bf16.mxu0 0
      %2733 = vmatpush1.bf16.msra.mxu0 %v635
      %2734 = vmatprep.subr.bf16.mxu0 0
      %2735 = vmatpush1.bf16.msra.mxu0 %v636
      %2736 = vmatprep.mubr.bf16.mxu0 %v2656
      %2737 = vmatmul.mubr.bf16.gmra.mrb[0].mxu0 %v2655
      %v2738 = vpop.f32.mrb[0].mxu0
      %v2739 = vadd.f32 %v2699, %v2738
      %v2740 = vpop.f32.mrb[0].mxu0
      %v2741 = vpop.f32.mrb[0].mxu0
      %v2742 = vpop.f32.mrb[0].mxu0
      %2743 = vdwg.mxu0
      %2744 = vmatprep.subr.bf16.mxu0 0
      %2745 = vmatpush1.bf16.msra.mxu0 %v637
      %2746 = vmatprep.subr.bf16.mxu0 0
      %2747 = vmatpush1.bf16.msra.mxu0 %v638
      %2748 = vmatprep.subr.bf16.mxu0 0
      %2749 = vmatpush1.bf16.msra.mxu0 %v639
      %2750 = vmatprep.subr.bf16.mxu0 0
      %2751 = vmatpush1.bf16.msra.mxu0 %v640
      %2752 = vmatprep.subr.bf16.mxu0 0
      %2753 = vmatpush1.bf16.msra.mxu0 0
      %2754 = vmatprep.subr.bf16.mxu0 0
      %2755 = vmatpush1.bf16.msra.mxu0 0
      %2756 = vmatprep.subr.bf16.mxu0 0
      %2757 = vmatpush1.bf16.msra.mxu0 0
      %2758 = vmatprep.subr.bf16.mxu0 0
      %2759 = vmatpush1.bf16.msra.mxu0 0
      %2760 = vmatprep.subr.bf16.mxu0 0
      %2761 = vmatpush1.bf16.msra.mxu0 0
      %2762 = vmatprep.subr.bf16.mxu0 0
      %2763 = vmatpush1.bf16.msra.mxu0 0
      %2764 = vmatprep.subr.bf16.mxu0 0
      %2765 = vmatpush1.bf16.msra.mxu0 0
      %2766 = vmatprep.subr.bf16.mxu0 0
      %2767 = vmatpush1.bf16.msra.mxu0 0
      %2768 = vmatprep.subr.bf16.mxu0 0
      %2769 = vmatpush1.bf16.msra.mxu0 0
      %2770 = vmatprep.subr.bf16.mxu0 0
      %2771 = vmatpush1.bf16.msra.mxu0 0
      %2772 = vmatprep.subr.bf16.mxu0 0
      %2773 = vmatpush1.bf16.msra.mxu0 0
      %2774 = vmatprep.subr.bf16.mxu0 0
      %2775 = vmatpush1.bf16.msra.mxu0 0
      %2776 = vmatprep.mubr.bf16.mxu0 0
      %2777 = vmatmul.mubr.bf16.gmra.mrb[0].mxu0 %v2662
      %v2778 = vpop.f32.mrb[0].mxu0
      %v2779 = vadd.f32 %v2739, %v2778
      %v2780 = vpop.f32.mrb[0].mxu0
      %v2781 = vpop.f32.mrb[0].mxu0
      %v2782 = vpop.f32.mrb[0].mxu0
      %2783 = vdwg.mxu0
      %v2784 = vmax.f32 %v2779, 0.0
      %v2785 = vpack.c.bf16 %v2784, %v2784
      %s2786 = scalar_lea.vmem %s324, 256
      %v2787 = vld [vmem:[%s2786] sm:$0xf]
      %v2788 = vld [vmem:[%s2786 + $0x4] sm:$0xf]
      %v2789 = vld [vmem:[%s2786 + $0x8] sm:$0xf]
      %v2790 = vld [vmem:[%s2786 + $0xc] sm:$0xf]
      %v2791 = vld [vmem:[%s2786 + $0x10] sm:$0xf]
      %v2792 = vld [vmem:[%s2786 + $0x14] sm:$0xf]
      %v2793 = vld [vmem:[%s2786 + $0x18] sm:$0xf]
      %v2794 = vld [vmem:[%s2786 + $0x1c] sm:$0xf]
      %v2803 = vunpack.c.l.b16 %v2787
      %v2804 = vunpack.c.l.b16 %v2788
      %v2805 = vunpack.c.l.b16 %v2789
      %v2806 = vunpack.c.l.b16 %v2790
      %v2807 = vunpack.c.l.b16 %v2791
      %v2808 = vunpack.c.l.b16 %v2792
      %v2809 = vunpack.c.l.b16 %v2793
      %v2810 = vunpack.c.l.b16 %v2794
      %v2811 = vpack.c.b16 %v2804, %v2803
      %v2812 = vpack.c.b16 %v2806, %v2805
      %v2813 = vpack.c.b16 %v2808, %v2807
      %v2814 = vpack.c.b16 %v2810, %v2809
      %v2820 = vsel %vm677, %v2785, 0
      %2822 = vmatprep.subr.bf16.mxu0 0
      %2823 = vmatpush1.bf16.msra.mxu0 %v2811
      %2824 = vmatprep.subr.bf16.mxu0 0
      %2825 = vmatpush1.bf16.msra.mxu0 %v2812
      %2826 = vmatprep.subr.bf16.mxu0 0
      %2827 = vmatpush1.bf16.msra.mxu0 %v2813
      %2828 = vmatprep.subr.bf16.mxu0 0
      %2829 = vmatpush1.bf16.msra.mxu0 %v2814
      %2830 = vmatprep.subr.bf16.mxu0 0
      %2831 = vmatpush1.bf16.msra.mxu0 0
      %2832 = vmatprep.subr.bf16.mxu0 0
      %2833 = vmatpush1.bf16.msra.mxu0 0
      %2834 = vmatprep.subr.bf16.mxu0 0
      %2835 = vmatpush1.bf16.msra.mxu0 0
      %2836 = vmatprep.subr.bf16.mxu0 0
      %2837 = vmatpush1.bf16.msra.mxu0 0
      %2838 = vmatprep.subr.bf16.mxu0 0
      %2839 = vmatpush1.bf16.msra.mxu0 0
      %2840 = vmatprep.subr.bf16.mxu0 0
      %2841 = vmatpush1.bf16.msra.mxu0 0
      %2842 = vmatprep.subr.bf16.mxu0 0
      %2843 = vmatpush1.bf16.msra.mxu0 0
      %2844 = vmatprep.subr.bf16.mxu0 0
      %2845 = vmatpush1.bf16.msra.mxu0 0
      %2846 = vmatprep.subr.bf16.mxu0 0
      %2847 = vmatpush1.bf16.msra.mxu0 0
      %2848 = vmatprep.subr.bf16.mxu0 0
      %2849 = vmatpush1.bf16.msra.mxu0 0
      %2850 = vmatprep.subr.bf16.mxu0 0
      %2851 = vmatpush1.bf16.msra.mxu0 0
      %2852 = vmatprep.subr.bf16.mxu0 0
      %2853 = vmatpush1.bf16.msra.mxu0 0
      %2854 = vmatprep.mubr.bf16.mxu0 0
      %2855 = vmatmul.mubr.bf16.gmra.mrb[0].mxu0 %v2820
      %v2856 = vpop.f32.mrb[0].mxu0
      %v2857 = vadd.f32 0.0, %v2856
      %v2858 = vpop.f32.mrb[0].mxu0
      %v2859 = vpop.f32.mrb[0].mxu0
      %v2860 = vpop.f32.mrb[0].mxu0
      %2861 = vdwg.mxu0
      %v2862 = vadd.f32 %v2614, %v2857
      %s2863 = scalar_lea.vmem %s317, 45
      %v2864 = vld [vmem:[%s2863] sm:$0x1f]
      %v2866 = vcombine.high %v2864, %v2864
      %v2868 = vunpack.c.l.s4 1966171168
      %v2869 = vunpack.c.0.s8 %v2868
      %v2870 = vlaneseq
      %v2871 = vshrl.u32 %v2870, 7
      %v2872 = vsub.s32 %v2869, %v2871
      %v2873 = vrot.slane %v2864, %v2872
      %v2875 = vunpack.c.l.s4 1966171168
      %v2876 = vunpack.c.0.s8 %v2875
      %v2877 = vlaneseq
      %v2878 = vshrl.u32 %v2877, 7
      %v2879 = vsub.s32 %v2876, %v2878
      %v2880 = vrot.slane %v2866, %v2879
      %v2881 = vcombine.high %v2873, %v2873
      %v2883 = vunpack.c.l.s4 1966171168
      %v2884 = vunpack.c.0.s8 %v2883
      %v2885 = vlaneseq
      %v2886 = vshrl.u32 %v2885, 7
      %v2887 = vsub.s32 %v2884, %v2886
      %v2888 = vrot.slane %v2873, %v2887
      %v2890 = vunpack.c.l.s4 1966171168
      %v2891 = vunpack.c.0.s8 %v2890
      %v2892 = vlaneseq
      %v2893 = vshrl.u32 %v2892, 7
      %v2894 = vsub.s32 %v2891, %v2893
      %v2895 = vrot.slane %v2880, %v2894
      %v2897 = vunpack.c.l.s4 1966171168
      %v2898 = vunpack.c.0.s8 %v2897
      %v2899 = vlaneseq
      %v2900 = vshrl.u32 %v2899, 7
      %v2901 = vsub.s32 %v2898, %v2900
      %v2902 = vrot.slane %v2881, %v2901
      %v2903 = vcombine.high %v2888, %v2888
      %v2904 = vcombine.high %v2902, %v2902
      %v2910 = vsel %vm677, %v2895, 0
      %2912 = vmatprep.subr.bf16.mxu0 0
      %2913 = vmatpush1.bf16.msra.mxu0 %v605
      %2914 = vmatprep.subr.bf16.mxu0 0
      %2915 = vmatpush1.bf16.msra.mxu0 %v606
      %2916 = vmatprep.subr.bf16.mxu0 0
      %2917 = vmatpush1.bf16.msra.mxu0 %v607
      %2918 = vmatprep.subr.bf16.mxu0 0
      %2919 = vmatpush1.bf16.msra.mxu0 %v608
      %2920 = vmatprep.subr.bf16.mxu0 0
      %2921 = vmatpush1.bf16.msra.mxu0 %v609
      %2922 = vmatprep.subr.bf16.mxu0 0
      %2923 = vmatpush1.bf16.msra.mxu0 %v610
      %2924 = vmatprep.subr.bf16.mxu0 0
      %2925 = vmatpush1.bf16.msra.mxu0 %v611
      %2926 = vmatprep.subr.bf16.mxu0 0
      %2927 = vmatpush1.bf16.msra.mxu0 %v612
      %2928 = vmatprep.subr.bf16.mxu0 0
      %2929 = vmatpush1.bf16.msra.mxu0 %v613
      %2930 = vmatprep.subr.bf16.mxu0 0
      %2931 = vmatpush1.bf16.msra.mxu0 %v614
      %2932 = vmatprep.subr.bf16.mxu0 0
      %2933 = vmatpush1.bf16.msra.mxu0 %v615
      %2934 = vmatprep.subr.bf16.mxu0 0
      %2935 = vmatpush1.bf16.msra.mxu0 %v616
      %2936 = vmatprep.subr.bf16.mxu0 0
      %2937 = vmatpush1.bf16.msra.mxu0 %v617
      %2938 = vmatprep.subr.bf16.mxu0 0
      %2939 = vmatpush1.bf16.msra.mxu0 %v618
      %2940 = vmatprep.subr.bf16.mxu0 0
      %2941 = vmatpush1.bf16.msra.mxu0 %v619
      %2942 = vmatprep.subr.bf16.mxu0 0
      %2943 = vmatpush1.bf16.msra.mxu0 %v620
      %2944 = vmatprep.mubr.bf16.mxu0 %v2902
      %2945 = vmatmul.mubr.bf16.gmra.mrb[0].mxu0 %v2888
      %v2946 = vpop.f32.mrb[0].mxu0
      %v2947 = vadd.f32 %v415, %v2946
      %v2948 = vpop.f32.mrb[0].mxu0
      %v2949 = vpop.f32.mrb[0].mxu0
      %v2950 = vpop.f32.mrb[0].mxu0
      %2951 = vdwg.mxu0
      %2952 = vmatprep.subr.bf16.mxu0 0
      %2953 = vmatpush1.bf16.msra.mxu0 %v621
      %2954 = vmatprep.subr.bf16.mxu0 0
      %2955 = vmatpush1.bf16.msra.mxu0 %v622
      %2956 = vmatprep.subr.bf16.mxu0 0
      %2957 = vmatpush1.bf16.msra.mxu0 %v623
      %2958 = vmatprep.subr.bf16.mxu0 0
      %2959 = vmatpush1.bf16.msra.mxu0 %v624
      %2960 = vmatprep.subr.bf16.mxu0 0
      %2961 = vmatpush1.bf16.msra.mxu0 %v625
      %2962 = vmatprep.subr.bf16.mxu0 0
      %2963 = vmatpush1.bf16.msra.mxu0 %v626
      %2964 = vmatprep.subr.bf16.mxu0 0
      %2965 = vmatpush1.bf16.msra.mxu0 %v627
      %2966 = vmatprep.subr.bf16.mxu0 0
      %2967 = vmatpush1.bf16.msra.mxu0 %v628
      %2968 = vmatprep.subr.bf16.mxu0 0
      %2969 = vmatpush1.bf16.msra.mxu0 %v629
      %2970 = vmatprep.subr.bf16.mxu0 0
      %2971 = vmatpush1.bf16.msra.mxu0 %v630
      %2972 = vmatprep.subr.bf16.mxu0 0
      %2973 = vmatpush1.bf16.msra.mxu0 %v631
      %2974 = vmatprep.subr.bf16.mxu0 0
      %2975 = vmatpush1.bf16.msra.mxu0 %v632
      %2976 = vmatprep.subr.bf16.mxu0 0
      %2977 = vmatpush1.bf16.msra.mxu0 %v633
      %2978 = vmatprep.subr.bf16.mxu0 0
      %2979 = vmatpush1.bf16.msra.mxu0 %v634
      %2980 = vmatprep.subr.bf16.mxu0 0
      %2981 = vmatpush1.bf16.msra.mxu0 %v635
      %2982 = vmatprep.subr.bf16.mxu0 0
      %2983 = vmatpush1.bf16.msra.mxu0 %v636
      %2984 = vmatprep.mubr.bf16.mxu0 %v2904
      %2985 = vmatmul.mubr.bf16.gmra.mrb[0].mxu0 %v2903
      %v2986 = vpop.f32.mrb[0].mxu0
      %v2987 = vadd.f32 %v2947, %v2986
      %v2988 = vpop.f32.mrb[0].mxu0
      %v2989 = vpop.f32.mrb[0].mxu0
      %v2990 = vpop.f32.mrb[0].mxu0
      %2991 = vdwg.mxu0
      %2992 = vmatprep.subr.bf16.mxu0 0
      %2993 = vmatpush1.bf16.msra.mxu0 %v637
      %2994 = vmatprep.subr.bf16.mxu0 0
      %2995 = vmatpush1.bf16.msra.mxu0 %v638
      %2996 = vmatprep.subr.bf16.mxu0 0
      %2997 = vmatpush1.bf16.msra.mxu0 %v639
      %2998 = vmatprep.subr.bf16.mxu0 0
      %2999 = vmatpush1.bf16.msra.mxu0 %v640
      %3000 = vmatprep.subr.bf16.mxu0 0
      %3001 = vmatpush1.bf16.msra.mxu0 0
      %3002 = vmatprep.subr.bf16.mxu0 0
      %3003 = vmatpush1.bf16.msra.mxu0 0
      %3004 = vmatprep.subr.bf16.mxu0 0
      %3005 = vmatpush1.bf16.msra.mxu0 0
      %3006 = vmatprep.subr.bf16.mxu0 0
      %3007 = vmatpush1.bf16.msra.mxu0 0
      %3008 = vmatprep.subr.bf16.mxu0 0
      %3009 = vmatpush1.bf16.msra.mxu0 0
      %3010 = vmatprep.subr.bf16.mxu0 0
      %3011 = vmatpush1.bf16.msra.mxu0 0
      %3012 = vmatprep.subr.bf16.mxu0 0
      %3013 = vmatpush1.bf16.msra.mxu0 0
      %3014 = vmatprep.subr.bf16.mxu0 0
      %3015 = vmatpush1.bf16.msra.mxu0 0
      %3016 = vmatprep.subr.bf16.mxu0 0
      %3017 = vmatpush1.bf16.msra.mxu0 0
      %3018 = vmatprep.subr.bf16.mxu0 0
      %3019 = vmatpush1.bf16.msra.mxu0 0
      %3020 = vmatprep.subr.bf16.mxu0 0
      %3021 = vmatpush1.bf16.msra.mxu0 0
      %3022 = vmatprep.subr.bf16.mxu0 0
      %3023 = vmatpush1.bf16.msra.mxu0 0
      %3024 = vmatprep.mubr.bf16.mxu0 0
      %3025 = vmatmul.mubr.bf16.gmra.mrb[0].mxu0 %v2910
      %v3026 = vpop.f32.mrb[0].mxu0
      %v3027 = vadd.f32 %v2987, %v3026
      %v3028 = vpop.f32.mrb[0].mxu0
      %v3029 = vpop.f32.mrb[0].mxu0
      %v3030 = vpop.f32.mrb[0].mxu0
      %3031 = vdwg.mxu0
      %v3032 = vmax.f32 %v3027, 0.0
      %v3033 = vpack.c.bf16 %v3032, %v3032
      %s3034 = scalar_lea.vmem %s324, 288
      %v3035 = vld [vmem:[%s3034] sm:$0xf]
      %v3036 = vld [vmem:[%s3034 + $0x4] sm:$0xf]
      %v3037 = vld [vmem:[%s3034 + $0x8] sm:$0xf]
      %v3038 = vld [vmem:[%s3034 + $0xc] sm:$0xf]
      %v3039 = vld [vmem:[%s3034 + $0x10] sm:$0xf]
      %v3040 = vld [vmem:[%s3034 + $0x14] sm:$0xf]
      %v3041 = vld [vmem:[%s3034 + $0x18] sm:$0xf]
      %v3042 = vld [vmem:[%s3034 + $0x1c] sm:$0xf]
      %v3051 = vunpack.c.l.b16 %v3035
      %v3052 = vunpack.c.l.b16 %v3036
      %v3053 = vunpack.c.l.b16 %v3037
      %v3054 = vunpack.c.l.b16 %v3038
      %v3055 = vunpack.c.l.b16 %v3039
      %v3056 = vunpack.c.l.b16 %v3040
      %v3057 = vunpack.c.l.b16 %v3041
      %v3058 = vunpack.c.l.b16 %v3042
      %v3059 = vpack.c.b16 %v3052, %v3051
      %v3060 = vpack.c.b16 %v3054, %v3053
      %v3061 = vpack.c.b16 %v3056, %v3055
      %v3062 = vpack.c.b16 %v3058, %v3057
      %v3068 = vsel %vm677, %v3033, 0
      %3070 = vmatprep.subr.bf16.mxu0 0
      %3071 = vmatpush1.bf16.msra.mxu0 %v3059
      %3072 = vmatprep.subr.bf16.mxu0 0
      %3073 = vmatpush1.bf16.msra.mxu0 %v3060
      %3074 = vmatprep.subr.bf16.mxu0 0
      %3075 = vmatpush1.bf16.msra.mxu0 %v3061
      %3076 = vmatprep.subr.bf16.mxu0 0
      %3077 = vmatpush1.bf16.msra.mxu0 %v3062
      %3078 = vmatprep.subr.bf16.mxu0 0
      %3079 = vmatpush1.bf16.msra.mxu0 0
      %3080 = vmatprep.subr.bf16.mxu0 0
      %3081 = vmatpush1.bf16.msra.mxu0 0
      %3082 = vmatprep.subr.bf16.mxu0 0
      %3083 = vmatpush1.bf16.msra.mxu0 0
      %3084 = vmatprep.subr.bf16.mxu0 0
      %3085 = vmatpush1.bf16.msra.mxu0 0
      %3086 = vmatprep.subr.bf16.mxu0 0
      %3087 = vmatpush1.bf16.msra.mxu0 0
      %3088 = vmatprep.subr.bf16.mxu0 0
      %3089 = vmatpush1.bf16.msra.mxu0 0
      %3090 = vmatprep.subr.bf16.mxu0 0
      %3091 = vmatpush1.bf16.msra.mxu0 0
      %3092 = vmatprep.subr.bf16.mxu0 0
      %3093 = vmatpush1.bf16.msra.mxu0 0
      %3094 = vmatprep.subr.bf16.mxu0 0
      %3095 = vmatpush1.bf16.msra.mxu0 0
      %3096 = vmatprep.subr.bf16.mxu0 0
      %3097 = vmatpush1.bf16.msra.mxu0 0
      %3098 = vmatprep.subr.bf16.mxu0 0
      %3099 = vmatpush1.bf16.msra.mxu0 0
      %3100 = vmatprep.subr.bf16.mxu0 0
      %3101 = vmatpush1.bf16.msra.mxu0 0
      %3102 = vmatprep.mubr.bf16.mxu0 0
      %3103 = vmatmul.mubr.bf16.gmra.mrb[0].mxu0 %v3068
      %v3104 = vpop.f32.mrb[0].mxu0
      %v3105 = vadd.f32 0.0, %v3104
      %v3106 = vpop.f32.mrb[0].mxu0
      %v3107 = vpop.f32.mrb[0].mxu0
      %v3108 = vpop.f32.mrb[0].mxu0
      %3109 = vdwg.mxu0
      %v3110 = vadd.f32 %v2862, %v3105
      %s3111 = scalar_lea.vmem %s317, 50
      %v3112 = vld [vmem:[%s3111] sm:$0x1f]
      %v3114 = vcombine.high %v3112, %v3112
      %v3116 = vunpack.c.l.s4 1966171168
      %v3117 = vunpack.c.0.s8 %v3116
      %v3118 = vlaneseq
      %v3119 = vshrl.u32 %v3118, 7
      %v3120 = vsub.s32 %v3117, %v3119
      %v3121 = vrot.slane %v3112, %v3120
      %v3123 = vunpack.c.l.s4 1966171168
      %v3124 = vunpack.c.0.s8 %v3123
      %v3125 = vlaneseq
      %v3126 = vshrl.u32 %v3125, 7
      %v3127 = vsub.s32 %v3124, %v3126
      %v3128 = vrot.slane %v3114, %v3127
      %v3129 = vcombine.high %v3121, %v3121
      %v3131 = vunpack.c.l.s4 1966171168
      %v3132 = vunpack.c.0.s8 %v3131
      %v3133 = vlaneseq
      %v3134 = vshrl.u32 %v3133, 7
      %v3135 = vsub.s32 %v3132, %v3134
      %v3136 = vrot.slane %v3121, %v3135
      %v3138 = vunpack.c.l.s4 1966171168
      %v3139 = vunpack.c.0.s8 %v3138
      %v3140 = vlaneseq
      %v3141 = vshrl.u32 %v3140, 7
      %v3142 = vsub.s32 %v3139, %v3141
      %v3143 = vrot.slane %v3128, %v3142
      %v3145 = vunpack.c.l.s4 1966171168
      %v3146 = vunpack.c.0.s8 %v3145
      %v3147 = vlaneseq
      %v3148 = vshrl.u32 %v3147, 7
      %v3149 = vsub.s32 %v3146, %v3148
      %v3150 = vrot.slane %v3129, %v3149
      %v3151 = vcombine.high %v3136, %v3136
      %v3152 = vcombine.high %v3150, %v3150
      %v3158 = vsel %vm677, %v3143, 0
      %3160 = vmatprep.subr.bf16.mxu0 0
      %3161 = vmatpush1.bf16.msra.mxu0 %v605
      %3162 = vmatprep.subr.bf16.mxu0 0
      %3163 = vmatpush1.bf16.msra.mxu0 %v606
      %3164 = vmatprep.subr.bf16.mxu0 0
      %3165 = vmatpush1.bf16.msra.mxu0 %v607
      %3166 = vmatprep.subr.bf16.mxu0 0
      %3167 = vmatpush1.bf16.msra.mxu0 %v608
      %3168 = vmatprep.subr.bf16.mxu0 0
      %3169 = vmatpush1.bf16.msra.mxu0 %v609
      %3170 = vmatprep.subr.bf16.mxu0 0
      %3171 = vmatpush1.bf16.msra.mxu0 %v610
      %3172 = vmatprep.subr.bf16.mxu0 0
      %3173 = vmatpush1.bf16.msra.mxu0 %v611
      %3174 = vmatprep.subr.bf16.mxu0 0
      %3175 = vmatpush1.bf16.msra.mxu0 %v612
      %3176 = vmatprep.subr.bf16.mxu0 0
      %3177 = vmatpush1.bf16.msra.mxu0 %v613
      %3178 = vmatprep.subr.bf16.mxu0 0
      %3179 = vmatpush1.bf16.msra.mxu0 %v614
      %3180 = vmatprep.subr.bf16.mxu0 0
      %3181 = vmatpush1.bf16.msra.mxu0 %v615
      %3182 = vmatprep.subr.bf16.mxu0 0
      %3183 = vmatpush1.bf16.msra.mxu0 %v616
      %3184 = vmatprep.subr.bf16.mxu0 0
      %3185 = vmatpush1.bf16.msra.mxu0 %v617
      %3186 = vmatprep.subr.bf16.mxu0 0
      %3187 = vmatpush1.bf16.msra.mxu0 %v618
      %3188 = vmatprep.subr.bf16.mxu0 0
      %3189 = vmatpush1.bf16.msra.mxu0 %v619
      %3190 = vmatprep.subr.bf16.mxu0 0
      %3191 = vmatpush1.bf16.msra.mxu0 %v620
      %3192 = vmatprep.mubr.bf16.mxu0 %v3150
      %3193 = vmatmul.mubr.bf16.gmra.mrb[0].mxu0 %v3136
      %v3194 = vpop.f32.mrb[0].mxu0
      %v3195 = vadd.f32 %v415, %v3194
      %v3196 = vpop.f32.mrb[0].mxu0
      %v3197 = vpop.f32.mrb[0].mxu0
      %v3198 = vpop.f32.mrb[0].mxu0
      %3199 = vdwg.mxu0
      %3200 = vmatprep.subr.bf16.mxu0 0
      %3201 = vmatpush1.bf16.msra.mxu0 %v621
      %3202 = vmatprep.subr.bf16.mxu0 0
      %3203 = vmatpush1.bf16.msra.mxu0 %v622
      %3204 = vmatprep.subr.bf16.mxu0 0
      %3205 = vmatpush1.bf16.msra.mxu0 %v623
      %3206 = vmatprep.subr.bf16.mxu0 0
      %3207 = vmatpush1.bf16.msra.mxu0 %v624
      %3208 = vmatprep.subr.bf16.mxu0 0
      %3209 = vmatpush1.bf16.msra.mxu0 %v625
      %3210 = vmatprep.subr.bf16.mxu0 0
      %3211 = vmatpush1.bf16.msra.mxu0 %v626
      %3212 = vmatprep.subr.bf16.mxu0 0
      %3213 = vmatpush1.bf16.msra.mxu0 %v627
      %3214 = vmatprep.subr.bf16.mxu0 0
      %3215 = vmatpush1.bf16.msra.mxu0 %v628
      %3216 = vmatprep.subr.bf16.mxu0 0
      %3217 = vmatpush1.bf16.msra.mxu0 %v629
      %3218 = vmatprep.subr.bf16.mxu0 0
      %3219 = vmatpush1.bf16.msra.mxu0 %v630
      %3220 = vmatprep.subr.bf16.mxu0 0
      %3221 = vmatpush1.bf16.msra.mxu0 %v631
      %3222 = vmatprep.subr.bf16.mxu0 0
      %3223 = vmatpush1.bf16.msra.mxu0 %v632
      %3224 = vmatprep.subr.bf16.mxu0 0
      %3225 = vmatpush1.bf16.msra.mxu0 %v633
      %3226 = vmatprep.subr.bf16.mxu0 0
      %3227 = vmatpush1.bf16.msra.mxu0 %v634
      %3228 = vmatprep.subr.bf16.mxu0 0
      %3229 = vmatpush1.bf16.msra.mxu0 %v635
      %3230 = vmatprep.subr.bf16.mxu0 0
      %3231 = vmatpush1.bf16.msra.mxu0 %v636
      %3232 = vmatprep.mubr.bf16.mxu0 %v3152
      %3233 = vmatmul.mubr.bf16.gmra.mrb[0].mxu0 %v3151
      %v3234 = vpop.f32.mrb[0].mxu0
      %v3235 = vadd.f32 %v3195, %v3234
      %v3236 = vpop.f32.mrb[0].mxu0
      %v3237 = vpop.f32.mrb[0].mxu0
      %v3238 = vpop.f32.mrb[0].mxu0
      %3239 = vdwg.mxu0
      %3240 = vmatprep.subr.bf16.mxu0 0
      %3241 = vmatpush1.bf16.msra.mxu0 %v637
      %3242 = vmatprep.subr.bf16.mxu0 0
      %3243 = vmatpush1.bf16.msra.mxu0 %v638
      %3244 = vmatprep.subr.bf16.mxu0 0
      %3245 = vmatpush1.bf16.msra.mxu0 %v639
      %3246 = vmatprep.subr.bf16.mxu0 0
      %3247 = vmatpush1.bf16.msra.mxu0 %v640
      %3248 = vmatprep.subr.bf16.mxu0 0
      %3249 = vmatpush1.bf16.msra.mxu0 0
      %3250 = vmatprep.subr.bf16.mxu0 0
      %3251 = vmatpush1.bf16.msra.mxu0 0
      %3252 = vmatprep.subr.bf16.mxu0 0
      %3253 = vmatpush1.bf16.msra.mxu0 0
      %3254 = vmatprep.subr.bf16.mxu0 0
      %3255 = vmatpush1.bf16.msra.mxu0 0
      %3256 = vmatprep.subr.bf16.mxu0 0
      %3257 = vmatpush1.bf16.msra.mxu0 0
      %3258 = vmatprep.subr.bf16.mxu0 0
      %3259 = vmatpush1.bf16.msra.mxu0 0
      %3260 = vmatprep.subr.bf16.mxu0 0
      %3261 = vmatpush1.bf16.msra.mxu0 0
      %3262 = vmatprep.subr.bf16.mxu0 0
      %3263 = vmatpush1.bf16.msra.mxu0 0
      %3264 = vmatprep.subr.bf16.mxu0 0
      %3265 = vmatpush1.bf16.msra.mxu0 0
      %3266 = vmatprep.subr.bf16.mxu0 0
      %3267 = vmatpush1.bf16.msra.mxu0 0
      %3268 = vmatprep.subr.bf16.mxu0 0
      %3269 = vmatpush1.bf16.msra.mxu0 0
      %3270 = vmatprep.subr.bf16.mxu0 0
      %3271 = vmatpush1.bf16.msra.mxu0 0
      %3272 = vmatprep.mubr.bf16.mxu0 0
      %3273 = vmatmul.mubr.bf16.gmra.mrb[0].mxu0 %v3158
      %v3274 = vpop.f32.mrb[0].mxu0
      %v3275 = vadd.f32 %v3235, %v3274
      %v3276 = vpop.f32.mrb[0].mxu0
      %v3277 = vpop.f32.mrb[0].mxu0
      %v3278 = vpop.f32.mrb[0].mxu0
      %3279 = vdwg.mxu0
      %v3280 = vmax.f32 %v3275, 0.0
      %v3281 = vpack.c.bf16 %v3280, %v3280
      %s3282 = scalar_lea.vmem %s324, 320
      %v3283 = vld [vmem:[%s3282] sm:$0xf]
      %v3284 = vld [vmem:[%s3282 + $0x4] sm:$0xf]
      %v3285 = vld [vmem:[%s3282 + $0x8] sm:$0xf]
      %v3286 = vld [vmem:[%s3282 + $0xc] sm:$0xf]
      %v3287 = vld [vmem:[%s3282 + $0x10] sm:$0xf]
      %v3288 = vld [vmem:[%s3282 + $0x14] sm:$0xf]
      %v3289 = vld [vmem:[%s3282 + $0x18] sm:$0xf]
      %v3290 = vld [vmem:[%s3282 + $0x1c] sm:$0xf]
      %v3299 = vunpack.c.l.b16 %v3283
      %v3300 = vunpack.c.l.b16 %v3284
      %v3301 = vunpack.c.l.b16 %v3285
      %v3302 = vunpack.c.l.b16 %v3286
      %v3303 = vunpack.c.l.b16 %v3287
      %v3304 = vunpack.c.l.b16 %v3288
      %v3305 = vunpack.c.l.b16 %v3289
      %v3306 = vunpack.c.l.b16 %v3290
      %v3307 = vpack.c.b16 %v3300, %v3299
      %v3308 = vpack.c.b16 %v3302, %v3301
      %v3309 = vpack.c.b16 %v3304, %v3303
      %v3310 = vpack.c.b16 %v3306, %v3305
      %v3316 = vsel %vm677, %v3281, 0
      %3318 = vmatprep.subr.bf16.mxu0 0
      %3319 = vmatpush1.bf16.msra.mxu0 %v3307
      %3320 = vmatprep.subr.bf16.mxu0 0
      %3321 = vmatpush1.bf16.msra.mxu0 %v3308
      %3322 = vmatprep.subr.bf16.mxu0 0
      %3323 = vmatpush1.bf16.msra.mxu0 %v3309
      %3324 = vmatprep.subr.bf16.mxu0 0
      %3325 = vmatpush1.bf16.msra.mxu0 %v3310
      %3326 = vmatprep.subr.bf16.mxu0 0
      %3327 = vmatpush1.bf16.msra.mxu0 0
      %3328 = vmatprep.subr.bf16.mxu0 0
      %3329 = vmatpush1.bf16.msra.mxu0 0
      %3330 = vmatprep.subr.bf16.mxu0 0
      %3331 = vmatpush1.bf16.msra.mxu0 0
      %3332 = vmatprep.subr.bf16.mxu0 0
      %3333 = vmatpush1.bf16.msra.mxu0 0
      %3334 = vmatprep.subr.bf16.mxu0 0
      %3335 = vmatpush1.bf16.msra.mxu0 0
      %3336 = vmatprep.subr.bf16.mxu0 0
      %3337 = vmatpush1.bf16.msra.mxu0 0
      %3338 = vmatprep.subr.bf16.mxu0 0
      %3339 = vmatpush1.bf16.msra.mxu0 0
      %3340 = vmatprep.subr.bf16.mxu0 0
      %3341 = vmatpush1.bf16.msra.mxu0 0
      %3342 = vmatprep.subr.bf16.mxu0 0
      %3343 = vmatpush1.bf16.msra.mxu0 0
      %3344 = vmatprep.subr.bf16.mxu0 0
      %3345 = vmatpush1.bf16.msra.mxu0 0
      %3346 = vmatprep.subr.bf16.mxu0 0
      %3347 = vmatpush1.bf16.msra.mxu0 0
      %3348 = vmatprep.subr.bf16.mxu0 0
      %3349 = vmatpush1.bf16.msra.mxu0 0
      %3350 = vmatprep.mubr.bf16.mxu0 0
      %3351 = vmatmul.mubr.bf16.gmra.mrb[0].mxu0 %v3316
      %v3352 = vpop.f32.mrb[0].mxu0
      %v3353 = vadd.f32 0.0, %v3352
      %v3354 = vpop.f32.mrb[0].mxu0
      %v3355 = vpop.f32.mrb[0].mxu0
      %v3356 = vpop.f32.mrb[0].mxu0
      %3357 = vdwg.mxu0
      %v3358 = vadd.f32 %v3110, %v3353
      %3359 = vst [vmem:[#allocation2] sm:$0x3] %v3358
      %p3360 = scmp.eq.s32.totalorder %s23, 10
      // Predicated region
      $region53: #{soft_q_twin_forward.5} parent=47 // pred_check
        %p3361 = pneg %p3360
      $region54: #{soft_q_twin_forward.5} parent=47 // pred_check_branch
        %3363 = sbr.rel (%p3361) target = $region56
      $region55: #{soft_q_twin_forward.5} parent=47 // pred_region
        %v3364 = vld [vmem:[%s4] sm:$0x1]
        %v3366 = vlaneseq
        %v3367 = vshrl.u32 %v3366, 7
        %v3368 = vsub.s32 0, %v3367
        %v3369 = vrot.slane %v3364, %v3368
        %v3371 = vadd.f32 %v3358, %v3369
        %v3372 = vmax.f32 %v3371, 0.0
        %v3373 = vpack.c.bf16 %v3372, %v3372
        %v3374 = vld [vmem:[%s5] sm:$0xf]
        %v3375 = vld [vmem:[%s5 + $0x4] sm:$0xf]
        %v3376 = vld [vmem:[%s5 + $0x8] sm:$0xf]
        %v3377 = vld [vmem:[%s5 + $0xc] sm:$0xf]
        %v3378 = vld [vmem:[%s5 + $0x10] sm:$0xf]
        %v3379 = vld [vmem:[%s5 + $0x14] sm:$0xf]
        %v3380 = vld [vmem:[%s5 + $0x18] sm:$0xf]
        %v3381 = vld [vmem:[%s5 + $0x1c] sm:$0xf]
        %v3382 = vld [vmem:[%s5 + $0x20] sm:$0xf]
        %v3383 = vld [vmem:[%s5 + $0x24] sm:$0xf]
        %v3384 = vld [vmem:[%s5 + $0x28] sm:$0xf]
        %v3385 = vld [vmem:[%s5 + $0x2c] sm:$0xf]
        %v3386 = vld [vmem:[%s5 + $0x30] sm:$0xf]
        %v3387 = vld [vmem:[%s5 + $0x34] sm:$0xf]
        %v3388 = vld [vmem:[%s5 + $0x38] sm:$0xf]
        %v3389 = vld [vmem:[%s5 + $0x3c] sm:$0xf]
        %v3390 = vld [vmem:[%s6] sm:$0x1]
        %v3392 = vlaneseq
        %v3393 = vshrl.u32 %v3392, 7
        %v3394 = vsub.s32 0, %v3393
        %v3395 = vrot.slane %v3390, %v3394
        %v3413 = vunpack.c.l.b16 %v3374
        %v3414 = vunpack.c.l.b16 %v3375
        %v3415 = vunpack.c.l.b16 %v3376
        %v3416 = vunpack.c.l.b16 %v3377
        %v3417 = vunpack.c.l.b16 %v3378
        %v3418 = vunpack.c.l.b16 %v3379
        %v3419 = vunpack.c.l.b16 %v3380
        %v3420 = vunpack.c.l.b16 %v3381
        %v3421 = vunpack.c.l.b16 %v3382
        %v3422 = vunpack.c.l.b16 %v3383
        %v3423 = vunpack.c.l.b16 %v3384
        %v3424 = vunpack.c.l.b16 %v3385
        %v3425 = vunpack.c.l.b16 %v3386
        %v3426 = vunpack.c.l.b16 %v3387
        %v3427 = vunpack.c.l.b16 %v3388
        %v3428 = vunpack.c.l.b16 %v3389
        %v3429 = vpack.c.b16 %v3414, %v3413
        %v3430 = vpack.c.b16 %v3416, %v3415
        %v3431 = vpack.c.b16 %v3418, %v3417
        %v3432 = vpack.c.b16 %v3420, %v3419
        %v3433 = vpack.c.b16 %v3422, %v3421
        %v3434 = vpack.c.b16 %v3424, %v3423
        %v3435 = vpack.c.b16 %v3426, %v3425
        %v3436 = vpack.c.b16 %v3428, %v3427
        %3445 = vmatprep.subr.bf16.mxu0 0
        %3446 = vmatpush1.bf16.msra.mxu0 %v3429
        %3447 = vmatprep.subr.bf16.mxu0 0
        %3448 = vmatpush1.bf16.msra.mxu0 %v3430
        %3449 = vmatprep.subr.bf16.mxu0 0
        %3450 = vmatpush1.bf16.msra.mxu0 %v3431
        %3451 = vmatprep.subr.bf16.mxu0 0
        %3452 = vmatpush1.bf16.msra.mxu0 %v3432
        %3453 = vmatprep.subr.bf16.mxu0 0
        %3454 = vmatpush1.bf16.msra.mxu0 %v3433
        %3455 = vmatprep.subr.bf16.mxu0 0
        %3456 = vmatpush1.bf16.msra.mxu0 %v3434
        %3457 = vmatprep.subr.bf16.mxu0 0
        %3458 = vmatpush1.bf16.msra.mxu0 %v3435
        %3459 = vmatprep.subr.bf16.mxu0 0
        %3460 = vmatpush1.bf16.msra.mxu0 %v3436
        %3461 = vmatprep.subr.bf16.mxu0 0
        %3462 = vmatpush1.bf16.msra.mxu0 0
        %3463 = vmatprep.subr.bf16.mxu0 0
        %3464 = vmatpush1.bf16.msra.mxu0 0
        %3465 = vmatprep.subr.bf16.mxu0 0
        %3466 = vmatpush1.bf16.msra.mxu0 0
        %3467 = vmatprep.subr.bf16.mxu0 0
        %3468 = vmatpush1.bf16.msra.mxu0 0
        %3469 = vmatprep.subr.bf16.mxu0 0
        %3470 = vmatpush1.bf16.msra.mxu0 0
        %3471 = vmatprep.subr.bf16.mxu0 0
        %3472 = vmatpush1.bf16.msra.mxu0 0
        %3473 = vmatprep.subr.bf16.mxu0 0
        %3474 = vmatpush1.bf16.msra.mxu0 0
        %3475 = vmatprep.subr.bf16.mxu0 0
        %3476 = vmatpush1.bf16.msra.mxu0 0
        %3477 = vmatprep.mubr.bf16.mxu0 0
        %3478 = vmatmul.mubr.bf16.gmra.mrb[0].mxu0 %v3373
        %v3479 = vpop.f32.mrb[0].mxu0
        %v3480 = vadd.f32 %v3395, %v3479
        %v3481 = vpop.f32.mrb[0].mxu0
        %v3482 = vpop.f32.mrb[0].mxu0
        %v3483 = vpop.f32.mrb[0].mxu0
        %3484 = vdwg.mxu0
        %3485 = vst [vmem:[%s329] sm:$0x3] %v3480
      $region56: #{soft_q_twin_forward.5} parent=47 // pred_fallthru
        _
      %p3486 = scmp.lt.s32.totalorder %s22, 0
      %s3487 = scalar_select %p3486, %s22, 0
      %s3488 = smul.addr %s3487, 2
      %s3489 = scalar_lea.vmem %s7, %s3488
      // Predicated region
      $region57: #{soft_q_twin_forward.5} parent=47 // pred_check
        %p3490 = pneg %p207
      $region58: #{soft_q_twin_forward.5} parent=47 // pred_check_branch
        %3492 = sbr.rel (%p3490) target = $region60
      $region59: #{soft_q_twin_forward.5} parent=47 // pred_region
        _
      $region60: #{soft_q_twin_forward.5} parent=47 // pred_fallthru
        _
      // Predicated region
      $region61: #{soft_q_twin_forward.5} parent=47 // pred_check
        %p3493 = pneg %p207
      $region62: #{soft_q_twin_forward.5} parent=47 // pred_check_branch
        %3495 = sbr.rel (%p3493) target = $region64
      $region63: #{soft_q_twin_forward.5} parent=47 // pred_region
        %p3496 = scmp.lt.s32.totalorder %s22, 0
        %s3497 = scalar_select %p3496, %s22, 0
        %s3498 = smul.addr %s3497, 2
        %s3499 = scalar_lea.vmem %s7, %s3498
      $region64: #{soft_q_twin_forward.5} parent=47 // pred_fallthru
        _
    $region48: #{soft_q_twin_forward.5} parent=5 // pred_fallthru
      _
    %p3500 = scmp.le.s32.totalorder 2, %s13
    // Predicated region
    $region65: #{soft_q_twin_forward.5} parent=5 // pred_check
      %p3501 = pneg %p3500
    $region66: #{soft_q_twin_forward.5} parent=5 // pred_check_branch
      %3503 = sbr.rel (%p3501) target = $region68
    $region67: #{soft_q_twin_forward.5} parent=5 // pred_region
      %s3504 = ssub.s32 %s13, 2
    $region68: #{soft_q_twin_forward.5} parent=5 // pred_fallthru
      _
  $region6: #{soft_q_twin_forward.5} parent=0 // loop_footer
    %s17 = sadd.s32 1, %s13
  $region7: #{soft_q_twin_forward.5} parent=0 // loop_footer_branch
    %12 = sbr.rel target = $region3
  $region8: #{soft_q_twin_forward.5} parent=0 // loop_exit
    _

</llo_original>
